<compile_context>
chip_gen: v7x
topology: tpu7x:2x2x1
jax: 0.10.0
libtpu: 0.0.40
codegen_flags: <defaults>
</compile_context>

<pallas_src>
import functools
import math

import jax
import jax.numpy as jnp
from jax.experimental import pallas as pl
from jax.experimental.pallas import tpu as pltpu


def _emm_kernel(z_ref, x_ref, w_ref, b_ref, out_ref, *, G, Hz, Wz, Ho, Wo, P):
    """One grid step = one block of tracks, packed as G groups of (8, P) tiles.

    z_ref   : [1, G, Hz, Wz, 8, P]   template features ((track,chan) packed)
    x_ref   : [1, G, Hx, Wx, 8, P]   search-region features (same packing)
    w_ref   : [P, P]                 block-diagonal folded 1x1 head weights
    b_ref   : [1, P]                 folded head biases
    out_ref : [1, G, Ho, Wo*8, P]    lane-dense fused head outputs
    """
    for g in range(G):                                   # static, small

        @pl.loop(0, Ho)
        def _(oy, g=g):
            # ---- depth-wise (per-channel) cross-correlation on the VPU ----
            # Purely elementwise in the packed (track,chan)->(sublane,lane)
            # layout; kx windows are static slices of the hoisted xrow value.
            acc = jnp.zeros((Wo, 8, P), jnp.float32)
            for ky in range(Hz):
                xrow = x_ref[0, g, oy + ky].astype(jnp.float32)    # [Wx, 8, P]
                for kx in range(Wz):
                    zk = z_ref[0, g, ky, kx].astype(jnp.float32)   # [8, P]
                    acc = acc + zk * xrow[kx:kx + Wo]              # dense MAC

            # ---- fused 1x1 heads: one small MXU matmul per output row ----
            # The block-diagonal weight contracts each track's C-channel lane
            # segment in place, so the packed layout never needs re-tiling.
            heads = jax.lax.dot_general(
                acc.reshape(Wo * 8, P), w_ref[...],
                dimension_numbers=(((1,), (0,)), ((), ())),
                preferred_element_type=jnp.float32)                # [Wo*8, P]
            out_ref[0, g, oy] = heads + b_ref[...]


def _choose_block(N, C, Hx, Wx, n_blk):
    """Pick (n_blk, unit, P): packed lane width P, tracks per (8,P) tile, and
    tracks per grid step (multiple of `unit`, aiming for >= 2 grid blocks)."""
    t0 = 128 // math.gcd(C, 128)          # tracks/sublane-row for lane-dense P
    if t0 * C > 512:                      # awkward C: settle for ~dense lanes
        t0 = max(1, -(-128 // C))
    P = t0 * C
    unit = 8 * t0                         # tracks held by one (8, P) tile
    if n_blk is None:
        half = -(-N // 2)                 # aim for >= 2 blocks (v7x megacore)
        n_blk = -(-half // unit) * unit
        # cap: double-buffered search-region block <= ~8 MiB and <= 4 groups
        vmem_tracks = (8 << 20) // max(1, 2 * Hx * Wx * C * 4)
        cap = max(unit, min(4 * unit, (vmem_tracks // unit) * unit))
        n_blk = max(unit, min(n_blk, cap))
    else:
        n_blk = max(unit, -(-n_blk // unit) * unit)
    return n_blk, unit, P


def track_head_forward(template_feats, sr_feats, params, *, n_blk=None):
    """Pallas forward for the EMM tracker compute (TrackHead hot path).

    template_feats: [N, C, Hz, Wz]  per-track template features
    sr_feats      : [N, C, Hx, Wx]  per-track search-region features
    params        : dict of 1x1 head weights / biases
    Returns (cls_logits [N,1,Ho,Wo], bbox_reg [N,4,Ho,Wo], centerness [N,1,Ho,Wo]).
    """
    N, C, Hz, Wz = template_feats.shape
    _, _, Hx, Wx = sr_feats.shape
    Ho, Wo = Hx - Hz + 1, Wx - Wz + 1
    assert C >= 8, "head packing assumes at least 8 feature channels"

    n_blk, unit, P = _choose_block(N, C, Hx, Wx, n_blk)
    tpr = P // C                           # tracks per packed sublane row
    G = n_blk // unit                      # packed groups per grid step
    nb = -(-N // n_blk)                    # grid steps
    n_pad = nb * n_blk - N

    def to_blocks(a, H, W):
        if a.dtype != jnp.bfloat16:        # keep bf16 in HBM, else stage f32
            a = a.astype(jnp.float32)
        if n_pad:
            a = jnp.pad(a, ((0, n_pad), (0, 0), (0, 0), (0, 0)))
        a = a.reshape(nb, G, unit, C, H, W).transpose(0, 1, 4, 5, 2, 3)
        return a.reshape(nb, G, H, W, 8, P)          # (track,chan) -> (8, P)

    zb = to_blocks(template_feats, Hz, Wz)
    xb = to_blocks(sr_feats, Hx, Wx)

    # Fused head params, folded to match the packed lane layout.
    # Row order: [cls, reg0..reg3, ctr, pad, pad]  -> 8 head columns per track.
    w8 = jnp.concatenate(
        [params["w_cls"].reshape(1, C), params["w_reg"].reshape(4, C),
         params["w_ctr"].reshape(1, C), jnp.zeros((2, C))],
        axis=0).astype(jnp.float32)                                   # [8, C]
    b8 = jnp.concatenate(
        [params["b_cls"].reshape(1), params["b_reg"].reshape(4),
         params["b_ctr"].reshape(1), jnp.zeros((2,))]).astype(jnp.float32)
    blk_w = jnp.zeros((C, C), jnp.float32).at[:, :8].set(w8.T)        # [C, C]
    w_big = jnp.kron(jnp.eye(tpr, dtype=jnp.float32), blk_w)          # [P, P]
    b_big = jnp.tile(jnp.pad(b8, (0, C - 8)), tpr).reshape(1, P)      # [1, P]

    kernel = functools.partial(_emm_kernel, G=G, Hz=Hz, Wz=Wz, Ho=Ho, Wo=Wo, P=P)

    out = pl.pallas_call(
        kernel,
        out_shape=jax.ShapeDtypeStruct((nb, G, Ho, Wo * 8, P), jnp.float32),
        grid_spec=pltpu.PrefetchScalarGridSpec(
            num_scalar_prefetch=0,
            grid=(nb,),
            in_specs=[
                pl.BlockSpec((1, G, Hz, Wz, 8, P), lambda b: (b, 0, 0, 0, 0, 0)),
                pl.BlockSpec((1, G, Hx, Wx, 8, P), lambda b: (b, 0, 0, 0, 0, 0)),
                pl.BlockSpec((P, P), lambda b: (0, 0)),   # weights: constant block
                pl.BlockSpec((1, P), lambda b: (0, 0)),   # biases : constant block
            ],
            out_specs=pl.BlockSpec((1, G, Ho, Wo * 8, P),
                                   lambda b: (b, 0, 0, 0, 0)),
        ),
        compiler_params=pltpu.CompilerParams(
            dimension_semantics=("parallel",)),   # nb >= 2 -> both v7x TCs busy
    )(zb, xb, w_big, b_big)

    # Unpack the lane-dense slab: [nb, G, Ho, Wo*8, P] -> per-track head maps.
    out = out.reshape(nb, G, Ho, Wo, 8, tpr, C)[..., :8]
    out = out.transpose(0, 1, 4, 5, 6, 2, 3).reshape(nb * n_blk, 8, Ho, Wo)[:N]
    return out[:, 0:1], out[:, 1:5], out[:, 5:6]


def _reference(template_feats, sr_feats, params):
    """Pure-JAX reference for correctness checking."""
    N, C, Hz, Wz = template_feats.shape
    _, _, Hx, Wx = sr_feats.shape
    Ho, Wo = Hx - Hz + 1, Wx - Wz + 1
    corr = jnp.zeros((N, C, Ho, Wo), jnp.float32)
    for ky in range(Hz):
        for kx in range(Wz):
            corr = corr + (template_feats[:, :, ky:ky + 1, kx:kx + 1]
                           * sr_feats[:, :, ky:ky + Ho, kx:kx + Wo])
    hi = jax.lax.Precision.HIGHEST
    cls = jnp.einsum("oc,nchw->nohw", params["w_cls"], corr, precision=hi) \
        + params["b_cls"].reshape(1, 1, 1, 1)
    reg = jnp.einsum("oc,nchw->nohw", params["w_reg"], corr, precision=hi) \
        + params["b_reg"].reshape(1, 4, 1, 1)
    ctr = jnp.einsum("oc,nchw->nohw", params["w_ctr"], corr, precision=hi) \
        + params["b_ctr"].reshape(1, 1, 1, 1)
    return cls, reg, ctr


if __name__ == "__main__":
    # TODO(synk): EMMTargetSampler / TrackPool / BoxList bookkeeping are pure
    # Python metadata manipulation (no tensor hot path) and are not ported.
    key = jax.random.PRNGKey(0)
    k1, k2, k3, k4, k5 = jax.random.split(key, 5)

    N, C = 64, 32         # tracks, feature channels (-> 2 blocks of 32 tracks)
    Hz = Wz = 8           # template spatial size
    Hx = Wx = 16          # search-region spatial size

    template = jax.random.normal(k1, (N, C, Hz, Wz), jnp.float32) * 0.1
    search   = jax.random.normal(k2, (N, C, Hx, Wx), jnp.float32) * 0.1

    params = {
        "w_cls": jax.random.normal(k3, (1, C), jnp.float32) * 0.05,
        "b_cls": jnp.zeros((1, 1), jnp.float32),
        "w_reg": jax.random.normal(k4, (4, C), jnp.float32) * 0.05,
        "b_reg": jnp.full((1, 4), 0.1, jnp.float32),
        "w_ctr": jax.random.normal(k5, (1, C), jnp.float32) * 0.05,
        "b_ctr": jnp.zeros((1, 1), jnp.float32),
    }

    cls, reg, ctr = jax.block_until_ready(
        track_head_forward(template, search, params))

    rcls, rreg, rctr = _reference(template, search, params)
    Ho, Wo = Hx - Hz + 1, Wx - Wz + 1
    assert cls.shape == (N, 1, Ho, Wo)
    assert reg.shape == (N, 4, Ho, Wo)
    assert ctr.shape == (N, 1, Ho, Wo)
    assert jnp.allclose(cls, rcls, atol=1e-3, rtol=1e-3), "cls mismatch"
    assert jnp.allclose(reg, rreg, atol=1e-3, rtol=1e-3), "reg mismatch"
    assert jnp.allclose(ctr, rctr, atol=1e-3, rtol=1e-3), "ctr mismatch"

    print("KERNEL_OK")
</pallas_src>

<mosaic_0001>
module attributes {stable_mosaic.version = 11 : i64} {
  func.func @_emm_kernel(%arg0: i32, %arg1: memref<1x1x8x8x8x128xf32, #tpu.memory_space<vmem>>, %arg2: memref<1x1x16x16x8x128xf32, #tpu.memory_space<vmem>>, %arg3: memref<128x128xf32, #tpu.memory_space<vmem>>, %arg4: memref<1x128xf32, #tpu.memory_space<vmem>>, %arg5: memref<1x1x9x72x128xf32, #tpu.memory_space<vmem>>) attributes {dimension_semantics = [#tpu.dimension_semantics<parallel>], iteration_bounds = array<i64: 2>, scalar_prefetch = 0 : i64, scratch_operands = 0 : i64, tpu.core_type = #tpu.core_type<tc>, window_params = [{transform_indices = @transform_0, window_bounds = array<i64: 1, 1, 8, 8, 8, 128>}, {transform_indices = @transform_1, window_bounds = array<i64: 1, 1, 16, 16, 8, 128>}, {pipeline_mode = #tpu.pipeline_mode<synchronous>, transform_indices = @transform_2, window_bounds = array<i64: 128, 128>}, {pipeline_mode = #tpu.pipeline_mode<synchronous>, transform_indices = @transform_3, window_bounds = array<i64: 1, 128>}, {transform_indices = @transform_4, window_bounds = array<i64: 1, 1, 9, 72, 128>}]} {
    %c0_i32 = arith.constant 0 : i32
    %c9_i32 = arith.constant 9 : i32
    %0 = arith.addi %c0_i32, %c9_i32 : i32
    %c1_i32 = arith.constant 1 : i32
    scf.for %arg6 = %c0_i32 to %0 step %c1_i32  : i32 {
      %c1_i32_1 = arith.constant 1 : i32
      %1 = arith.muli %arg6, %c1_i32_1 : i32
      %c0_i32_2 = arith.constant 0 : i32
      %2 = arith.addi %c0_i32_2, %1 : i32
      %cst = arith.constant 0.000000e+00 : f32
      %3 = vector.broadcast %cst : f32 to vector<9x8x128xf32>
      %c0_i32_3 = arith.constant 0 : i32
      %4 = arith.addi %2, %c0_i32_3 : i32
      %c0 = arith.constant 0 : index
      %c0_4 = arith.constant 0 : index
      %5 = arith.index_cast %4 : i32 to index
      %c0_5 = arith.constant 0 : index
      %c0_6 = arith.constant 0 : index
      %c0_7 = arith.constant 0 : index
      %6 = vector.load %arg2[%c0, %c0_4, %5, %c0_5, %c0_6, %c0_7] : memref<1x1x16x16x8x128xf32, #tpu.memory_space<vmem>>, vector<1x1x1x16x8x128xf32>
      %7 = vector.shape_cast %6 : vector<1x1x1x16x8x128xf32> to vector<16x8x128xf32>
      %c0_8 = arith.constant 0 : index
      %c0_9 = arith.constant 0 : index
      %c0_10 = arith.constant 0 : index
      %c0_11 = arith.constant 0 : index
      %c0_12 = arith.constant 0 : index
      %c0_13 = arith.constant 0 : index
      %8 = vector.load %arg1[%c0_8, %c0_9, %c0_10, %c0_11, %c0_12, %c0_13] : memref<1x1x8x8x8x128xf32, #tpu.memory_space<vmem>>, vector<1x1x1x1x8x128xf32>
      %9 = vector.shape_cast %8 : vector<1x1x1x1x8x128xf32> to vector<8x128xf32>
      %10 = vector.extract_strided_slice %7 {offsets = [0, 0, 0], sizes = [9, 8, 128], strides = [1, 1, 1]} : vector<16x8x128xf32> to vector<9x8x128xf32>
      %11 = vector.shape_cast %9 : vector<8x128xf32> to vector<1x8x128xf32>
      %12 = vector.broadcast %11 : vector<1x8x128xf32> to vector<9x8x128xf32>
      %13 = arith.mulf %12, %10 : vector<9x8x128xf32>
      %14 = arith.addf %3, %13 : vector<9x8x128xf32>
      %c0_14 = arith.constant 0 : index
      %c0_15 = arith.constant 0 : index
      %c0_16 = arith.constant 0 : index
      %c1 = arith.constant 1 : index
      %c0_17 = arith.constant 0 : index
      %c0_18 = arith.constant 0 : index
      %15 = vector.load %arg1[%c0_14, %c0_15, %c0_16, %c1, %c0_17, %c0_18] : memref<1x1x8x8x8x128xf32, #tpu.memory_space<vmem>>, vector<1x1x1x1x8x128xf32>
      %16 = vector.shape_cast %15 : vector<1x1x1x1x8x128xf32> to vector<8x128xf32>
      %17 = vector.extract_strided_slice %7 {offsets = [1, 0, 0], sizes = [9, 8, 128], strides = [1, 1, 1]} : vector<16x8x128xf32> to vector<9x8x128xf32>
      %18 = vector.shape_cast %16 : vector<8x128xf32> to vector<1x8x128xf32>
      %19 = vector.broadcast %18 : vector<1x8x128xf32> to vector<9x8x128xf32>
      %20 = arith.mulf %19, %17 : vector<9x8x128xf32>
      %21 = arith.addf %14, %20 : vector<9x8x128xf32>
      %c0_19 = arith.constant 0 : index
      %c0_20 = arith.constant 0 : index
      %c0_21 = arith.constant 0 : index
      %c2 = arith.constant 2 : index
      %c0_22 = arith.constant 0 : index
      %c0_23 = arith.constant 0 : index
      %22 = vector.load %arg1[%c0_19, %c0_20, %c0_21, %c2, %c0_22, %c0_23] : memref<1x1x8x8x8x128xf32, #tpu.memory_space<vmem>>, vector<1x1x1x1x8x128xf32>
      %23 = vector.shape_cast %22 : vector<1x1x1x1x8x128xf32> to vector<8x128xf32>
      %24 = vector.extract_strided_slice %7 {offsets = [2, 0, 0], sizes = [9, 8, 128], strides = [1, 1, 1]} : vector<16x8x128xf32> to vector<9x8x128xf32>
      %25 = vector.shape_cast %23 : vector<8x128xf32> to vector<1x8x128xf32>
      %26 = vector.broadcast %25 : vector<1x8x128xf32> to vector<9x8x128xf32>
      %27 = arith.mulf %26, %24 : vector<9x8x128xf32>
      %28 = arith.addf %21, %27 : vector<9x8x128xf32>
      %c0_24 = arith.constant 0 : index
      %c0_25 = arith.constant 0 : index
      %c0_26 = arith.constant 0 : index
      %c3 = arith.constant 3 : index
      %c0_27 = arith.constant 0 : index
      %c0_28 = arith.constant 0 : index
      %29 = vector.load %arg1[%c0_24, %c0_25, %c0_26, %c3, %c0_27, %c0_28] : memref<1x1x8x8x8x128xf32, #tpu.memory_space<vmem>>, vector<1x1x1x1x8x128xf32>
      %30 = vector.shape_cast %29 : vector<1x1x1x1x8x128xf32> to vector<8x128xf32>
      %31 = vector.extract_strided_slice %7 {offsets = [3, 0, 0], sizes = [9, 8, 128], strides = [1, 1, 1]} : vector<16x8x128xf32> to vector<9x8x128xf32>
      %32 = vector.shape_cast %30 : vector<8x128xf32> to vector<1x8x128xf32>
      %33 = vector.broadcast %32 : vector<1x8x128xf32> to vector<9x8x128xf32>
      %34 = arith.mulf %33, %31 : vector<9x8x128xf32>
      %35 = arith.addf %28, %34 : vector<9x8x128xf32>
      %c0_29 = arith.constant 0 : index
      %c0_30 = arith.constant 0 : index
      %c0_31 = arith.constant 0 : index
      %c4 = arith.constant 4 : index
      %c0_32 = arith.constant 0 : index
      %c0_33 = arith.constant 0 : index
      %36 = vector.load %arg1[%c0_29, %c0_30, %c0_31, %c4, %c0_32, %c0_33] : memref<1x1x8x8x8x128xf32, #tpu.memory_space<vmem>>, vector<1x1x1x1x8x128xf32>
      %37 = vector.shape_cast %36 : vector<1x1x1x1x8x128xf32> to vector<8x128xf32>
      %38 = vector.extract_strided_slice %7 {offsets = [4, 0, 0], sizes = [9, 8, 128], strides = [1, 1, 1]} : vector<16x8x128xf32> to vector<9x8x128xf32>
      %39 = vector.shape_cast %37 : vector<8x128xf32> to vector<1x8x128xf32>
      %40 = vector.broadcast %39 : vector<1x8x128xf32> to vector<9x8x128xf32>
      %41 = arith.mulf %40, %38 : vector<9x8x128xf32>
      %42 = arith.addf %35, %41 : vector<9x8x128xf32>
      %c0_34 = arith.constant 0 : index
      %c0_35 = arith.constant 0 : index
      %c0_36 = arith.constant 0 : index
      %c5 = arith.constant 5 : index
      %c0_37 = arith.constant 0 : index
      %c0_38 = arith.constant 0 : index
      %43 = vector.load %arg1[%c0_34, %c0_35, %c0_36, %c5, %c0_37, %c0_38] : memref<1x1x8x8x8x128xf32, #tpu.memory_space<vmem>>, vector<1x1x1x1x8x128xf32>
      %44 = vector.shape_cast %43 : vector<1x1x1x1x8x128xf32> to vector<8x128xf32>
      %45 = vector.extract_strided_slice %7 {offsets = [5, 0, 0], sizes = [9, 8, 128], strides = [1, 1, 1]} : vector<16x8x128xf32> to vector<9x8x128xf32>
      %46 = vector.shape_cast %44 : vector<8x128xf32> to vector<1x8x128xf32>
      %47 = vector.broadcast %46 : vector<1x8x128xf32> to vector<9x8x128xf32>
      %48 = arith.mulf %47, %45 : vector<9x8x128xf32>
      %49 = arith.addf %42, %48 : vector<9x8x128xf32>
      %c0_39 = arith.constant 0 : index
      %c0_40 = arith.constant 0 : index
      %c0_41 = arith.constant 0 : index
      %c6 = arith.constant 6 : index
      %c0_42 = arith.constant 0 : index
      %c0_43 = arith.constant 0 : index
      %50 = vector.load %arg1[%c0_39, %c0_40, %c0_41, %c6, %c0_42, %c0_43] : memref<1x1x8x8x8x128xf32, #tpu.memory_space<vmem>>, vector<1x1x1x1x8x128xf32>
      %51 = vector.shape_cast %50 : vector<1x1x1x1x8x128xf32> to vector<8x128xf32>
      %52 = vector.extract_strided_slice %7 {offsets = [6, 0, 0], sizes = [9, 8, 128], strides = [1, 1, 1]} : vector<16x8x128xf32> to vector<9x8x128xf32>
      %53 = vector.shape_cast %51 : vector<8x128xf32> to vector<1x8x128xf32>
      %54 = vector.broadcast %53 : vector<1x8x128xf32> to vector<9x8x128xf32>
      %55 = arith.mulf %54, %52 : vector<9x8x128xf32>
      %56 = arith.addf %49, %55 : vector<9x8x128xf32>
      %c0_44 = arith.constant 0 : index
      %c0_45 = arith.constant 0 : index
      %c0_46 = arith.constant 0 : index
      %c7 = arith.constant 7 : index
      %c0_47 = arith.constant 0 : index
      %c0_48 = arith.constant 0 : index
      %57 = vector.load %arg1[%c0_44, %c0_45, %c0_46, %c7, %c0_47, %c0_48] : memref<1x1x8x8x8x128xf32, #tpu.memory_space<vmem>>, vector<1x1x1x1x8x128xf32>
      %58 = vector.shape_cast %57 : vector<1x1x1x1x8x128xf32> to vector<8x128xf32>
      %59 = vector.extract_strided_slice %7 {offsets = [7, 0, 0], sizes = [9, 8, 128], strides = [1, 1, 1]} : vector<16x8x128xf32> to vector<9x8x128xf32>
      %60 = vector.shape_cast %58 : vector<8x128xf32> to vector<1x8x128xf32>
      %61 = vector.broadcast %60 : vector<1x8x128xf32> to vector<9x8x128xf32>
      %62 = arith.mulf %61, %59 : vector<9x8x128xf32>
      %63 = arith.addf %56, %62 : vector<9x8x128xf32>
      %c1_i32_49 = arith.constant 1 : i32
      %64 = arith.addi %2, %c1_i32_49 : i32
      %c0_50 = arith.constant 0 : index
      %c0_51 = arith.constant 0 : index
      %65 = arith.index_cast %64 : i32 to index
      %c0_52 = arith.constant 0 : index
      %c0_53 = arith.constant 0 : index
      %c0_54 = arith.constant 0 : index
      %66 = vector.load %arg2[%c0_50, %c0_51, %65, %c0_52, %c0_53, %c0_54] : memref<1x1x16x16x8x128xf32, #tpu.memory_space<vmem>>, vector<1x1x1x16x8x128xf32>
      %67 = vector.shape_cast %66 : vector<1x1x1x16x8x128xf32> to vector<16x8x128xf32>
      %c0_55 = arith.constant 0 : index
      %c0_56 = arith.constant 0 : index
      %c1_57 = arith.constant 1 : index
      %c0_58 = arith.constant 0 : index
      %c0_59 = arith.constant 0 : index
      %c0_60 = arith.constant 0 : index
      %68 = vector.load %arg1[%c0_55, %c0_56, %c1_57, %c0_58, %c0_59, %c0_60] : memref<1x1x8x8x8x128xf32, #tpu.memory_space<vmem>>, vector<1x1x1x1x8x128xf32>
      %69 = vector.shape_cast %68 : vector<1x1x1x1x8x128xf32> to vector<8x128xf32>
      %70 = vector.extract_strided_slice %67 {offsets = [0, 0, 0], sizes = [9, 8, 128], strides = [1, 1, 1]} : vector<16x8x128xf32> to vector<9x8x128xf32>
      %71 = vector.shape_cast %69 : vector<8x128xf32> to vector<1x8x128xf32>
      %72 = vector.broadcast %71 : vector<1x8x128xf32> to vector<9x8x128xf32>
      %73 = arith.mulf %72, %70 : vector<9x8x128xf32>
      %74 = arith.addf %63, %73 : vector<9x8x128xf32>
      %c0_61 = arith.constant 0 : index
      %c0_62 = arith.constant 0 : index
      %c1_63 = arith.constant 1 : index
      %c1_64 = arith.constant 1 : index
      %c0_65 = arith.constant 0 : index
      %c0_66 = arith.constant 0 : index
      %75 = vector.load %arg1[%c0_61, %c0_62, %c1_63, %c1_64, %c0_65, %c0_66] : memref<1x1x8x8x8x128xf32, #tpu.memory_space<vmem>>, vector<1x1x1x1x8x128xf32>
      %76 = vector.shape_cast %75 : vector<1x1x1x1x8x128xf32> to vector<8x128xf32>
      %77 = vector.extract_strided_slice %67 {offsets = [1, 0, 0], sizes = [9, 8, 128], strides = [1, 1, 1]} : vector<16x8x128xf32> to vector<9x8x128xf32>
      %78 = vector.shape_cast %76 : vector<8x128xf32> to vector<1x8x128xf32>
      %79 = vector.broadcast %78 : vector<1x8x128xf32> to vector<9x8x128xf32>
      %80 = arith.mulf %79, %77 : vector<9x8x128xf32>
      %81 = arith.addf %74, %80 : vector<9x8x128xf32>
      %c0_67 = arith.constant 0 : index
      %c0_68 = arith.constant 0 : index
      %c1_69 = arith.constant 1 : index
      %c2_70 = arith.constant 2 : index
      %c0_71 = arith.constant 0 : index
      %c0_72 = arith.constant 0 : index
      %82 = vector.load %arg1[%c0_67, %c0_68, %c1_69, %c2_70, %c0_71, %c0_72] : memref<1x1x8x8x8x128xf32, #tpu.memory_space<vmem>>, vector<1x1x1x1x8x128xf32>
      %83 = vector.shape_cast %82 : vector<1x1x1x1x8x128xf32> to vector<8x128xf32>
      %84 = vector.extract_strided_slice %67 {offsets = [2, 0, 0], sizes = [9, 8, 128], strides = [1, 1, 1]} : vector<16x8x128xf32> to vector<9x8x128xf32>
      %85 = vector.shape_cast %83 : vector<8x128xf32> to vector<1x8x128xf32>
      %86 = vector.broadcast %85 : vector<1x8x128xf32> to vector<9x8x128xf32>
      %87 = arith.mulf %86, %84 : vector<9x8x128xf32>
      %88 = arith.addf %81, %87 : vector<9x8x128xf32>
      %c0_73 = arith.constant 0 : index
      %c0_74 = arith.constant 0 : index
      %c1_75 = arith.constant 1 : index
      %c3_76 = arith.constant 3 : index
      %c0_77 = arith.constant 0 : index
      %c0_78 = arith.constant 0 : index
      %89 = vector.load %arg1[%c0_73, %c0_74, %c1_75, %c3_76, %c0_77, %c0_78] : memref<1x1x8x8x8x128xf32, #tpu.memory_space<vmem>>, vector<1x1x1x1x8x128xf32>
      %90 = vector.shape_cast %89 : vector<1x1x1x1x8x128xf32> to vector<8x128xf32>
      %91 = vector.extract_strided_slice %67 {offsets = [3, 0, 0], sizes = [9, 8, 128], strides = [1, 1, 1]} : vector<16x8x128xf32> to vector<9x8x128xf32>
      %92 = vector.shape_cast %90 : vector<8x128xf32> to vector<1x8x128xf32>
      %93 = vector.broadcast %92 : vector<1x8x128xf32> to vector<9x8x128xf32>
      %94 = arith.mulf %93, %91 : vector<9x8x128xf32>
      %95 = arith.addf %88, %94 : vector<9x8x128xf32>
      %c0_79 = arith.constant 0 : index
      %c0_80 = arith.constant 0 : index
      %c1_81 = arith.constant 1 : index
      %c4_82 = arith.constant 4 : index
      %c0_83 = arith.constant 0 : index
      %c0_84 = arith.constant 0 : index
      %96 = vector.load %arg1[%c0_79, %c0_80, %c1_81, %c4_82, %c0_83, %c0_84] : memref<1x1x8x8x8x128xf32, #tpu.memory_space<vmem>>, vector<1x1x1x1x8x128xf32>
      %97 = vector.shape_cast %96 : vector<1x1x1x1x8x128xf32> to vector<8x128xf32>
      %98 = vector.extract_strided_slice %67 {offsets = [4, 0, 0], sizes = [9, 8, 128], strides = [1, 1, 1]} : vector<16x8x128xf32> to vector<9x8x128xf32>
      %99 = vector.shape_cast %97 : vector<8x128xf32> to vector<1x8x128xf32>
      %100 = vector.broadcast %99 : vector<1x8x128xf32> to vector<9x8x128xf32>
      %101 = arith.mulf %100, %98 : vector<9x8x128xf32>
      %102 = arith.addf %95, %101 : vector<9x8x128xf32>
      %c0_85 = arith.constant 0 : index
      %c0_86 = arith.constant 0 : index
      %c1_87 = arith.constant 1 : index
      %c5_88 = arith.constant 5 : index
      %c0_89 = arith.constant 0 : index
      %c0_90 = arith.constant 0 : index
      %103 = vector.load %arg1[%c0_85, %c0_86, %c1_87, %c5_88, %c0_89, %c0_90] : memref<1x1x8x8x8x128xf32, #tpu.memory_space<vmem>>, vector<1x1x1x1x8x128xf32>
      %104 = vector.shape_cast %103 : vector<1x1x1x1x8x128xf32> to vector<8x128xf32>
      %105 = vector.extract_strided_slice %67 {offsets = [5, 0, 0], sizes = [9, 8, 128], strides = [1, 1, 1]} : vector<16x8x128xf32> to vector<9x8x128xf32>
      %106 = vector.shape_cast %104 : vector<8x128xf32> to vector<1x8x128xf32>
      %107 = vector.broadcast %106 : vector<1x8x128xf32> to vector<9x8x128xf32>
      %108 = arith.mulf %107, %105 : vector<9x8x128xf32>
      %109 = arith.addf %102, %108 : vector<9x8x128xf32>
      %c0_91 = arith.constant 0 : index
      %c0_92 = arith.constant 0 : index
      %c1_93 = arith.constant 1 : index
      %c6_94 = arith.constant 6 : index
      %c0_95 = arith.constant 0 : index
      %c0_96 = arith.constant 0 : index
      %110 = vector.load %arg1[%c0_91, %c0_92, %c1_93, %c6_94, %c0_95, %c0_96] : memref<1x1x8x8x8x128xf32, #tpu.memory_space<vmem>>, vector<1x1x1x1x8x128xf32>
      %111 = vector.shape_cast %110 : vector<1x1x1x1x8x128xf32> to vector<8x128xf32>
      %112 = vector.extract_strided_slice %67 {offsets = [6, 0, 0], sizes = [9, 8, 128], strides = [1, 1, 1]} : vector<16x8x128xf32> to vector<9x8x128xf32>
      %113 = vector.shape_cast %111 : vector<8x128xf32> to vector<1x8x128xf32>
      %114 = vector.broadcast %113 : vector<1x8x128xf32> to vector<9x8x128xf32>
      %115 = arith.mulf %114, %112 : vector<9x8x128xf32>
      %116 = arith.addf %109, %115 : vector<9x8x128xf32>
      %c0_97 = arith.constant 0 : index
      %c0_98 = arith.constant 0 : index
      %c1_99 = arith.constant 1 : index
      %c7_100 = arith.constant 7 : index
      %c0_101 = arith.constant 0 : index
      %c0_102 = arith.constant 0 : index
      %117 = vector.load %arg1[%c0_97, %c0_98, %c1_99, %c7_100, %c0_101, %c0_102] : memref<1x1x8x8x8x128xf32, #tpu.memory_space<vmem>>, vector<1x1x1x1x8x128xf32>
      %118 = vector.shape_cast %117 : vector<1x1x1x1x8x128xf32> to vector<8x128xf32>
      %119 = vector.extract_strided_slice %67 {offsets = [7, 0, 0], sizes = [9, 8, 128], strides = [1, 1, 1]} : vector<16x8x128xf32> to vector<9x8x128xf32>
      %120 = vector.shape_cast %118 : vector<8x128xf32> to vector<1x8x128xf32>
      %121 = vector.broadcast %120 : vector<1x8x128xf32> to vector<9x8x128xf32>
      %122 = arith.mulf %121, %119 : vector<9x8x128xf32>
      %123 = arith.addf %116, %122 : vector<9x8x128xf32>
      %c2_i32 = arith.constant 2 : i32
      %124 = arith.addi %2, %c2_i32 : i32
      %c0_103 = arith.constant 0 : index
      %c0_104 = arith.constant 0 : index
      %125 = arith.index_cast %124 : i32 to index
      %c0_105 = arith.constant 0 : index
      %c0_106 = arith.constant 0 : index
      %c0_107 = arith.constant 0 : index
      %126 = vector.load %arg2[%c0_103, %c0_104, %125, %c0_105, %c0_106, %c0_107] : memref<1x1x16x16x8x128xf32, #tpu.memory_space<vmem>>, vector<1x1x1x16x8x128xf32>
      %127 = vector.shape_cast %126 : vector<1x1x1x16x8x128xf32> to vector<16x8x128xf32>
      %c0_108 = arith.constant 0 : index
      %c0_109 = arith.constant 0 : index
      %c2_110 = arith.constant 2 : index
      %c0_111 = arith.constant 0 : index
      %c0_112 = arith.constant 0 : index
      %c0_113 = arith.constant 0 : index
      %128 = vector.load %arg1[%c0_108, %c0_109, %c2_110, %c0_111, %c0_112, %c0_113] : memref<1x1x8x8x8x128xf32, #tpu.memory_space<vmem>>, vector<1x1x1x1x8x128xf32>
      %129 = vector.shape_cast %128 : vector<1x1x1x1x8x128xf32> to vector<8x128xf32>
      %130 = vector.extract_strided_slice %127 {offsets = [0, 0, 0], sizes = [9, 8, 128], strides = [1, 1, 1]} : vector<16x8x128xf32> to vector<9x8x128xf32>
      %131 = vector.shape_cast %129 : vector<8x128xf32> to vector<1x8x128xf32>
      %132 = vector.broadcast %131 : vector<1x8x128xf32> to vector<9x8x128xf32>
      %133 = arith.mulf %132, %130 : vector<9x8x128xf32>
      %134 = arith.addf %123, %133 : vector<9x8x128xf32>
      %c0_114 = arith.constant 0 : index
      %c0_115 = arith.constant 0 : index
      %c2_116 = arith.constant 2 : index
      %c1_117 = arith.constant 1 : index
      %c0_118 = arith.constant 0 : index
      %c0_119 = arith.constant 0 : index
      %135 = vector.load %arg1[%c0_114, %c0_115, %c2_116, %c1_117, %c0_118, %c0_119] : memref<1x1x8x8x8x128xf32, #tpu.memory_space<vmem>>, vector<1x1x1x1x8x128xf32>
      %136 = vector.shape_cast %135 : vector<1x1x1x1x8x128xf32> to vector<8x128xf32>
      %137 = vector.extract_strided_slice %127 {offsets = [1, 0, 0], sizes = [9, 8, 128], strides = [1, 1, 1]} : vector<16x8x128xf32> to vector<9x8x128xf32>
      %138 = vector.shape_cast %136 : vector<8x128xf32> to vector<1x8x128xf32>
      %139 = vector.broadcast %138 : vector<1x8x128xf32> to vector<9x8x128xf32>
      %140 = arith.mulf %139, %137 : vector<9x8x128xf32>
      %141 = arith.addf %134, %140 : vector<9x8x128xf32>
      %c0_120 = arith.constant 0 : index
      %c0_121 = arith.constant 0 : index
      %c2_122 = arith.constant 2 : index
      %c2_123 = arith.constant 2 : index
      %c0_124 = arith.constant 0 : index
      %c0_125 = arith.constant 0 : index
      %142 = vector.load %arg1[%c0_120, %c0_121, %c2_122, %c2_123, %c0_124, %c0_125] : memref<1x1x8x8x8x128xf32, #tpu.memory_space<vmem>>, vector<1x1x1x1x8x128xf32>
      %143 = vector.shape_cast %142 : vector<1x1x1x1x8x128xf32> to vector<8x128xf32>
      %144 = vector.extract_strided_slice %127 {offsets = [2, 0, 0], sizes = [9, 8, 128], strides = [1, 1, 1]} : vector<16x8x128xf32> to vector<9x8x128xf32>
      %145 = vector.shape_cast %143 : vector<8x128xf32> to vector<1x8x128xf32>
      %146 = vector.broadcast %145 : vector<1x8x128xf32> to vector<9x8x128xf32>
      %147 = arith.mulf %146, %144 : vector<9x8x128xf32>
      %148 = arith.addf %141, %147 : vector<9x8x128xf32>
      %c0_126 = arith.constant 0 : index
      %c0_127 = arith.constant 0 : index
      %c2_128 = arith.constant 2 : index
      %c3_129 = arith.constant 3 : index
      %c0_130 = arith.constant 0 : index
      %c0_131 = arith.constant 0 : index
      %149 = vector.load %arg1[%c0_126, %c0_127, %c2_128, %c3_129, %c0_130, %c0_131] : memref<1x1x8x8x8x128xf32, #tpu.memory_space<vmem>>, vector<1x1x1x1x8x128xf32>
      %150 = vector.shape_cast %149 : vector<1x1x1x1x8x128xf32> to vector<8x128xf32>
      %151 = vector.extract_strided_slice %127 {offsets = [3, 0, 0], sizes = [9, 8, 128], strides = [1, 1, 1]} : vector<16x8x128xf32> to vector<9x8x128xf32>
      %152 = vector.shape_cast %150 : vector<8x128xf32> to vector<1x8x128xf32>
      %153 = vector.broadcast %152 : vector<1x8x128xf32> to vector<9x8x128xf32>
      %154 = arith.mulf %153, %151 : vector<9x8x128xf32>
      %155 = arith.addf %148, %154 : vector<9x8x128xf32>
      %c0_132 = arith.constant 0 : index
      %c0_133 = arith.constant 0 : index
      %c2_134 = arith.constant 2 : index
      %c4_135 = arith.constant 4 : index
      %c0_136 = arith.constant 0 : index
      %c0_137 = arith.constant 0 : index
      %156 = vector.load %arg1[%c0_132, %c0_133, %c2_134, %c4_135, %c0_136, %c0_137] : memref<1x1x8x8x8x128xf32, #tpu.memory_space<vmem>>, vector<1x1x1x1x8x128xf32>
      %157 = vector.shape_cast %156 : vector<1x1x1x1x8x128xf32> to vector<8x128xf32>
      %158 = vector.extract_strided_slice %127 {offsets = [4, 0, 0], sizes = [9, 8, 128], strides = [1, 1, 1]} : vector<16x8x128xf32> to vector<9x8x128xf32>
      %159 = vector.shape_cast %157 : vector<8x128xf32> to vector<1x8x128xf32>
      %160 = vector.broadcast %159 : vector<1x8x128xf32> to vector<9x8x128xf32>
      %161 = arith.mulf %160, %158 : vector<9x8x128xf32>
      %162 = arith.addf %155, %161 : vector<9x8x128xf32>
      %c0_138 = arith.constant 0 : index
      %c0_139 = arith.constant 0 : index
      %c2_140 = arith.constant 2 : index
      %c5_141 = arith.constant 5 : index
      %c0_142 = arith.constant 0 : index
      %c0_143 = arith.constant 0 : index
      %163 = vector.load %arg1[%c0_138, %c0_139, %c2_140, %c5_141, %c0_142, %c0_143] : memref<1x1x8x8x8x128xf32, #tpu.memory_space<vmem>>, vector<1x1x1x1x8x128xf32>
      %164 = vector.shape_cast %163 : vector<1x1x1x1x8x128xf32> to vector<8x128xf32>
      %165 = vector.extract_strided_slice %127 {offsets = [5, 0, 0], sizes = [9, 8, 128], strides = [1, 1, 1]} : vector<16x8x128xf32> to vector<9x8x128xf32>
      %166 = vector.shape_cast %164 : vector<8x128xf32> to vector<1x8x128xf32>
      %167 = vector.broadcast %166 : vector<1x8x128xf32> to vector<9x8x128xf32>
      %168 = arith.mulf %167, %165 : vector<9x8x128xf32>
      %169 = arith.addf %162, %168 : vector<9x8x128xf32>
      %c0_144 = arith.constant 0 : index
      %c0_145 = arith.constant 0 : index
      %c2_146 = arith.constant 2 : index
      %c6_147 = arith.constant 6 : index
      %c0_148 = arith.constant 0 : index
      %c0_149 = arith.constant 0 : index
      %170 = vector.load %arg1[%c0_144, %c0_145, %c2_146, %c6_147, %c0_148, %c0_149] : memref<1x1x8x8x8x128xf32, #tpu.memory_space<vmem>>, vector<1x1x1x1x8x128xf32>
      %171 = vector.shape_cast %170 : vector<1x1x1x1x8x128xf32> to vector<8x128xf32>
      %172 = vector.extract_strided_slice %127 {offsets = [6, 0, 0], sizes = [9, 8, 128], strides = [1, 1, 1]} : vector<16x8x128xf32> to vector<9x8x128xf32>
      %173 = vector.shape_cast %171 : vector<8x128xf32> to vector<1x8x128xf32>
      %174 = vector.broadcast %173 : vector<1x8x128xf32> to vector<9x8x128xf32>
      %175 = arith.mulf %174, %172 : vector<9x8x128xf32>
      %176 = arith.addf %169, %175 : vector<9x8x128xf32>
      %c0_150 = arith.constant 0 : index
      %c0_151 = arith.constant 0 : index
      %c2_152 = arith.constant 2 : index
      %c7_153 = arith.constant 7 : index
      %c0_154 = arith.constant 0 : index
      %c0_155 = arith.constant 0 : index
      %177 = vector.load %arg1[%c0_150, %c0_151, %c2_152, %c7_153, %c0_154, %c0_155] : memref<1x1x8x8x8x128xf32, #tpu.memory_space<vmem>>, vector<1x1x1x1x8x128xf32>
      %178 = vector.shape_cast %177 : vector<1x1x1x1x8x128xf32> to vector<8x128xf32>
      %179 = vector.extract_strided_slice %127 {offsets = [7, 0, 0], sizes = [9, 8, 128], strides = [1, 1, 1]} : vector<16x8x128xf32> to vector<9x8x128xf32>
      %180 = vector.shape_cast %178 : vector<8x128xf32> to vector<1x8x128xf32>
      %181 = vector.broadcast %180 : vector<1x8x128xf32> to vector<9x8x128xf32>
      %182 = arith.mulf %181, %179 : vector<9x8x128xf32>
      %183 = arith.addf %176, %182 : vector<9x8x128xf32>
      %c3_i32 = arith.constant 3 : i32
      %184 = arith.addi %2, %c3_i32 : i32
      %c0_156 = arith.constant 0 : index
      %c0_157 = arith.constant 0 : index
      %185 = arith.index_cast %184 : i32 to index
      %c0_158 = arith.constant 0 : index
      %c0_159 = arith.constant 0 : index
      %c0_160 = arith.constant 0 : index
      %186 = vector.load %arg2[%c0_156, %c0_157, %185, %c0_158, %c0_159, %c0_160] : memref<1x1x16x16x8x128xf32, #tpu.memory_space<vmem>>, vector<1x1x1x16x8x128xf32>
      %187 = vector.shape_cast %186 : vector<1x1x1x16x8x128xf32> to vector<16x8x128xf32>
      %c0_161 = arith.constant 0 : index
      %c0_162 = arith.constant 0 : index
      %c3_163 = arith.constant 3 : index
      %c0_164 = arith.constant 0 : index
      %c0_165 = arith.constant 0 : index
      %c0_166 = arith.constant 0 : index
      %188 = vector.load %arg1[%c0_161, %c0_162, %c3_163, %c0_164, %c0_165, %c0_166] : memref<1x1x8x8x8x128xf32, #tpu.memory_space<vmem>>, vector<1x1x1x1x8x128xf32>
      %189 = vector.shape_cast %188 : vector<1x1x1x1x8x128xf32> to vector<8x128xf32>
      %190 = vector.extract_strided_slice %187 {offsets = [0, 0, 0], sizes = [9, 8, 128], strides = [1, 1, 1]} : vector<16x8x128xf32> to vector<9x8x128xf32>
      %191 = vector.shape_cast %189 : vector<8x128xf32> to vector<1x8x128xf32>
      %192 = vector.broadcast %191 : vector<1x8x128xf32> to vector<9x8x128xf32>
      %193 = arith.mulf %192, %190 : vector<9x8x128xf32>
      %194 = arith.addf %183, %193 : vector<9x8x128xf32>
      %c0_167 = arith.constant 0 : index
      %c0_168 = arith.constant 0 : index
      %c3_169 = arith.constant 3 : index
      %c1_170 = arith.constant 1 : index
      %c0_171 = arith.constant 0 : index
      %c0_172 = arith.constant 0 : index
      %195 = vector.load %arg1[%c0_167, %c0_168, %c3_169, %c1_170, %c0_171, %c0_172] : memref<1x1x8x8x8x128xf32, #tpu.memory_space<vmem>>, vector<1x1x1x1x8x128xf32>
      %196 = vector.shape_cast %195 : vector<1x1x1x1x8x128xf32> to vector<8x128xf32>
      %197 = vector.extract_strided_slice %187 {offsets = [1, 0, 0], sizes = [9, 8, 128], strides = [1, 1, 1]} : vector<16x8x128xf32> to vector<9x8x128xf32>
      %198 = vector.shape_cast %196 : vector<8x128xf32> to vector<1x8x128xf32>
      %199 = vector.broadcast %198 : vector<1x8x128xf32> to vector<9x8x128xf32>
      %200 = arith.mulf %199, %197 : vector<9x8x128xf32>
      %201 = arith.addf %194, %200 : vector<9x8x128xf32>
      %c0_173 = arith.constant 0 : index
      %c0_174 = arith.constant 0 : index
      %c3_175 = arith.constant 3 : index
      %c2_176 = arith.constant 2 : index
      %c0_177 = arith.constant 0 : index
      %c0_178 = arith.constant 0 : index
      %202 = vector.load %arg1[%c0_173, %c0_174, %c3_175, %c2_176, %c0_177, %c0_178] : memref<1x1x8x8x8x128xf32, #tpu.memory_space<vmem>>, vector<1x1x1x1x8x128xf32>
      %203 = vector.shape_cast %202 : vector<1x1x1x1x8x128xf32> to vector<8x128xf32>
      %204 = vector.extract_strided_slice %187 {offsets = [2, 0, 0], sizes = [9, 8, 128], strides = [1, 1, 1]} : vector<16x8x128xf32> to vector<9x8x128xf32>
      %205 = vector.shape_cast %203 : vector<8x128xf32> to vector<1x8x128xf32>
      %206 = vector.broadcast %205 : vector<1x8x128xf32> to vector<9x8x128xf32>
      %207 = arith.mulf %206, %204 : vector<9x8x128xf32>
      %208 = arith.addf %201, %207 : vector<9x8x128xf32>
      %c0_179 = arith.constant 0 : index
      %c0_180 = arith.constant 0 : index
      %c3_181 = arith.constant 3 : index
      %c3_182 = arith.constant 3 : index
      %c0_183 = arith.constant 0 : index
      %c0_184 = arith.constant 0 : index
      %209 = vector.load %arg1[%c0_179, %c0_180, %c3_181, %c3_182, %c0_183, %c0_184] : memref<1x1x8x8x8x128xf32, #tpu.memory_space<vmem>>, vector<1x1x1x1x8x128xf32>
      %210 = vector.shape_cast %209 : vector<1x1x1x1x8x128xf32> to vector<8x128xf32>
      %211 = vector.extract_strided_slice %187 {offsets = [3, 0, 0], sizes = [9, 8, 128], strides = [1, 1, 1]} : vector<16x8x128xf32> to vector<9x8x128xf32>
      %212 = vector.shape_cast %210 : vector<8x128xf32> to vector<1x8x128xf32>
      %213 = vector.broadcast %212 : vector<1x8x128xf32> to vector<9x8x128xf32>
      %214 = arith.mulf %213, %211 : vector<9x8x128xf32>
      %215 = arith.addf %208, %214 : vector<9x8x128xf32>
      %c0_185 = arith.constant 0 : index
      %c0_186 = arith.constant 0 : index
      %c3_187 = arith.constant 3 : index
      %c4_188 = arith.constant 4 : index
      %c0_189 = arith.constant 0 : index
      %c0_190 = arith.constant 0 : index
      %216 = vector.load %arg1[%c0_185, %c0_186, %c3_187, %c4_188, %c0_189, %c0_190] : memref<1x1x8x8x8x128xf32, #tpu.memory_space<vmem>>, vector<1x1x1x1x8x128xf32>
      %217 = vector.shape_cast %216 : vector<1x1x1x1x8x128xf32> to vector<8x128xf32>
      %218 = vector.extract_strided_slice %187 {offsets = [4, 0, 0], sizes = [9, 8, 128], strides = [1, 1, 1]} : vector<16x8x128xf32> to vector<9x8x128xf32>
      %219 = vector.shape_cast %217 : vector<8x128xf32> to vector<1x8x128xf32>
      %220 = vector.broadcast %219 : vector<1x8x128xf32> to vector<9x8x128xf32>
      %221 = arith.mulf %220, %218 : vector<9x8x128xf32>
      %222 = arith.addf %215, %221 : vector<9x8x128xf32>
      %c0_191 = arith.constant 0 : index
      %c0_192 = arith.constant 0 : index
      %c3_193 = arith.constant 3 : index
      %c5_194 = arith.constant 5 : index
      %c0_195 = arith.constant 0 : index
      %c0_196 = arith.constant 0 : index
      %223 = vector.load %arg1[%c0_191, %c0_192, %c3_193, %c5_194, %c0_195, %c0_196] : memref<1x1x8x8x8x128xf32, #tpu.memory_space<vmem>>, vector<1x1x1x1x8x128xf32>
      %224 = vector.shape_cast %223 : vector<1x1x1x1x8x128xf32> to vector<8x128xf32>
      %225 = vector.extract_strided_slice %187 {offsets = [5, 0, 0], sizes = [9, 8, 128], strides = [1, 1, 1]} : vector<16x8x128xf32> to vector<9x8x128xf32>
      %226 = vector.shape_cast %224 : vector<8x128xf32> to vector<1x8x128xf32>
      %227 = vector.broadcast %226 : vector<1x8x128xf32> to vector<9x8x128xf32>
      %228 = arith.mulf %227, %225 : vector<9x8x128xf32>
      %229 = arith.addf %222, %228 : vector<9x8x128xf32>
      %c0_197 = arith.constant 0 : index
      %c0_198 = arith.constant 0 : index
      %c3_199 = arith.constant 3 : index
      %c6_200 = arith.constant 6 : index
      %c0_201 = arith.constant 0 : index
      %c0_202 = arith.constant 0 : index
      %230 = vector.load %arg1[%c0_197, %c0_198, %c3_199, %c6_200, %c0_201, %c0_202] : memref<1x1x8x8x8x128xf32, #tpu.memory_space<vmem>>, vector<1x1x1x1x8x128xf32>
      %231 = vector.shape_cast %230 : vector<1x1x1x1x8x128xf32> to vector<8x128xf32>
      %232 = vector.extract_strided_slice %187 {offsets = [6, 0, 0], sizes = [9, 8, 128], strides = [1, 1, 1]} : vector<16x8x128xf32> to vector<9x8x128xf32>
      %233 = vector.shape_cast %231 : vector<8x128xf32> to vector<1x8x128xf32>
      %234 = vector.broadcast %233 : vector<1x8x128xf32> to vector<9x8x128xf32>
      %235 = arith.mulf %234, %232 : vector<9x8x128xf32>
      %236 = arith.addf %229, %235 : vector<9x8x128xf32>
      %c0_203 = arith.constant 0 : index
      %c0_204 = arith.constant 0 : index
      %c3_205 = arith.constant 3 : index
      %c7_206 = arith.constant 7 : index
      %c0_207 = arith.constant 0 : index
      %c0_208 = arith.constant 0 : index
      %237 = vector.load %arg1[%c0_203, %c0_204, %c3_205, %c7_206, %c0_207, %c0_208] : memref<1x1x8x8x8x128xf32, #tpu.memory_space<vmem>>, vector<1x1x1x1x8x128xf32>
      %238 = vector.shape_cast %237 : vector<1x1x1x1x8x128xf32> to vector<8x128xf32>
      %239 = vector.extract_strided_slice %187 {offsets = [7, 0, 0], sizes = [9, 8, 128], strides = [1, 1, 1]} : vector<16x8x128xf32> to vector<9x8x128xf32>
      %240 = vector.shape_cast %238 : vector<8x128xf32> to vector<1x8x128xf32>
      %241 = vector.broadcast %240 : vector<1x8x128xf32> to vector<9x8x128xf32>
      %242 = arith.mulf %241, %239 : vector<9x8x128xf32>
      %243 = arith.addf %236, %242 : vector<9x8x128xf32>
      %c4_i32 = arith.constant 4 : i32
      %244 = arith.addi %2, %c4_i32 : i32
      %c0_209 = arith.constant 0 : index
      %c0_210 = arith.constant 0 : index
      %245 = arith.index_cast %244 : i32 to index
      %c0_211 = arith.constant 0 : index
      %c0_212 = arith.constant 0 : index
      %c0_213 = arith.constant 0 : index
      %246 = vector.load %arg2[%c0_209, %c0_210, %245, %c0_211, %c0_212, %c0_213] : memref<1x1x16x16x8x128xf32, #tpu.memory_space<vmem>>, vector<1x1x1x16x8x128xf32>
      %247 = vector.shape_cast %246 : vector<1x1x1x16x8x128xf32> to vector<16x8x128xf32>
      %c0_214 = arith.constant 0 : index
      %c0_215 = arith.constant 0 : index
      %c4_216 = arith.constant 4 : index
      %c0_217 = arith.constant 0 : index
      %c0_218 = arith.constant 0 : index
      %c0_219 = arith.constant 0 : index
      %248 = vector.load %arg1[%c0_214, %c0_215, %c4_216, %c0_217, %c0_218, %c0_219] : memref<1x1x8x8x8x128xf32, #tpu.memory_space<vmem>>, vector<1x1x1x1x8x128xf32>
      %249 = vector.shape_cast %248 : vector<1x1x1x1x8x128xf32> to vector<8x128xf32>
      %250 = vector.extract_strided_slice %247 {offsets = [0, 0, 0], sizes = [9, 8, 128], strides = [1, 1, 1]} : vector<16x8x128xf32> to vector<9x8x128xf32>
      %251 = vector.shape_cast %249 : vector<8x128xf32> to vector<1x8x128xf32>
      %252 = vector.broadcast %251 : vector<1x8x128xf32> to vector<9x8x128xf32>
      %253 = arith.mulf %252, %250 : vector<9x8x128xf32>
      %254 = arith.addf %243, %253 : vector<9x8x128xf32>
      %c0_220 = arith.constant 0 : index
      %c0_221 = arith.constant 0 : index
      %c4_222 = arith.constant 4 : index
      %c1_223 = arith.constant 1 : index
      %c0_224 = arith.constant 0 : index
      %c0_225 = arith.constant 0 : index
      %255 = vector.load %arg1[%c0_220, %c0_221, %c4_222, %c1_223, %c0_224, %c0_225] : memref<1x1x8x8x8x128xf32, #tpu.memory_space<vmem>>, vector<1x1x1x1x8x128xf32>
      %256 = vector.shape_cast %255 : vector<1x1x1x1x8x128xf32> to vector<8x128xf32>
      %257 = vector.extract_strided_slice %247 {offsets = [1, 0, 0], sizes = [9, 8, 128], strides = [1, 1, 1]} : vector<16x8x128xf32> to vector<9x8x128xf32>
      %258 = vector.shape_cast %256 : vector<8x128xf32> to vector<1x8x128xf32>
      %259 = vector.broadcast %258 : vector<1x8x128xf32> to vector<9x8x128xf32>
      %260 = arith.mulf %259, %257 : vector<9x8x128xf32>
      %261 = arith.addf %254, %260 : vector<9x8x128xf32>
      %c0_226 = arith.constant 0 : index
      %c0_227 = arith.constant 0 : index
      %c4_228 = arith.constant 4 : index
      %c2_229 = arith.constant 2 : index
      %c0_230 = arith.constant 0 : index
      %c0_231 = arith.constant 0 : index
      %262 = vector.load %arg1[%c0_226, %c0_227, %c4_228, %c2_229, %c0_230, %c0_231] : memref<1x1x8x8x8x128xf32, #tpu.memory_space<vmem>>, vector<1x1x1x1x8x128xf32>
      %263 = vector.shape_cast %262 : vector<1x1x1x1x8x128xf32> to vector<8x128xf32>
      %264 = vector.extract_strided_slice %247 {offsets = [2, 0, 0], sizes = [9, 8, 128], strides = [1, 1, 1]} : vector<16x8x128xf32> to vector<9x8x128xf32>
      %265 = vector.shape_cast %263 : vector<8x128xf32> to vector<1x8x128xf32>
      %266 = vector.broadcast %265 : vector<1x8x128xf32> to vector<9x8x128xf32>
      %267 = arith.mulf %266, %264 : vector<9x8x128xf32>
      %268 = arith.addf %261, %267 : vector<9x8x128xf32>
      %c0_232 = arith.constant 0 : index
      %c0_233 = arith.constant 0 : index
      %c4_234 = arith.constant 4 : index
      %c3_235 = arith.constant 3 : index
      %c0_236 = arith.constant 0 : index
      %c0_237 = arith.constant 0 : index
      %269 = vector.load %arg1[%c0_232, %c0_233, %c4_234, %c3_235, %c0_236, %c0_237] : memref<1x1x8x8x8x128xf32, #tpu.memory_space<vmem>>, vector<1x1x1x1x8x128xf32>
      %270 = vector.shape_cast %269 : vector<1x1x1x1x8x128xf32> to vector<8x128xf32>
      %271 = vector.extract_strided_slice %247 {offsets = [3, 0, 0], sizes = [9, 8, 128], strides = [1, 1, 1]} : vector<16x8x128xf32> to vector<9x8x128xf32>
      %272 = vector.shape_cast %270 : vector<8x128xf32> to vector<1x8x128xf32>
      %273 = vector.broadcast %272 : vector<1x8x128xf32> to vector<9x8x128xf32>
      %274 = arith.mulf %273, %271 : vector<9x8x128xf32>
      %275 = arith.addf %268, %274 : vector<9x8x128xf32>
      %c0_238 = arith.constant 0 : index
      %c0_239 = arith.constant 0 : index
      %c4_240 = arith.constant 4 : index
      %c4_241 = arith.constant 4 : index
      %c0_242 = arith.constant 0 : index
      %c0_243 = arith.constant 0 : index
      %276 = vector.load %arg1[%c0_238, %c0_239, %c4_240, %c4_241, %c0_242, %c0_243] : memref<1x1x8x8x8x128xf32, #tpu.memory_space<vmem>>, vector<1x1x1x1x8x128xf32>
      %277 = vector.shape_cast %276 : vector<1x1x1x1x8x128xf32> to vector<8x128xf32>
      %278 = vector.extract_strided_slice %247 {offsets = [4, 0, 0], sizes = [9, 8, 128], strides = [1, 1, 1]} : vector<16x8x128xf32> to vector<9x8x128xf32>
      %279 = vector.shape_cast %277 : vector<8x128xf32> to vector<1x8x128xf32>
      %280 = vector.broadcast %279 : vector<1x8x128xf32> to vector<9x8x128xf32>
      %281 = arith.mulf %280, %278 : vector<9x8x128xf32>
      %282 = arith.addf %275, %281 : vector<9x8x128xf32>
      %c0_244 = arith.constant 0 : index
      %c0_245 = arith.constant 0 : index
      %c4_246 = arith.constant 4 : index
      %c5_247 = arith.constant 5 : index
      %c0_248 = arith.constant 0 : index
      %c0_249 = arith.constant 0 : index
      %283 = vector.load %arg1[%c0_244, %c0_245, %c4_246, %c5_247, %c0_248, %c0_249] : memref<1x1x8x8x8x128xf32, #tpu.memory_space<vmem>>, vector<1x1x1x1x8x128xf32>
      %284 = vector.shape_cast %283 : vector<1x1x1x1x8x128xf32> to vector<8x128xf32>
      %285 = vector.extract_strided_slice %247 {offsets = [5, 0, 0], sizes = [9, 8, 128], strides = [1, 1, 1]} : vector<16x8x128xf32> to vector<9x8x128xf32>
      %286 = vector.shape_cast %284 : vector<8x128xf32> to vector<1x8x128xf32>
      %287 = vector.broadcast %286 : vector<1x8x128xf32> to vector<9x8x128xf32>
      %288 = arith.mulf %287, %285 : vector<9x8x128xf32>
      %289 = arith.addf %282, %288 : vector<9x8x128xf32>
      %c0_250 = arith.constant 0 : index
      %c0_251 = arith.constant 0 : index
      %c4_252 = arith.constant 4 : index
      %c6_253 = arith.constant 6 : index
      %c0_254 = arith.constant 0 : index
      %c0_255 = arith.constant 0 : index
      %290 = vector.load %arg1[%c0_250, %c0_251, %c4_252, %c6_253, %c0_254, %c0_255] : memref<1x1x8x8x8x128xf32, #tpu.memory_space<vmem>>, vector<1x1x1x1x8x128xf32>
      %291 = vector.shape_cast %290 : vector<1x1x1x1x8x128xf32> to vector<8x128xf32>
      %292 = vector.extract_strided_slice %247 {offsets = [6, 0, 0], sizes = [9, 8, 128], strides = [1, 1, 1]} : vector<16x8x128xf32> to vector<9x8x128xf32>
      %293 = vector.shape_cast %291 : vector<8x128xf32> to vector<1x8x128xf32>
      %294 = vector.broadcast %293 : vector<1x8x128xf32> to vector<9x8x128xf32>
      %295 = arith.mulf %294, %292 : vector<9x8x128xf32>
      %296 = arith.addf %289, %295 : vector<9x8x128xf32>
      %c0_256 = arith.constant 0 : index
      %c0_257 = arith.constant 0 : index
      %c4_258 = arith.constant 4 : index
      %c7_259 = arith.constant 7 : index
      %c0_260 = arith.constant 0 : index
      %c0_261 = arith.constant 0 : index
      %297 = vector.load %arg1[%c0_256, %c0_257, %c4_258, %c7_259, %c0_260, %c0_261] : memref<1x1x8x8x8x128xf32, #tpu.memory_space<vmem>>, vector<1x1x1x1x8x128xf32>
      %298 = vector.shape_cast %297 : vector<1x1x1x1x8x128xf32> to vector<8x128xf32>
      %299 = vector.extract_strided_slice %247 {offsets = [7, 0, 0], sizes = [9, 8, 128], strides = [1, 1, 1]} : vector<16x8x128xf32> to vector<9x8x128xf32>
      %300 = vector.shape_cast %298 : vector<8x128xf32> to vector<1x8x128xf32>
      %301 = vector.broadcast %300 : vector<1x8x128xf32> to vector<9x8x128xf32>
      %302 = arith.mulf %301, %299 : vector<9x8x128xf32>
      %303 = arith.addf %296, %302 : vector<9x8x128xf32>
      %c5_i32 = arith.constant 5 : i32
      %304 = arith.addi %2, %c5_i32 : i32
      %c0_262 = arith.constant 0 : index
      %c0_263 = arith.constant 0 : index
      %305 = arith.index_cast %304 : i32 to index
      %c0_264 = arith.constant 0 : index
      %c0_265 = arith.constant 0 : index
      %c0_266 = arith.constant 0 : index
      %306 = vector.load %arg2[%c0_262, %c0_263, %305, %c0_264, %c0_265, %c0_266] : memref<1x1x16x16x8x128xf32, #tpu.memory_space<vmem>>, vector<1x1x1x16x8x128xf32>
      %307 = vector.shape_cast %306 : vector<1x1x1x16x8x128xf32> to vector<16x8x128xf32>
      %c0_267 = arith.constant 0 : index
      %c0_268 = arith.constant 0 : index
      %c5_269 = arith.constant 5 : index
      %c0_270 = arith.constant 0 : index
      %c0_271 = arith.constant 0 : index
      %c0_272 = arith.constant 0 : index
      %308 = vector.load %arg1[%c0_267, %c0_268, %c5_269, %c0_270, %c0_271, %c0_272] : memref<1x1x8x8x8x128xf32, #tpu.memory_space<vmem>>, vector<1x1x1x1x8x128xf32>
      %309 = vector.shape_cast %308 : vector<1x1x1x1x8x128xf32> to vector<8x128xf32>
      %310 = vector.extract_strided_slice %307 {offsets = [0, 0, 0], sizes = [9, 8, 128], strides = [1, 1, 1]} : vector<16x8x128xf32> to vector<9x8x128xf32>
      %311 = vector.shape_cast %309 : vector<8x128xf32> to vector<1x8x128xf32>
      %312 = vector.broadcast %311 : vector<1x8x128xf32> to vector<9x8x128xf32>
      %313 = arith.mulf %312, %310 : vector<9x8x128xf32>
      %314 = arith.addf %303, %313 : vector<9x8x128xf32>
      %c0_273 = arith.constant 0 : index
      %c0_274 = arith.constant 0 : index
      %c5_275 = arith.constant 5 : index
      %c1_276 = arith.constant 1 : index
      %c0_277 = arith.constant 0 : index
      %c0_278 = arith.constant 0 : index
      %315 = vector.load %arg1[%c0_273, %c0_274, %c5_275, %c1_276, %c0_277, %c0_278] : memref<1x1x8x8x8x128xf32, #tpu.memory_space<vmem>>, vector<1x1x1x1x8x128xf32>
      %316 = vector.shape_cast %315 : vector<1x1x1x1x8x128xf32> to vector<8x128xf32>
      %317 = vector.extract_strided_slice %307 {offsets = [1, 0, 0], sizes = [9, 8, 128], strides = [1, 1, 1]} : vector<16x8x128xf32> to vector<9x8x128xf32>
      %318 = vector.shape_cast %316 : vector<8x128xf32> to vector<1x8x128xf32>
      %319 = vector.broadcast %318 : vector<1x8x128xf32> to vector<9x8x128xf32>
      %320 = arith.mulf %319, %317 : vector<9x8x128xf32>
      %321 = arith.addf %314, %320 : vector<9x8x128xf32>
      %c0_279 = arith.constant 0 : index
      %c0_280 = arith.constant 0 : index
      %c5_281 = arith.constant 5 : index
      %c2_282 = arith.constant 2 : index
      %c0_283 = arith.constant 0 : index
      %c0_284 = arith.constant 0 : index
      %322 = vector.load %arg1[%c0_279, %c0_280, %c5_281, %c2_282, %c0_283, %c0_284] : memref<1x1x8x8x8x128xf32, #tpu.memory_space<vmem>>, vector<1x1x1x1x8x128xf32>
      %323 = vector.shape_cast %322 : vector<1x1x1x1x8x128xf32> to vector<8x128xf32>
      %324 = vector.extract_strided_slice %307 {offsets = [2, 0, 0], sizes = [9, 8, 128], strides = [1, 1, 1]} : vector<16x8x128xf32> to vector<9x8x128xf32>
      %325 = vector.shape_cast %323 : vector<8x128xf32> to vector<1x8x128xf32>
      %326 = vector.broadcast %325 : vector<1x8x128xf32> to vector<9x8x128xf32>
      %327 = arith.mulf %326, %324 : vector<9x8x128xf32>
      %328 = arith.addf %321, %327 : vector<9x8x128xf32>
      %c0_285 = arith.constant 0 : index
      %c0_286 = arith.constant 0 : index
      %c5_287 = arith.constant 5 : index
      %c3_288 = arith.constant 3 : index
      %c0_289 = arith.constant 0 : index
      %c0_290 = arith.constant 0 : index
      %329 = vector.load %arg1[%c0_285, %c0_286, %c5_287, %c3_288, %c0_289, %c0_290] : memref<1x1x8x8x8x128xf32, #tpu.memory_space<vmem>>, vector<1x1x1x1x8x128xf32>
      %330 = vector.shape_cast %329 : vector<1x1x1x1x8x128xf32> to vector<8x128xf32>
      %331 = vector.extract_strided_slice %307 {offsets = [3, 0, 0], sizes = [9, 8, 128], strides = [1, 1, 1]} : vector<16x8x128xf32> to vector<9x8x128xf32>
      %332 = vector.shape_cast %330 : vector<8x128xf32> to vector<1x8x128xf32>
      %333 = vector.broadcast %332 : vector<1x8x128xf32> to vector<9x8x128xf32>
      %334 = arith.mulf %333, %331 : vector<9x8x128xf32>
      %335 = arith.addf %328, %334 : vector<9x8x128xf32>
      %c0_291 = arith.constant 0 : index
      %c0_292 = arith.constant 0 : index
      %c5_293 = arith.constant 5 : index
      %c4_294 = arith.constant 4 : index
      %c0_295 = arith.constant 0 : index
      %c0_296 = arith.constant 0 : index
      %336 = vector.load %arg1[%c0_291, %c0_292, %c5_293, %c4_294, %c0_295, %c0_296] : memref<1x1x8x8x8x128xf32, #tpu.memory_space<vmem>>, vector<1x1x1x1x8x128xf32>
      %337 = vector.shape_cast %336 : vector<1x1x1x1x8x128xf32> to vector<8x128xf32>
      %338 = vector.extract_strided_slice %307 {offsets = [4, 0, 0], sizes = [9, 8, 128], strides = [1, 1, 1]} : vector<16x8x128xf32> to vector<9x8x128xf32>
      %339 = vector.shape_cast %337 : vector<8x128xf32> to vector<1x8x128xf32>
      %340 = vector.broadcast %339 : vector<1x8x128xf32> to vector<9x8x128xf32>
      %341 = arith.mulf %340, %338 : vector<9x8x128xf32>
      %342 = arith.addf %335, %341 : vector<9x8x128xf32>
      %c0_297 = arith.constant 0 : index
      %c0_298 = arith.constant 0 : index
      %c5_299 = arith.constant 5 : index
      %c5_300 = arith.constant 5 : index
      %c0_301 = arith.constant 0 : index
      %c0_302 = arith.constant 0 : index
      %343 = vector.load %arg1[%c0_297, %c0_298, %c5_299, %c5_300, %c0_301, %c0_302] : memref<1x1x8x8x8x128xf32, #tpu.memory_space<vmem>>, vector<1x1x1x1x8x128xf32>
      %344 = vector.shape_cast %343 : vector<1x1x1x1x8x128xf32> to vector<8x128xf32>
      %345 = vector.extract_strided_slice %307 {offsets = [5, 0, 0], sizes = [9, 8, 128], strides = [1, 1, 1]} : vector<16x8x128xf32> to vector<9x8x128xf32>
      %346 = vector.shape_cast %344 : vector<8x128xf32> to vector<1x8x128xf32>
      %347 = vector.broadcast %346 : vector<1x8x128xf32> to vector<9x8x128xf32>
      %348 = arith.mulf %347, %345 : vector<9x8x128xf32>
      %349 = arith.addf %342, %348 : vector<9x8x128xf32>
      %c0_303 = arith.constant 0 : index
      %c0_304 = arith.constant 0 : index
      %c5_305 = arith.constant 5 : index
      %c6_306 = arith.constant 6 : index
      %c0_307 = arith.constant 0 : index
      %c0_308 = arith.constant 0 : index
      %350 = vector.load %arg1[%c0_303, %c0_304, %c5_305, %c6_306, %c0_307, %c0_308] : memref<1x1x8x8x8x128xf32, #tpu.memory_space<vmem>>, vector<1x1x1x1x8x128xf32>
      %351 = vector.shape_cast %350 : vector<1x1x1x1x8x128xf32> to vector<8x128xf32>
      %352 = vector.extract_strided_slice %307 {offsets = [6, 0, 0], sizes = [9, 8, 128], strides = [1, 1, 1]} : vector<16x8x128xf32> to vector<9x8x128xf32>
      %353 = vector.shape_cast %351 : vector<8x128xf32> to vector<1x8x128xf32>
      %354 = vector.broadcast %353 : vector<1x8x128xf32> to vector<9x8x128xf32>
      %355 = arith.mulf %354, %352 : vector<9x8x128xf32>
      %356 = arith.addf %349, %355 : vector<9x8x128xf32>
      %c0_309 = arith.constant 0 : index
      %c0_310 = arith.constant 0 : index
      %c5_311 = arith.constant 5 : index
      %c7_312 = arith.constant 7 : index
      %c0_313 = arith.constant 0 : index
      %c0_314 = arith.constant 0 : index
      %357 = vector.load %arg1[%c0_309, %c0_310, %c5_311, %c7_312, %c0_313, %c0_314] : memref<1x1x8x8x8x128xf32, #tpu.memory_space<vmem>>, vector<1x1x1x1x8x128xf32>
      %358 = vector.shape_cast %357 : vector<1x1x1x1x8x128xf32> to vector<8x128xf32>
      %359 = vector.extract_strided_slice %307 {offsets = [7, 0, 0], sizes = [9, 8, 128], strides = [1, 1, 1]} : vector<16x8x128xf32> to vector<9x8x128xf32>
      %360 = vector.shape_cast %358 : vector<8x128xf32> to vector<1x8x128xf32>
      %361 = vector.broadcast %360 : vector<1x8x128xf32> to vector<9x8x128xf32>
      %362 = arith.mulf %361, %359 : vector<9x8x128xf32>
      %363 = arith.addf %356, %362 : vector<9x8x128xf32>
      %c6_i32 = arith.constant 6 : i32
      %364 = arith.addi %2, %c6_i32 : i32
      %c0_315 = arith.constant 0 : index
      %c0_316 = arith.constant 0 : index
      %365 = arith.index_cast %364 : i32 to index
      %c0_317 = arith.constant 0 : index
      %c0_318 = arith.constant 0 : index
      %c0_319 = arith.constant 0 : index
      %366 = vector.load %arg2[%c0_315, %c0_316, %365, %c0_317, %c0_318, %c0_319] : memref<1x1x16x16x8x128xf32, #tpu.memory_space<vmem>>, vector<1x1x1x16x8x128xf32>
      %367 = vector.shape_cast %366 : vector<1x1x1x16x8x128xf32> to vector<16x8x128xf32>
      %c0_320 = arith.constant 0 : index
      %c0_321 = arith.constant 0 : index
      %c6_322 = arith.constant 6 : index
      %c0_323 = arith.constant 0 : index
      %c0_324 = arith.constant 0 : index
      %c0_325 = arith.constant 0 : index
      %368 = vector.load %arg1[%c0_320, %c0_321, %c6_322, %c0_323, %c0_324, %c0_325] : memref<1x1x8x8x8x128xf32, #tpu.memory_space<vmem>>, vector<1x1x1x1x8x128xf32>
      %369 = vector.shape_cast %368 : vector<1x1x1x1x8x128xf32> to vector<8x128xf32>
      %370 = vector.extract_strided_slice %367 {offsets = [0, 0, 0], sizes = [9, 8, 128], strides = [1, 1, 1]} : vector<16x8x128xf32> to vector<9x8x128xf32>
      %371 = vector.shape_cast %369 : vector<8x128xf32> to vector<1x8x128xf32>
      %372 = vector.broadcast %371 : vector<1x8x128xf32> to vector<9x8x128xf32>
      %373 = arith.mulf %372, %370 : vector<9x8x128xf32>
      %374 = arith.addf %363, %373 : vector<9x8x128xf32>
      %c0_326 = arith.constant 0 : index
      %c0_327 = arith.constant 0 : index
      %c6_328 = arith.constant 6 : index
      %c1_329 = arith.constant 1 : index
      %c0_330 = arith.constant 0 : index
      %c0_331 = arith.constant 0 : index
      %375 = vector.load %arg1[%c0_326, %c0_327, %c6_328, %c1_329, %c0_330, %c0_331] : memref<1x1x8x8x8x128xf32, #tpu.memory_space<vmem>>, vector<1x1x1x1x8x128xf32>
      %376 = vector.shape_cast %375 : vector<1x1x1x1x8x128xf32> to vector<8x128xf32>
      %377 = vector.extract_strided_slice %367 {offsets = [1, 0, 0], sizes = [9, 8, 128], strides = [1, 1, 1]} : vector<16x8x128xf32> to vector<9x8x128xf32>
      %378 = vector.shape_cast %376 : vector<8x128xf32> to vector<1x8x128xf32>
      %379 = vector.broadcast %378 : vector<1x8x128xf32> to vector<9x8x128xf32>
      %380 = arith.mulf %379, %377 : vector<9x8x128xf32>
      %381 = arith.addf %374, %380 : vector<9x8x128xf32>
      %c0_332 = arith.constant 0 : index
      %c0_333 = arith.constant 0 : index
      %c6_334 = arith.constant 6 : index
      %c2_335 = arith.constant 2 : index
      %c0_336 = arith.constant 0 : index
      %c0_337 = arith.constant 0 : index
      %382 = vector.load %arg1[%c0_332, %c0_333, %c6_334, %c2_335, %c0_336, %c0_337] : memref<1x1x8x8x8x128xf32, #tpu.memory_space<vmem>>, vector<1x1x1x1x8x128xf32>
      %383 = vector.shape_cast %382 : vector<1x1x1x1x8x128xf32> to vector<8x128xf32>
      %384 = vector.extract_strided_slice %367 {offsets = [2, 0, 0], sizes = [9, 8, 128], strides = [1, 1, 1]} : vector<16x8x128xf32> to vector<9x8x128xf32>
      %385 = vector.shape_cast %383 : vector<8x128xf32> to vector<1x8x128xf32>
      %386 = vector.broadcast %385 : vector<1x8x128xf32> to vector<9x8x128xf32>
      %387 = arith.mulf %386, %384 : vector<9x8x128xf32>
      %388 = arith.addf %381, %387 : vector<9x8x128xf32>
      %c0_338 = arith.constant 0 : index
      %c0_339 = arith.constant 0 : index
      %c6_340 = arith.constant 6 : index
      %c3_341 = arith.constant 3 : index
      %c0_342 = arith.constant 0 : index
      %c0_343 = arith.constant 0 : index
      %389 = vector.load %arg1[%c0_338, %c0_339, %c6_340, %c3_341, %c0_342, %c0_343] : memref<1x1x8x8x8x128xf32, #tpu.memory_space<vmem>>, vector<1x1x1x1x8x128xf32>
      %390 = vector.shape_cast %389 : vector<1x1x1x1x8x128xf32> to vector<8x128xf32>
      %391 = vector.extract_strided_slice %367 {offsets = [3, 0, 0], sizes = [9, 8, 128], strides = [1, 1, 1]} : vector<16x8x128xf32> to vector<9x8x128xf32>
      %392 = vector.shape_cast %390 : vector<8x128xf32> to vector<1x8x128xf32>
      %393 = vector.broadcast %392 : vector<1x8x128xf32> to vector<9x8x128xf32>
      %394 = arith.mulf %393, %391 : vector<9x8x128xf32>
      %395 = arith.addf %388, %394 : vector<9x8x128xf32>
      %c0_344 = arith.constant 0 : index
      %c0_345 = arith.constant 0 : index
      %c6_346 = arith.constant 6 : index
      %c4_347 = arith.constant 4 : index
      %c0_348 = arith.constant 0 : index
      %c0_349 = arith.constant 0 : index
      %396 = vector.load %arg1[%c0_344, %c0_345, %c6_346, %c4_347, %c0_348, %c0_349] : memref<1x1x8x8x8x128xf32, #tpu.memory_space<vmem>>, vector<1x1x1x1x8x128xf32>
      %397 = vector.shape_cast %396 : vector<1x1x1x1x8x128xf32> to vector<8x128xf32>
      %398 = vector.extract_strided_slice %367 {offsets = [4, 0, 0], sizes = [9, 8, 128], strides = [1, 1, 1]} : vector<16x8x128xf32> to vector<9x8x128xf32>
      %399 = vector.shape_cast %397 : vector<8x128xf32> to vector<1x8x128xf32>
      %400 = vector.broadcast %399 : vector<1x8x128xf32> to vector<9x8x128xf32>
      %401 = arith.mulf %400, %398 : vector<9x8x128xf32>
      %402 = arith.addf %395, %401 : vector<9x8x128xf32>
      %c0_350 = arith.constant 0 : index
      %c0_351 = arith.constant 0 : index
      %c6_352 = arith.constant 6 : index
      %c5_353 = arith.constant 5 : index
      %c0_354 = arith.constant 0 : index
      %c0_355 = arith.constant 0 : index
      %403 = vector.load %arg1[%c0_350, %c0_351, %c6_352, %c5_353, %c0_354, %c0_355] : memref<1x1x8x8x8x128xf32, #tpu.memory_space<vmem>>, vector<1x1x1x1x8x128xf32>
      %404 = vector.shape_cast %403 : vector<1x1x1x1x8x128xf32> to vector<8x128xf32>
      %405 = vector.extract_strided_slice %367 {offsets = [5, 0, 0], sizes = [9, 8, 128], strides = [1, 1, 1]} : vector<16x8x128xf32> to vector<9x8x128xf32>
      %406 = vector.shape_cast %404 : vector<8x128xf32> to vector<1x8x128xf32>
      %407 = vector.broadcast %406 : vector<1x8x128xf32> to vector<9x8x128xf32>
      %408 = arith.mulf %407, %405 : vector<9x8x128xf32>
      %409 = arith.addf %402, %408 : vector<9x8x128xf32>
      %c0_356 = arith.constant 0 : index
      %c0_357 = arith.constant 0 : index
      %c6_358 = arith.constant 6 : index
      %c6_359 = arith.constant 6 : index
      %c0_360 = arith.constant 0 : index
      %c0_361 = arith.constant 0 : index
      %410 = vector.load %arg1[%c0_356, %c0_357, %c6_358, %c6_359, %c0_360, %c0_361] : memref<1x1x8x8x8x128xf32, #tpu.memory_space<vmem>>, vector<1x1x1x1x8x128xf32>
      %411 = vector.shape_cast %410 : vector<1x1x1x1x8x128xf32> to vector<8x128xf32>
      %412 = vector.extract_strided_slice %367 {offsets = [6, 0, 0], sizes = [9, 8, 128], strides = [1, 1, 1]} : vector<16x8x128xf32> to vector<9x8x128xf32>
      %413 = vector.shape_cast %411 : vector<8x128xf32> to vector<1x8x128xf32>
      %414 = vector.broadcast %413 : vector<1x8x128xf32> to vector<9x8x128xf32>
      %415 = arith.mulf %414, %412 : vector<9x8x128xf32>
      %416 = arith.addf %409, %415 : vector<9x8x128xf32>
      %c0_362 = arith.constant 0 : index
      %c0_363 = arith.constant 0 : index
      %c6_364 = arith.constant 6 : index
      %c7_365 = arith.constant 7 : index
      %c0_366 = arith.constant 0 : index
      %c0_367 = arith.constant 0 : index
      %417 = vector.load %arg1[%c0_362, %c0_363, %c6_364, %c7_365, %c0_366, %c0_367] : memref<1x1x8x8x8x128xf32, #tpu.memory_space<vmem>>, vector<1x1x1x1x8x128xf32>
      %418 = vector.shape_cast %417 : vector<1x1x1x1x8x128xf32> to vector<8x128xf32>
      %419 = vector.extract_strided_slice %367 {offsets = [7, 0, 0], sizes = [9, 8, 128], strides = [1, 1, 1]} : vector<16x8x128xf32> to vector<9x8x128xf32>
      %420 = vector.shape_cast %418 : vector<8x128xf32> to vector<1x8x128xf32>
      %421 = vector.broadcast %420 : vector<1x8x128xf32> to vector<9x8x128xf32>
      %422 = arith.mulf %421, %419 : vector<9x8x128xf32>
      %423 = arith.addf %416, %422 : vector<9x8x128xf32>
      %c7_i32 = arith.constant 7 : i32
      %424 = arith.addi %2, %c7_i32 : i32
      %c0_368 = arith.constant 0 : index
      %c0_369 = arith.constant 0 : index
      %425 = arith.index_cast %424 : i32 to index
      %c0_370 = arith.constant 0 : index
      %c0_371 = arith.constant 0 : index
      %c0_372 = arith.constant 0 : index
      %426 = vector.load %arg2[%c0_368, %c0_369, %425, %c0_370, %c0_371, %c0_372] : memref<1x1x16x16x8x128xf32, #tpu.memory_space<vmem>>, vector<1x1x1x16x8x128xf32>
      %427 = vector.shape_cast %426 : vector<1x1x1x16x8x128xf32> to vector<16x8x128xf32>
      %c0_373 = arith.constant 0 : index
      %c0_374 = arith.constant 0 : index
      %c7_375 = arith.constant 7 : index
      %c0_376 = arith.constant 0 : index
      %c0_377 = arith.constant 0 : index
      %c0_378 = arith.constant 0 : index
      %428 = vector.load %arg1[%c0_373, %c0_374, %c7_375, %c0_376, %c0_377, %c0_378] : memref<1x1x8x8x8x128xf32, #tpu.memory_space<vmem>>, vector<1x1x1x1x8x128xf32>
      %429 = vector.shape_cast %428 : vector<1x1x1x1x8x128xf32> to vector<8x128xf32>
      %430 = vector.extract_strided_slice %427 {offsets = [0, 0, 0], sizes = [9, 8, 128], strides = [1, 1, 1]} : vector<16x8x128xf32> to vector<9x8x128xf32>
      %431 = vector.shape_cast %429 : vector<8x128xf32> to vector<1x8x128xf32>
      %432 = vector.broadcast %431 : vector<1x8x128xf32> to vector<9x8x128xf32>
      %433 = arith.mulf %432, %430 : vector<9x8x128xf32>
      %434 = arith.addf %423, %433 : vector<9x8x128xf32>
      %c0_379 = arith.constant 0 : index
      %c0_380 = arith.constant 0 : index
      %c7_381 = arith.constant 7 : index
      %c1_382 = arith.constant 1 : index
      %c0_383 = arith.constant 0 : index
      %c0_384 = arith.constant 0 : index
      %435 = vector.load %arg1[%c0_379, %c0_380, %c7_381, %c1_382, %c0_383, %c0_384] : memref<1x1x8x8x8x128xf32, #tpu.memory_space<vmem>>, vector<1x1x1x1x8x128xf32>
      %436 = vector.shape_cast %435 : vector<1x1x1x1x8x128xf32> to vector<8x128xf32>
      %437 = vector.extract_strided_slice %427 {offsets = [1, 0, 0], sizes = [9, 8, 128], strides = [1, 1, 1]} : vector<16x8x128xf32> to vector<9x8x128xf32>
      %438 = vector.shape_cast %436 : vector<8x128xf32> to vector<1x8x128xf32>
      %439 = vector.broadcast %438 : vector<1x8x128xf32> to vector<9x8x128xf32>
      %440 = arith.mulf %439, %437 : vector<9x8x128xf32>
      %441 = arith.addf %434, %440 : vector<9x8x128xf32>
      %c0_385 = arith.constant 0 : index
      %c0_386 = arith.constant 0 : index
      %c7_387 = arith.constant 7 : index
      %c2_388 = arith.constant 2 : index
      %c0_389 = arith.constant 0 : index
      %c0_390 = arith.constant 0 : index
      %442 = vector.load %arg1[%c0_385, %c0_386, %c7_387, %c2_388, %c0_389, %c0_390] : memref<1x1x8x8x8x128xf32, #tpu.memory_space<vmem>>, vector<1x1x1x1x8x128xf32>
      %443 = vector.shape_cast %442 : vector<1x1x1x1x8x128xf32> to vector<8x128xf32>
      %444 = vector.extract_strided_slice %427 {offsets = [2, 0, 0], sizes = [9, 8, 128], strides = [1, 1, 1]} : vector<16x8x128xf32> to vector<9x8x128xf32>
      %445 = vector.shape_cast %443 : vector<8x128xf32> to vector<1x8x128xf32>
      %446 = vector.broadcast %445 : vector<1x8x128xf32> to vector<9x8x128xf32>
      %447 = arith.mulf %446, %444 : vector<9x8x128xf32>
      %448 = arith.addf %441, %447 : vector<9x8x128xf32>
      %c0_391 = arith.constant 0 : index
      %c0_392 = arith.constant 0 : index
      %c7_393 = arith.constant 7 : index
      %c3_394 = arith.constant 3 : index
      %c0_395 = arith.constant 0 : index
      %c0_396 = arith.constant 0 : index
      %449 = vector.load %arg1[%c0_391, %c0_392, %c7_393, %c3_394, %c0_395, %c0_396] : memref<1x1x8x8x8x128xf32, #tpu.memory_space<vmem>>, vector<1x1x1x1x8x128xf32>
      %450 = vector.shape_cast %449 : vector<1x1x1x1x8x128xf32> to vector<8x128xf32>
      %451 = vector.extract_strided_slice %427 {offsets = [3, 0, 0], sizes = [9, 8, 128], strides = [1, 1, 1]} : vector<16x8x128xf32> to vector<9x8x128xf32>
      %452 = vector.shape_cast %450 : vector<8x128xf32> to vector<1x8x128xf32>
      %453 = vector.broadcast %452 : vector<1x8x128xf32> to vector<9x8x128xf32>
      %454 = arith.mulf %453, %451 : vector<9x8x128xf32>
      %455 = arith.addf %448, %454 : vector<9x8x128xf32>
      %c0_397 = arith.constant 0 : index
      %c0_398 = arith.constant 0 : index
      %c7_399 = arith.constant 7 : index
      %c4_400 = arith.constant 4 : index
      %c0_401 = arith.constant 0 : index
      %c0_402 = arith.constant 0 : index
      %456 = vector.load %arg1[%c0_397, %c0_398, %c7_399, %c4_400, %c0_401, %c0_402] : memref<1x1x8x8x8x128xf32, #tpu.memory_space<vmem>>, vector<1x1x1x1x8x128xf32>
      %457 = vector.shape_cast %456 : vector<1x1x1x1x8x128xf32> to vector<8x128xf32>
      %458 = vector.extract_strided_slice %427 {offsets = [4, 0, 0], sizes = [9, 8, 128], strides = [1, 1, 1]} : vector<16x8x128xf32> to vector<9x8x128xf32>
      %459 = vector.shape_cast %457 : vector<8x128xf32> to vector<1x8x128xf32>
      %460 = vector.broadcast %459 : vector<1x8x128xf32> to vector<9x8x128xf32>
      %461 = arith.mulf %460, %458 : vector<9x8x128xf32>
      %462 = arith.addf %455, %461 : vector<9x8x128xf32>
      %c0_403 = arith.constant 0 : index
      %c0_404 = arith.constant 0 : index
      %c7_405 = arith.constant 7 : index
      %c5_406 = arith.constant 5 : index
      %c0_407 = arith.constant 0 : index
      %c0_408 = arith.constant 0 : index
      %463 = vector.load %arg1[%c0_403, %c0_404, %c7_405, %c5_406, %c0_407, %c0_408] : memref<1x1x8x8x8x128xf32, #tpu.memory_space<vmem>>, vector<1x1x1x1x8x128xf32>
      %464 = vector.shape_cast %463 : vector<1x1x1x1x8x128xf32> to vector<8x128xf32>
      %465 = vector.extract_strided_slice %427 {offsets = [5, 0, 0], sizes = [9, 8, 128], strides = [1, 1, 1]} : vector<16x8x128xf32> to vector<9x8x128xf32>
      %466 = vector.shape_cast %464 : vector<8x128xf32> to vector<1x8x128xf32>
      %467 = vector.broadcast %466 : vector<1x8x128xf32> to vector<9x8x128xf32>
      %468 = arith.mulf %467, %465 : vector<9x8x128xf32>
      %469 = arith.addf %462, %468 : vector<9x8x128xf32>
      %c0_409 = arith.constant 0 : index
      %c0_410 = arith.constant 0 : index
      %c7_411 = arith.constant 7 : index
      %c6_412 = arith.constant 6 : index
      %c0_413 = arith.constant 0 : index
      %c0_414 = arith.constant 0 : index
      %470 = vector.load %arg1[%c0_409, %c0_410, %c7_411, %c6_412, %c0_413, %c0_414] : memref<1x1x8x8x8x128xf32, #tpu.memory_space<vmem>>, vector<1x1x1x1x8x128xf32>
      %471 = vector.shape_cast %470 : vector<1x1x1x1x8x128xf32> to vector<8x128xf32>
      %472 = vector.extract_strided_slice %427 {offsets = [6, 0, 0], sizes = [9, 8, 128], strides = [1, 1, 1]} : vector<16x8x128xf32> to vector<9x8x128xf32>
      %473 = vector.shape_cast %471 : vector<8x128xf32> to vector<1x8x128xf32>
      %474 = vector.broadcast %473 : vector<1x8x128xf32> to vector<9x8x128xf32>
      %475 = arith.mulf %474, %472 : vector<9x8x128xf32>
      %476 = arith.addf %469, %475 : vector<9x8x128xf32>
      %c0_415 = arith.constant 0 : index
      %c0_416 = arith.constant 0 : index
      %c7_417 = arith.constant 7 : index
      %c7_418 = arith.constant 7 : index
      %c0_419 = arith.constant 0 : index
      %c0_420 = arith.constant 0 : index
      %477 = vector.load %arg1[%c0_415, %c0_416, %c7_417, %c7_418, %c0_419, %c0_420] : memref<1x1x8x8x8x128xf32, #tpu.memory_space<vmem>>, vector<1x1x1x1x8x128xf32>
      %478 = vector.shape_cast %477 : vector<1x1x1x1x8x128xf32> to vector<8x128xf32>
      %479 = vector.extract_strided_slice %427 {offsets = [7, 0, 0], sizes = [9, 8, 128], strides = [1, 1, 1]} : vector<16x8x128xf32> to vector<9x8x128xf32>
      %480 = vector.shape_cast %478 : vector<8x128xf32> to vector<1x8x128xf32>
      %481 = vector.broadcast %480 : vector<1x8x128xf32> to vector<9x8x128xf32>
      %482 = arith.mulf %481, %479 : vector<9x8x128xf32>
      %483 = arith.addf %476, %482 : vector<9x8x128xf32>
      %484 = vector.shape_cast %483 : vector<9x8x128xf32> to vector<72x128xf32>
      %c0_421 = arith.constant 0 : index
      %c0_422 = arith.constant 0 : index
      %485 = vector.load %arg3[%c0_421, %c0_422] : memref<128x128xf32, #tpu.memory_space<vmem>>, vector<128x128xf32>
      %cst_423 = arith.constant dense<0.000000e+00> : vector<72x128xf32>
      %486 = tpu.matmul %484, %485, %cst_423 {dimension_numbers = #tpu.dot_dimension_numbers<[1], [0], [0], [1], [0, 0, 1, 1], [], []>} : vector<72x128xf32>, vector<128x128xf32>, vector<72x128xf32> -> vector<72x128xf32>
      %c0_424 = arith.constant 0 : index
      %c0_425 = arith.constant 0 : index
      %487 = vector.load %arg4[%c0_424, %c0_425] : memref<1x128xf32, #tpu.memory_space<vmem>>, vector<1x128xf32>
      %488 = vector.broadcast %487 : vector<1x128xf32> to vector<72x128xf32>
      %489 = arith.addf %486, %488 : vector<72x128xf32>
      %c0_426 = arith.constant 0 : index
      %c0_427 = arith.constant 0 : index
      %490 = arith.index_cast %2 : i32 to index
      %c0_428 = arith.constant 0 : index
      %c0_429 = arith.constant 0 : index
      %491 = vector.load %arg5[%c0_426, %c0_427, %490, %c0_428, %c0_429] : memref<1x1x9x72x128xf32, #tpu.memory_space<vmem>>, vector<1x1x1x72x128xf32>
      %492 = vector.shape_cast %491 : vector<1x1x1x72x128xf32> to vector<72x128xf32>
      %493 = vector.shape_cast %489 : vector<72x128xf32> to vector<1x1x1x72x128xf32>
      tpu.vector_store %arg5[%c0_426, %c0_427, %490, %c0_428, %c0_429], %493 {strides = array<i32>} : memref<1x1x9x72x128xf32, #tpu.memory_space<vmem>>, vector<1x1x1x72x128xf32>,
    }
    %c9_i32_0 = arith.constant 9 : i32
    return
  }
  func.func @transform_0(%arg0: i32) -> (i32, i32, i32, i32, i32, i32) {
    %c0_i32 = arith.constant 0 : i32
    %c0_i32_0 = arith.constant 0 : i32
    %c0_i32_1 = arith.constant 0 : i32
    %c0_i32_2 = arith.constant 0 : i32
    %c0_i32_3 = arith.constant 0 : i32
    %c0_i32_4 = arith.constant 0 : i32
    return %arg0, %c0_i32, %c0_i32_0, %c0_i32_1, %c0_i32_2, %c0_i32_3 : i32, i32, i32, i32, i32, i32
  }
  func.func @transform_1(%arg0: i32) -> (i32, i32, i32, i32, i32, i32) {
    %c0_i32 = arith.constant 0 : i32
    %c0_i32_0 = arith.constant 0 : i32
    %c0_i32_1 = arith.constant 0 : i32
    %c0_i32_2 = arith.constant 0 : i32
    %c0_i32_3 = arith.constant 0 : i32
    %c0_i32_4 = arith.constant 0 : i32
    return %arg0, %c0_i32, %c0_i32_0, %c0_i32_1, %c0_i32_2, %c0_i32_3 : i32, i32, i32, i32, i32, i32
  }
  func.func @transform_2(%arg0: i32) -> (i32, i32) {
    %c0_i32 = arith.constant 0 : i32
    %c0_i32_0 = arith.constant 0 : i32
    %c0_i32_1 = arith.constant 0 : i32
    return %c0_i32, %c0_i32_0 : i32, i32
  }
  func.func @transform_3(%arg0: i32) -> (i32, i32) {
    %c0_i32 = arith.constant 0 : i32
    %c0_i32_0 = arith.constant 0 : i32
    %c0_i32_1 = arith.constant 0 : i32
    return %c0_i32, %c0_i32_0 : i32, i32
  }
  func.func @transform_4(%arg0: i32) -> (i32, i32, i32, i32, i32) {
    %c0_i32 = arith.constant 0 : i32
    %c0_i32_0 = arith.constant 0 : i32
    %c0_i32_1 = arith.constant 0 : i32
    %c0_i32_2 = arith.constant 0 : i32
    %c0_i32_3 = arith.constant 0 : i32
    return %arg0, %c0_i32, %c0_i32_0, %c0_i32_1, %c0_i32_2 : i32, i32, i32, i32, i32
  }
}

</mosaic_0001>

<llo_original>
// kernel: tpu_custom_call.1
$region0: #{tpu_custom_call.1}
  #allocation0 [shape = 'u32[]', space=smem, size = 0x4, offset = 0x4, fixed_abs, tag = 'smem constant byte address 0x4 - core index']
  #allocation1 [shape = 'u32[144,128]{1,0:T(1,128)}', space=vmem, size = 0x12000, scoped, tag = 'internal scratch']
  %s0 = inlined_call_operand.hbm [shape: f32[2,1,8,8,8,128], index: 0, kind: input, shape index: {}]
  %s1 = inlined_call_operand.hbm [shape: f32[2,1,16,16,8,128], index: 1, kind: input, shape index: {}]
  %s2 = inlined_call_operand.hbm [shape: f32[128,128], index: 2, kind: input, shape index: {}]
  %s3 = inlined_call_operand.hbm [shape: f32[1,128], index: 3, kind: input, shape index: {}]
  %s4 = inlined_call_operand.hbm [shape: f32[2,1,9,72,128], index: 4, kind: output, shape index: {}]
  %s5 = sld [smem:[#allocation0]]
  $region72: #{tpu_custom_call.1} parent=0
    _
  %s7 = ssub.s32 1, %s5
  %s8 = scalar_select 0, %s7, %s5
  $region1: #{tpu_custom_call.1} parent=0
    #allocation2 [shape = 'u8[524288]{0}', space=vmem, size = 0x80000, scoped, tag = 'input window, operand 0']
    #allocation3 [shape = 's32[2]{0}', space=sflag, size = 0x8, scoped, tag = 'scoped memory for tpu_custom_call.1']
    #allocation4 [shape = 's32[2]{0}', space=sflag, size = 0x8, scoped, tag = 'scoped memory for tpu_custom_call.1']
    #allocation5 [shape = 'u8[2097152]{0}', space=vmem, size = 0x200000, scoped, tag = 'input window, operand 1']
    #allocation6 [shape = 's32[2]{0}', space=sflag, size = 0x8, scoped, tag = 'scoped memory for tpu_custom_call.1']
    #allocation7 [shape = 'u8[65536]{0}', space=vmem, size = 0x10000, scoped, tag = 'input window, operand 2, single buffered']
    #allocation8 [shape = 'u8[512]{0}', space=vmem, size = 0x400, scoped, tag = 'input window, operand 3, single buffered']
    #allocation9 [shape = 's32[1]{0}', space=sflag, size = 0x4, scoped, tag = 'scoped memory for tpu_custom_call.1']
    #allocation10 [shape = 'u8[663552]{0}', space=vmem, size = 0xa2000, scoped, tag = 'output window, operand 0']
    %9 = vsyncpa [#allocation3], 0
    %s10 = scalar_lea.sflag [#allocation3], 1
    %11 = vsyncpa %s10, 0
    %12 = vsyncpa [#allocation6], 0
    %s13 = scalar_lea.sflag [#allocation6], 1
    %14 = vsyncpa %s13, 0
    %15 = vsyncpa [#allocation9], 0
    %16 = vsyncpa [#allocation4], 0
    %s17 = scalar_lea.sflag [#allocation4], 1
    %18 = vsyncpa %s17, 0
    loop: start=0, step=1, limit=4
    $region2: #{tpu_custom_call.1} parent=1 // loop_pre_header
      _
    $region3: #{tpu_custom_call.1} parent=1 // loop_header
      %s20 = sphi 0, %s24
      %p21 = scmp.ge.s32.totalorder %s20, 4
      %s30 = sphi 0, %s32
      %s33 = sphi 0, %s30
      %s34 = sphi 0, %s33
      %s50 = sphi 0, %s34
      %s56 = sphi 0, %s58
      %s59 = sphi 0, %s56
      %s60 = sphi 0, %s59
      %s76 = sphi 0, %s60
      %s80 = sphi 0, %s80
      %s82 = sphi 0, %s80
      %s83 = sphi 0, %s82
      %s97 = sphi 0, %s83
      %s101 = sphi 0, %s101
      %s103 = sphi 0, %s101
      %s104 = sphi 0, %s103
      %s118 = sphi 0, %s104
      %s124 = sphi 0, %s126
      %s127 = sphi 0, %s124
      %s128 = sphi 0, %s127
      %s144 = sphi 0, %s128
    $region4: #{tpu_custom_call.1} parent=1 // loop_header_branch
      %23 = sbr.rel (%p21) target = $region8
    $region5: #{tpu_custom_call.1} parent=1 // loop_body
      %s25 = ssub.s32 %s20, 1
      %s26 = ssub.s32 %s20, 2
      %s27 = sadd.s32 %s20, 1
      %s28 = ssub.s32 %s20, %s27
      %p29 = scmp.eq.s32.totalorder %s28, 0
      %s31 = sadd.s32 %s30, 1
      %s32 = scalar_select %p29, %s30, %s31
      %p35 = pneg %p29
      %p36 = scmp.eq.s32.totalorder %s20, 1
      %p37 = por %p35, %p36
      %p38 = scmp.ne.s32.totalorder %s30, %s33
      %p39 = scmp.eq.s32.totalorder %s20, 0
      %p40 = por %p38, %p39
      %p41 = scmp.ne.s32.totalorder %s30, %s33
      %p42 = scmp.eq.s32.totalorder %s25, 1
      %p43 = por %p41, %p42
      %p44 = scmp.ne.s32.totalorder %s33, %s34
      %p45 = scmp.eq.s32.totalorder %s25, 0
      %p46 = por %p44, %p45
      %p47 = scmp.ne.s32.totalorder %s33, %s34
      %p48 = scmp.eq.s32.totalorder %s26, 1
      %p49 = por %p47, %p48
      %p51 = scmp.ne.s32.totalorder %s34, %s50
      %p52 = scmp.eq.s32.totalorder %s26, 0
      %p53 = por %p51, %p52
      %s54 = ssub.s32 %s20, %s27
      %p55 = scmp.eq.s32.totalorder %s54, 0
      %s57 = sadd.s32 %s56, 1
      %s58 = scalar_select %p55, %s56, %s57
      %p61 = pneg %p55
      %p62 = scmp.eq.s32.totalorder %s20, 1
      %p63 = por %p61, %p62
      %p64 = scmp.ne.s32.totalorder %s56, %s59
      %p65 = scmp.eq.s32.totalorder %s20, 0
      %p66 = por %p64, %p65
      %p67 = scmp.ne.s32.totalorder %s56, %s59
      %p68 = scmp.eq.s32.totalorder %s25, 1
      %p69 = por %p67, %p68
      %p70 = scmp.ne.s32.totalorder %s59, %s60
      %p71 = scmp.eq.s32.totalorder %s25, 0
      %p72 = por %p70, %p71
      %p73 = scmp.ne.s32.totalorder %s59, %s60
      %p74 = scmp.eq.s32.totalorder %s26, 1
      %p75 = por %p73, %p74
      %p77 = scmp.ne.s32.totalorder %s60, %s76
      %p78 = scmp.eq.s32.totalorder %s26, 0
      %p79 = por %p77, %p78
      %s81 = sadd.s32 %s80, 1
      %p84 = scmp.eq.s32.totalorder %s20, 1
      %p85 = scmp.ne.s32.totalorder %s80, %s82
      %p86 = scmp.eq.s32.totalorder %s20, 0
      %p87 = por %p85, %p86
      %p88 = scmp.ne.s32.totalorder %s80, %s82
      %p89 = scmp.eq.s32.totalorder %s25, 1
      %p90 = por %p88, %p89
      %p91 = scmp.ne.s32.totalorder %s82, %s83
      %p92 = scmp.eq.s32.totalorder %s25, 0
      %p93 = por %p91, %p92
      %p94 = scmp.ne.s32.totalorder %s82, %s83
      %p95 = scmp.eq.s32.totalorder %s26, 1
      %p96 = por %p94, %p95
      %p98 = scmp.ne.s32.totalorder %s83, %s97
      %p99 = scmp.eq.s32.totalorder %s26, 0
      %p100 = por %p98, %p99
      %s102 = sadd.s32 %s101, 1
      %p105 = scmp.eq.s32.totalorder %s20, 1
      %p106 = scmp.ne.s32.totalorder %s101, %s103
      %p107 = scmp.eq.s32.totalorder %s20, 0
      %p108 = por %p106, %p107
      %p109 = scmp.ne.s32.totalorder %s101, %s103
      %p110 = scmp.eq.s32.totalorder %s25, 1
      %p111 = por %p109, %p110
      %p112 = scmp.ne.s32.totalorder %s103, %s104
      %p113 = scmp.eq.s32.totalorder %s25, 0
      %p114 = por %p112, %p113
      %p115 = scmp.ne.s32.totalorder %s103, %s104
      %p116 = scmp.eq.s32.totalorder %s26, 1
      %p117 = por %p115, %p116
      %p119 = scmp.ne.s32.totalorder %s104, %s118
      %p120 = scmp.eq.s32.totalorder %s26, 0
      %p121 = por %p119, %p120
      %s122 = ssub.s32 %s20, %s27
      %p123 = scmp.eq.s32.totalorder %s122, 0
      %s125 = sadd.s32 %s124, 1
      %s126 = scalar_select %p123, %s124, %s125
      %p129 = pneg %p123
      %p130 = scmp.eq.s32.totalorder %s20, 1
      %p131 = por %p129, %p130
      %p132 = scmp.ne.s32.totalorder %s124, %s127
      %p133 = scmp.eq.s32.totalorder %s20, 0
      %p134 = por %p132, %p133
      %p135 = scmp.ne.s32.totalorder %s124, %s127
      %p136 = scmp.eq.s32.totalorder %s25, 1
      %p137 = por %p135, %p136
      %p138 = scmp.ne.s32.totalorder %s127, %s128
      %p139 = scmp.eq.s32.totalorder %s25, 0
      %p140 = por %p138, %p139
      %p141 = scmp.ne.s32.totalorder %s127, %s128
      %p142 = scmp.eq.s32.totalorder %s26, 1
      %p143 = por %p141, %p142
      %p145 = scmp.ne.s32.totalorder %s128, %s144
      %p146 = scmp.eq.s32.totalorder %s26, 0
      %p147 = por %p145, %p146
      %p148 = scmp.le.s32.totalorder 1, %s20
      %p149 = scmp.lt.s32.totalorder %s20, 3
      %p150 = pnand %p148, %p149
      %p151 = pneg %p150
      // Predicated region
      $region9: #{tpu_custom_call.1} parent=5 // pred_check
        _
      $region10: #{tpu_custom_call.1} parent=5 // pred_check_branch
        %153 = sbr.rel (%p150) target = $region12
      $region11: #{tpu_custom_call.1} parent=5 // pred_region
        %s154 = ssub.s32 %s20, 1
        // Predicated region
        $region13: #{tpu_custom_call.1} parent=11 // pred_check
          %p155 = pneg %p93
        $region14: #{tpu_custom_call.1} parent=11 // pred_check_branch
          %157 = sbr.rel (%p155) target = $region16
        $region15: #{tpu_custom_call.1} parent=11 // pred_region
          %s159 = ssub.s32 2048, 2048
          %160 = vsyncadd [#allocation6], %s159
          %s161 = sshll.u32 [#allocation7], 4
          %s162 = int_to_ptr.vmem [resolvable:$true] %s161
          %167 = dma.hbm_to_vmem [thread:$0]  %s2, 2048, %s162, [#allocation6], 128, 128, 8
        $region16: #{tpu_custom_call.1} parent=11 // pred_fallthru
          _
        // Predicated region
        $region17: #{tpu_custom_call.1} parent=11 // pred_check
          %p168 = pneg %p114
        $region18: #{tpu_custom_call.1} parent=11 // pred_check_branch
          %170 = sbr.rel (%p168) target = $region20
        $region19: #{tpu_custom_call.1} parent=11 // pred_region
          %s172 = ssub.s32 16, 16
          %173 = vsyncadd [#allocation9], %s172
          %s175 = sshll.u32 [#allocation8], 4
          %s176 = int_to_ptr.vmem [resolvable:$true] %s175
          %178 = dma.hbm_to_vmem [thread:$0]  %s3, 16, %s176, [#allocation9]
        $region20: #{tpu_custom_call.1} parent=11 // pred_fallthru
          _
      $region12: #{tpu_custom_call.1} parent=5 // pred_fallthru
        _
      %p179 = scmp.lt.s32.totalorder %s20, 2
      // Predicated region
      $region21: #{tpu_custom_call.1} parent=5 // pred_check
        %p180 = pneg %p179
      $region22: #{tpu_custom_call.1} parent=5 // pred_check_branch
        %182 = sbr.rel (%p180) target = $region24
      $region23: #{tpu_custom_call.1} parent=5 // pred_region
        // Predicated region
        $region25: #{tpu_custom_call.1} parent=23 // pred_check
          %p183 = pneg %p40
        $region26: #{tpu_custom_call.1} parent=23 // pred_check_branch
          %185 = sbr.rel (%p183) target = $region28
        $region27: #{tpu_custom_call.1} parent=23 // pred_region
          %s186 = sand.u32 %s30, 1
          %s187 = scalar_lea.sflag [#allocation3], %s186
          %s188 = sand.u32 %s30, 1
          %s189 = smul.addr %s188, 512
          %s190 = scalar_lea.vmem [#allocation2], %s189
          %s192 = ssub.s32 8192, 8192
          %193 = vsyncadd %s187, %s192
          %s194 = smul.addr %s20, 64
          %s195 = smul.addr %s194, 128
          %s196 = scalar_lea.hbm %s0, %s195
          %s197 = sshll.u32 %s190, 4
          %s198 = int_to_ptr.vmem [resolvable:$true] %s197
          %203 = dma.hbm_to_vmem [thread:$0]  %s196, 8192, %s198, %s187, 128, 128, 8
        $region28: #{tpu_custom_call.1} parent=23 // pred_fallthru
          _
        // Predicated region
        $region29: #{tpu_custom_call.1} parent=23 // pred_check
          %p204 = pneg %p66
        $region30: #{tpu_custom_call.1} parent=23 // pred_check_branch
          %206 = sbr.rel (%p204) target = $region32
        $region31: #{tpu_custom_call.1} parent=23 // pred_region
          %s207 = sand.u32 %s20, 1
          %s208 = scalar_lea.sflag [#allocation6], %s207
          %s209 = sand.u32 %s56, 1
          %s210 = smul.addr %s209, 2048
          %s211 = scalar_lea.vmem [#allocation5], %s210
          %s213 = ssub.s32 32768, 32768
          %214 = vsyncadd %s208, %s213
          %s215 = smul.addr %s20, 256
          %s216 = smul.addr %s215, 128
          %s217 = scalar_lea.hbm %s1, %s216
          %s218 = sshll.u32 %s211, 4
          %s219 = int_to_ptr.vmem [resolvable:$true] %s218
          %224 = dma.hbm_to_vmem [thread:$0]  %s217, 32768, %s219, %s208, 128, 128, 8
        $region32: #{tpu_custom_call.1} parent=23 // pred_fallthru
          _
      $region24: #{tpu_custom_call.1} parent=5 // pred_fallthru
        _
      %p225 = scmp.le.s32.totalorder 1, %s20
      %p226 = scmp.lt.s32.totalorder %s20, 3
      %p227 = pnand %p225, %p226
      %p228 = pneg %p227
      // Predicated region
      $region33: #{tpu_custom_call.1} parent=5 // pred_check
        _
      $region34: #{tpu_custom_call.1} parent=5 // pred_check_branch
        %230 = sbr.rel (%p227) target = $region36
      $region35: #{tpu_custom_call.1} parent=5 // pred_region
        %s231 = ssub.s32 %s20, 1
        %s232 = sand.u32 %s33, 1
        %s233 = scalar_lea.sflag [#allocation3], %s232
        %s234 = sand.u32 %s33, 1
        %s235 = smul.addr %s234, 512
        %s236 = scalar_lea.vmem [#allocation2], %s235
        // Predicated region
        $region37: #{tpu_custom_call.1} parent=35 // pred_check
          %p237 = pneg %p46
        $region38: #{tpu_custom_call.1} parent=35 // pred_check_branch
          %239 = sbr.rel (%p237) target = $region40
        $region39: #{tpu_custom_call.1} parent=35 // pred_region
          %240 = dma.done %s233, 8192
        $region40: #{tpu_custom_call.1} parent=35 // pred_fallthru
          _
        %s241 = sand.u32 %s25, 1
        %s242 = scalar_lea.sflag [#allocation6], %s241
        %s243 = sand.u32 %s59, 1
        %s244 = smul.addr %s243, 2048
        %s245 = scalar_lea.vmem [#allocation5], %s244
        // Predicated region
        $region41: #{tpu_custom_call.1} parent=35 // pred_check
          %p246 = pneg %p72
        $region42: #{tpu_custom_call.1} parent=35 // pred_check_branch
          %248 = sbr.rel (%p246) target = $region44
        $region43: #{tpu_custom_call.1} parent=35 // pred_region
          %249 = dma.done %s242, 32768
        $region44: #{tpu_custom_call.1} parent=35 // pred_fallthru
          _
        // Predicated region
        $region45: #{tpu_custom_call.1} parent=35 // pred_check
          %p250 = pneg %p93
        $region46: #{tpu_custom_call.1} parent=35 // pred_check_branch
          %252 = sbr.rel (%p250) target = $region48
        $region47: #{tpu_custom_call.1} parent=35 // pred_region
          %253 = dma.done [#allocation6], 2048
        $region48: #{tpu_custom_call.1} parent=35 // pred_fallthru
          _
        // Predicated region
        $region49: #{tpu_custom_call.1} parent=35 // pred_check
          %p254 = pneg %p114
        $region50: #{tpu_custom_call.1} parent=35 // pred_check_branch
          %256 = sbr.rel (%p254) target = $region52
        $region51: #{tpu_custom_call.1} parent=35 // pred_region
          %257 = dma.done [#allocation9], 16
        $region52: #{tpu_custom_call.1} parent=35 // pred_fallthru
          _
        %s258 = sand.u32 %s33, 1
        %s259 = scalar_lea.sflag [#allocation3], %s258
        %s260 = sand.u32 %s33, 1
        %s261 = smul.addr %s260, 512
        %s262 = scalar_lea.vmem [#allocation2], %s261
        %p263 = pneg %p46
        %p264 = pneg %p43
        %s265 = sand.u32 %s25, 1
        %s266 = scalar_lea.sflag [#allocation6], %s265
        %s267 = sand.u32 %s59, 1
        %s268 = smul.addr %s267, 2048
        %s269 = scalar_lea.vmem [#allocation5], %s268
        %p270 = pneg %p72
        %p271 = pneg %p69
        %p272 = pneg %p93
        %p273 = pneg %p90
        %p274 = pneg %p114
        %p275 = pneg %p111
        %p276 = pneg %p140
        %p277 = pneg %p137
        %s278 = sand.u32 %s127, 1
        %s279 = scalar_lea.sflag [#allocation4], %s278
        %s280 = sand.u32 %s127, 1
        %s281 = smul.addr %s280, 648
        %s282 = scalar_lea.vmem [#allocation10], %s281
        loop: start=0, step=1, limit=9
        $region53: #{tpu_custom_call.1} parent=35 // loop_pre_header
          _
        $region54: #{tpu_custom_call.1} parent=35 // loop_header
          %s284 = sphi 0, %s288
          %p285 = scmp.ge.s32.totalorder %s284, 9
        $region55: #{tpu_custom_call.1} parent=35 // loop_header_branch
          %287 = sbr.rel (%p285) target = $region59
        $region56: #{tpu_custom_call.1} parent=35 // loop_body
          %s289 = smul.u32 %s284, 128
          %s290 = scalar_lea.vmem %s245, %s289 [#allocation5]
          %v291 = vld [vmem:[%s290] sm:$0xff]
          %v292 = vld [vmem:[%s290 + $0x8] sm:$0xff]
          %v293 = vld [vmem:[%s290 + $0x10] sm:$0xff]
          %v294 = vld [vmem:[%s290 + $0x18] sm:$0xff]
          %v295 = vld [vmem:[%s290 + $0x20] sm:$0xff]
          %v296 = vld [vmem:[%s290 + $0x28] sm:$0xff]
          %v297 = vld [vmem:[%s290 + $0x30] sm:$0xff]
          %v298 = vld [vmem:[%s290 + $0x38] sm:$0xff]
          %v299 = vld [vmem:[%s290 + $0x40] sm:$0xff]
          %v300 = vld [vmem:[%s290 + $0x48] sm:$0xff]
          %v301 = vld [vmem:[%s290 + $0x50] sm:$0xff]
          %v302 = vld [vmem:[%s290 + $0x58] sm:$0xff]
          %v303 = vld [vmem:[%s290 + $0x60] sm:$0xff]
          %v304 = vld [vmem:[%s290 + $0x68] sm:$0xff]
          %v305 = vld [vmem:[%s290 + $0x70] sm:$0xff]
          %v306 = vld [vmem:[%s290 + $0x78] sm:$0xff]
          %v307 = vld [vmem:[%s236] sm:$0xff]
          %v308 = vmul.f32 %v307, %v291
          %v309 = vmul.f32 %v307, %v292
          %v310 = vmul.f32 %v307, %v293
          %v311 = vmul.f32 %v307, %v294
          %v312 = vmul.f32 %v307, %v295
          %v313 = vmul.f32 %v307, %v296
          %v314 = vmul.f32 %v307, %v297
          %v315 = vmul.f32 %v307, %v298
          %v316 = vmul.f32 %v307, %v299
          %v317 = vadd.f32 %v308, 0.0
          %v318 = vadd.f32 %v309, 0.0
          %v319 = vadd.f32 %v310, 0.0
          %v320 = vadd.f32 %v311, 0.0
          %v321 = vadd.f32 %v312, 0.0
          %v322 = vadd.f32 %v313, 0.0
          %v323 = vadd.f32 %v314, 0.0
          %v324 = vadd.f32 %v315, 0.0
          %v325 = vadd.f32 %v316, 0.0
          %s326 = scalar_lea.vmem %s236, 8 [#allocation2]
          %v327 = vld [vmem:[%s326] sm:$0xff]
          %v328 = vmul.f32 %v327, %v292
          %v329 = vmul.f32 %v327, %v293
          %v330 = vmul.f32 %v327, %v294
          %v331 = vmul.f32 %v327, %v295
          %v332 = vmul.f32 %v327, %v296
          %v333 = vmul.f32 %v327, %v297
          %v334 = vmul.f32 %v327, %v298
          %v335 = vmul.f32 %v327, %v299
          %v336 = vmul.f32 %v327, %v300
          %v337 = vadd.f32 %v317, %v328
          %v338 = vadd.f32 %v318, %v329
          %v339 = vadd.f32 %v319, %v330
          %v340 = vadd.f32 %v320, %v331
          %v341 = vadd.f32 %v321, %v332
          %v342 = vadd.f32 %v322, %v333
          %v343 = vadd.f32 %v323, %v334
          %v344 = vadd.f32 %v324, %v335
          %v345 = vadd.f32 %v325, %v336
          %s346 = scalar_lea.vmem %s236, 16 [#allocation2]
          %v347 = vld [vmem:[%s346] sm:$0xff]
          %v348 = vmul.f32 %v347, %v293
          %v349 = vmul.f32 %v347, %v294
          %v350 = vmul.f32 %v347, %v295
          %v351 = vmul.f32 %v347, %v296
          %v352 = vmul.f32 %v347, %v297
          %v353 = vmul.f32 %v347, %v298
          %v354 = vmul.f32 %v347, %v299
          %v355 = vmul.f32 %v347, %v300
          %v356 = vmul.f32 %v347, %v301
          %v357 = vadd.f32 %v337, %v348
          %v358 = vadd.f32 %v338, %v349
          %v359 = vadd.f32 %v339, %v350
          %v360 = vadd.f32 %v340, %v351
          %v361 = vadd.f32 %v341, %v352
          %v362 = vadd.f32 %v342, %v353
          %v363 = vadd.f32 %v343, %v354
          %v364 = vadd.f32 %v344, %v355
          %v365 = vadd.f32 %v345, %v356
          %s366 = scalar_lea.vmem %s236, 24 [#allocation2]
          %v367 = vld [vmem:[%s366] sm:$0xff]
          %v368 = vmul.f32 %v367, %v294
          %v369 = vmul.f32 %v367, %v295
          %v370 = vmul.f32 %v367, %v296
          %v371 = vmul.f32 %v367, %v297
          %v372 = vmul.f32 %v367, %v298
          %v373 = vmul.f32 %v367, %v299
          %v374 = vmul.f32 %v367, %v300
          %v375 = vmul.f32 %v367, %v301
          %v376 = vmul.f32 %v367, %v302
          %v377 = vadd.f32 %v357, %v368
          %v378 = vadd.f32 %v358, %v369
          %v379 = vadd.f32 %v359, %v370
          %v380 = vadd.f32 %v360, %v371
          %v381 = vadd.f32 %v361, %v372
          %v382 = vadd.f32 %v362, %v373
          %v383 = vadd.f32 %v363, %v374
          %v384 = vadd.f32 %v364, %v375
          %v385 = vadd.f32 %v365, %v376
          %s386 = scalar_lea.vmem %s236, 32 [#allocation2]
          %v387 = vld [vmem:[%s386] sm:$0xff]
          %v388 = vmul.f32 %v387, %v295
          %v389 = vmul.f32 %v387, %v296
          %v390 = vmul.f32 %v387, %v297
          %v391 = vmul.f32 %v387, %v298
          %v392 = vmul.f32 %v387, %v299
          %v393 = vmul.f32 %v387, %v300
          %v394 = vmul.f32 %v387, %v301
          %v395 = vmul.f32 %v387, %v302
          %v396 = vmul.f32 %v387, %v303
          %v397 = vadd.f32 %v377, %v388
          %v398 = vadd.f32 %v378, %v389
          %v399 = vadd.f32 %v379, %v390
          %v400 = vadd.f32 %v380, %v391
          %v401 = vadd.f32 %v381, %v392
          %v402 = vadd.f32 %v382, %v393
          %v403 = vadd.f32 %v383, %v394
          %v404 = vadd.f32 %v384, %v395
          %v405 = vadd.f32 %v385, %v396
          %s406 = scalar_lea.vmem %s236, 40 [#allocation2]
          %v407 = vld [vmem:[%s406] sm:$0xff]
          %v408 = vmul.f32 %v407, %v296
          %v409 = vmul.f32 %v407, %v297
          %v410 = vmul.f32 %v407, %v298
          %v411 = vmul.f32 %v407, %v299
          %v412 = vmul.f32 %v407, %v300
          %v413 = vmul.f32 %v407, %v301
          %v414 = vmul.f32 %v407, %v302
          %v415 = vmul.f32 %v407, %v303
          %v416 = vmul.f32 %v407, %v304
          %v417 = vadd.f32 %v397, %v408
          %v418 = vadd.f32 %v398, %v409
          %v419 = vadd.f32 %v399, %v410
          %v420 = vadd.f32 %v400, %v411
          %v421 = vadd.f32 %v401, %v412
          %v422 = vadd.f32 %v402, %v413
          %v423 = vadd.f32 %v403, %v414
          %v424 = vadd.f32 %v404, %v415
          %v425 = vadd.f32 %v405, %v416
          %s426 = scalar_lea.vmem %s236, 48 [#allocation2]
          %v427 = vld [vmem:[%s426] sm:$0xff]
          %v428 = vmul.f32 %v427, %v297
          %v429 = vmul.f32 %v427, %v298
          %v430 = vmul.f32 %v427, %v299
          %v431 = vmul.f32 %v427, %v300
          %v432 = vmul.f32 %v427, %v301
          %v433 = vmul.f32 %v427, %v302
          %v434 = vmul.f32 %v427, %v303
          %v435 = vmul.f32 %v427, %v304
          %v436 = vmul.f32 %v427, %v305
          %v437 = vadd.f32 %v417, %v428
          %v438 = vadd.f32 %v418, %v429
          %v439 = vadd.f32 %v419, %v430
          %v440 = vadd.f32 %v420, %v431
          %v441 = vadd.f32 %v421, %v432
          %v442 = vadd.f32 %v422, %v433
          %v443 = vadd.f32 %v423, %v434
          %v444 = vadd.f32 %v424, %v435
          %v445 = vadd.f32 %v425, %v436
          %s446 = scalar_lea.vmem %s236, 56 [#allocation2]
          %v447 = vld [vmem:[%s446] sm:$0xff]
          %v448 = vmul.f32 %v447, %v298
          %v449 = vmul.f32 %v447, %v299
          %v450 = vmul.f32 %v447, %v300
          %v451 = vmul.f32 %v447, %v301
          %v452 = vmul.f32 %v447, %v302
          %v453 = vmul.f32 %v447, %v303
          %v454 = vmul.f32 %v447, %v304
          %v455 = vmul.f32 %v447, %v305
          %v456 = vmul.f32 %v447, %v306
          %v457 = vadd.f32 %v437, %v448
          %v458 = vadd.f32 %v438, %v449
          %v459 = vadd.f32 %v439, %v450
          %v460 = vadd.f32 %v440, %v451
          %v461 = vadd.f32 %v441, %v452
          %v462 = vadd.f32 %v442, %v453
          %v463 = vadd.f32 %v443, %v454
          %v464 = vadd.f32 %v444, %v455
          %v465 = vadd.f32 %v445, %v456
          %s466 = sadd.s32 %s284, 1
          %s467 = smul.u32 %s466, 128
          %s468 = scalar_lea.vmem %s245, %s467 [#allocation5]
          %v469 = vld [vmem:[%s468] sm:$0xff]
          %v470 = vld [vmem:[%s468 + $0x8] sm:$0xff]
          %v471 = vld [vmem:[%s468 + $0x10] sm:$0xff]
          %v472 = vld [vmem:[%s468 + $0x18] sm:$0xff]
          %v473 = vld [vmem:[%s468 + $0x20] sm:$0xff]
          %v474 = vld [vmem:[%s468 + $0x28] sm:$0xff]
          %v475 = vld [vmem:[%s468 + $0x30] sm:$0xff]
          %v476 = vld [vmem:[%s468 + $0x38] sm:$0xff]
          %v477 = vld [vmem:[%s468 + $0x40] sm:$0xff]
          %v478 = vld [vmem:[%s468 + $0x48] sm:$0xff]
          %v479 = vld [vmem:[%s468 + $0x50] sm:$0xff]
          %v480 = vld [vmem:[%s468 + $0x58] sm:$0xff]
          %v481 = vld [vmem:[%s468 + $0x60] sm:$0xff]
          %v482 = vld [vmem:[%s468 + $0x68] sm:$0xff]
          %v483 = vld [vmem:[%s468 + $0x70] sm:$0xff]
          %v484 = vld [vmem:[%s468 + $0x78] sm:$0xff]
          %s485 = scalar_lea.vmem %s236, 64 [#allocation2]
          %v486 = vld [vmem:[%s485] sm:$0xff]
          %v487 = vmul.f32 %v486, %v469
          %v488 = vmul.f32 %v486, %v470
          %v489 = vmul.f32 %v486, %v471
          %v490 = vmul.f32 %v486, %v472
          %v491 = vmul.f32 %v486, %v473
          %v492 = vmul.f32 %v486, %v474
          %v493 = vmul.f32 %v486, %v475
          %v494 = vmul.f32 %v486, %v476
          %v495 = vmul.f32 %v486, %v477
          %v496 = vadd.f32 %v457, %v487
          %v497 = vadd.f32 %v458, %v488
          %v498 = vadd.f32 %v459, %v489
          %v499 = vadd.f32 %v460, %v490
          %v500 = vadd.f32 %v461, %v491
          %v501 = vadd.f32 %v462, %v492
          %v502 = vadd.f32 %v463, %v493
          %v503 = vadd.f32 %v464, %v494
          %v504 = vadd.f32 %v465, %v495
          %s505 = scalar_lea.vmem %s236, 72 [#allocation2]
          %v506 = vld [vmem:[%s505] sm:$0xff]
          %v507 = vmul.f32 %v506, %v470
          %v508 = vmul.f32 %v506, %v471
          %v509 = vmul.f32 %v506, %v472
          %v510 = vmul.f32 %v506, %v473
          %v511 = vmul.f32 %v506, %v474
          %v512 = vmul.f32 %v506, %v475
          %v513 = vmul.f32 %v506, %v476
          %v514 = vmul.f32 %v506, %v477
          %v515 = vmul.f32 %v506, %v478
          %v516 = vadd.f32 %v496, %v507
          %v517 = vadd.f32 %v497, %v508
          %v518 = vadd.f32 %v498, %v509
          %v519 = vadd.f32 %v499, %v510
          %v520 = vadd.f32 %v500, %v511
          %v521 = vadd.f32 %v501, %v512
          %v522 = vadd.f32 %v502, %v513
          %v523 = vadd.f32 %v503, %v514
          %v524 = vadd.f32 %v504, %v515
          %s525 = scalar_lea.vmem %s236, 80 [#allocation2]
          %v526 = vld [vmem:[%s525] sm:$0xff]
          %v527 = vmul.f32 %v526, %v471
          %v528 = vmul.f32 %v526, %v472
          %v529 = vmul.f32 %v526, %v473
          %v530 = vmul.f32 %v526, %v474
          %v531 = vmul.f32 %v526, %v475
          %v532 = vmul.f32 %v526, %v476
          %v533 = vmul.f32 %v526, %v477
          %v534 = vmul.f32 %v526, %v478
          %v535 = vmul.f32 %v526, %v479
          %v536 = vadd.f32 %v516, %v527
          %v537 = vadd.f32 %v517, %v528
          %v538 = vadd.f32 %v518, %v529
          %v539 = vadd.f32 %v519, %v530
          %v540 = vadd.f32 %v520, %v531
          %v541 = vadd.f32 %v521, %v532
          %v542 = vadd.f32 %v522, %v533
          %v543 = vadd.f32 %v523, %v534
          %v544 = vadd.f32 %v524, %v535
          %s545 = scalar_lea.vmem %s236, 88 [#allocation2]
          %v546 = vld [vmem:[%s545] sm:$0xff]
          %v547 = vmul.f32 %v546, %v472
          %v548 = vmul.f32 %v546, %v473
          %v549 = vmul.f32 %v546, %v474
          %v550 = vmul.f32 %v546, %v475
          %v551 = vmul.f32 %v546, %v476
          %v552 = vmul.f32 %v546, %v477
          %v553 = vmul.f32 %v546, %v478
          %v554 = vmul.f32 %v546, %v479
          %v555 = vmul.f32 %v546, %v480
          %v556 = vadd.f32 %v536, %v547
          %v557 = vadd.f32 %v537, %v548
          %v558 = vadd.f32 %v538, %v549
          %v559 = vadd.f32 %v539, %v550
          %v560 = vadd.f32 %v540, %v551
          %v561 = vadd.f32 %v541, %v552
          %v562 = vadd.f32 %v542, %v553
          %v563 = vadd.f32 %v543, %v554
          %v564 = vadd.f32 %v544, %v555
          %s565 = scalar_lea.vmem %s236, 96 [#allocation2]
          %v566 = vld [vmem:[%s565] sm:$0xff]
          %v567 = vmul.f32 %v566, %v473
          %v568 = vmul.f32 %v566, %v474
          %v569 = vmul.f32 %v566, %v475
          %v570 = vmul.f32 %v566, %v476
          %v571 = vmul.f32 %v566, %v477
          %v572 = vmul.f32 %v566, %v478
          %v573 = vmul.f32 %v566, %v479
          %v574 = vmul.f32 %v566, %v480
          %v575 = vmul.f32 %v566, %v481
          %v576 = vadd.f32 %v556, %v567
          %v577 = vadd.f32 %v557, %v568
          %v578 = vadd.f32 %v558, %v569
          %v579 = vadd.f32 %v559, %v570
          %v580 = vadd.f32 %v560, %v571
          %v581 = vadd.f32 %v561, %v572
          %v582 = vadd.f32 %v562, %v573
          %v583 = vadd.f32 %v563, %v574
          %v584 = vadd.f32 %v564, %v575
          %s585 = scalar_lea.vmem %s236, 104 [#allocation2]
          %v586 = vld [vmem:[%s585] sm:$0xff]
          %v587 = vmul.f32 %v586, %v474
          %v588 = vmul.f32 %v586, %v475
          %v589 = vmul.f32 %v586, %v476
          %v590 = vmul.f32 %v586, %v477
          %v591 = vmul.f32 %v586, %v478
          %v592 = vmul.f32 %v586, %v479
          %v593 = vmul.f32 %v586, %v480
          %v594 = vmul.f32 %v586, %v481
          %v595 = vmul.f32 %v586, %v482
          %v596 = vadd.f32 %v576, %v587
          %v597 = vadd.f32 %v577, %v588
          %v598 = vadd.f32 %v578, %v589
          %v599 = vadd.f32 %v579, %v590
          %v600 = vadd.f32 %v580, %v591
          %v601 = vadd.f32 %v581, %v592
          %v602 = vadd.f32 %v582, %v593
          %v603 = vadd.f32 %v583, %v594
          %v604 = vadd.f32 %v584, %v595
          %s605 = scalar_lea.vmem %s236, 112 [#allocation2]
          %v606 = vld [vmem:[%s605] sm:$0xff]
          %v607 = vmul.f32 %v606, %v475
          %v608 = vmul.f32 %v606, %v476
          %v609 = vmul.f32 %v606, %v477
          %v610 = vmul.f32 %v606, %v478
          %v611 = vmul.f32 %v606, %v479
          %v612 = vmul.f32 %v606, %v480
          %v613 = vmul.f32 %v606, %v481
          %v614 = vmul.f32 %v606, %v482
          %v615 = vmul.f32 %v606, %v483
          %v616 = vadd.f32 %v596, %v607
          %v617 = vadd.f32 %v597, %v608
          %v618 = vadd.f32 %v598, %v609
          %v619 = vadd.f32 %v599, %v610
          %v620 = vadd.f32 %v600, %v611
          %v621 = vadd.f32 %v601, %v612
          %v622 = vadd.f32 %v602, %v613
          %v623 = vadd.f32 %v603, %v614
          %v624 = vadd.f32 %v604, %v615
          %s625 = scalar_lea.vmem %s236, 120 [#allocation2]
          %v626 = vld [vmem:[%s625] sm:$0xff]
          %v627 = vmul.f32 %v626, %v476
          %v628 = vmul.f32 %v626, %v477
          %v629 = vmul.f32 %v626, %v478
          %v630 = vmul.f32 %v626, %v479
          %v631 = vmul.f32 %v626, %v480
          %v632 = vmul.f32 %v626, %v481
          %v633 = vmul.f32 %v626, %v482
          %v634 = vmul.f32 %v626, %v483
          %v635 = vmul.f32 %v626, %v484
          %v636 = vadd.f32 %v616, %v627
          %v637 = vadd.f32 %v617, %v628
          %v638 = vadd.f32 %v618, %v629
          %v639 = vadd.f32 %v619, %v630
          %v640 = vadd.f32 %v620, %v631
          %v641 = vadd.f32 %v621, %v632
          %v642 = vadd.f32 %v622, %v633
          %v643 = vadd.f32 %v623, %v634
          %v644 = vadd.f32 %v624, %v635
          %s645 = sadd.s32 %s284, 2
          %s646 = smul.u32 %s645, 128
          %s647 = scalar_lea.vmem %s245, %s646 [#allocation5]
          %v648 = vld [vmem:[%s647] sm:$0xff]
          %v649 = vld [vmem:[%s647 + $0x8] sm:$0xff]
          %v650 = vld [vmem:[%s647 + $0x10] sm:$0xff]
          %v651 = vld [vmem:[%s647 + $0x18] sm:$0xff]
          %v652 = vld [vmem:[%s647 + $0x20] sm:$0xff]
          %v653 = vld [vmem:[%s647 + $0x28] sm:$0xff]
          %v654 = vld [vmem:[%s647 + $0x30] sm:$0xff]
          %v655 = vld [vmem:[%s647 + $0x38] sm:$0xff]
          %v656 = vld [vmem:[%s647 + $0x40] sm:$0xff]
          %v657 = vld [vmem:[%s647 + $0x48] sm:$0xff]
          %v658 = vld [vmem:[%s647 + $0x50] sm:$0xff]
          %v659 = vld [vmem:[%s647 + $0x58] sm:$0xff]
          %v660 = vld [vmem:[%s647 + $0x60] sm:$0xff]
          %v661 = vld [vmem:[%s647 + $0x68] sm:$0xff]
          %v662 = vld [vmem:[%s647 + $0x70] sm:$0xff]
          %v663 = vld [vmem:[%s647 + $0x78] sm:$0xff]
          %s664 = scalar_lea.vmem %s236, 128 [#allocation2]
          %v665 = vld [vmem:[%s664] sm:$0xff]
          %v666 = vmul.f32 %v665, %v648
          %v667 = vmul.f32 %v665, %v649
          %v668 = vmul.f32 %v665, %v650
          %v669 = vmul.f32 %v665, %v651
          %v670 = vmul.f32 %v665, %v652
          %v671 = vmul.f32 %v665, %v653
          %v672 = vmul.f32 %v665, %v654
          %v673 = vmul.f32 %v665, %v655
          %v674 = vmul.f32 %v665, %v656
          %v675 = vadd.f32 %v636, %v666
          %v676 = vadd.f32 %v637, %v667
          %v677 = vadd.f32 %v638, %v668
          %v678 = vadd.f32 %v639, %v669
          %v679 = vadd.f32 %v640, %v670
          %v680 = vadd.f32 %v641, %v671
          %v681 = vadd.f32 %v642, %v672
          %v682 = vadd.f32 %v643, %v673
          %v683 = vadd.f32 %v644, %v674
          %s684 = scalar_lea.vmem %s236, 136 [#allocation2]
          %v685 = vld [vmem:[%s684] sm:$0xff]
          %v686 = vmul.f32 %v685, %v649
          %v687 = vmul.f32 %v685, %v650
          %v688 = vmul.f32 %v685, %v651
          %v689 = vmul.f32 %v685, %v652
          %v690 = vmul.f32 %v685, %v653
          %v691 = vmul.f32 %v685, %v654
          %v692 = vmul.f32 %v685, %v655
          %v693 = vmul.f32 %v685, %v656
          %v694 = vmul.f32 %v685, %v657
          %v695 = vadd.f32 %v675, %v686
          %v696 = vadd.f32 %v676, %v687
          %v697 = vadd.f32 %v677, %v688
          %v698 = vadd.f32 %v678, %v689
          %v699 = vadd.f32 %v679, %v690
          %v700 = vadd.f32 %v680, %v691
          %v701 = vadd.f32 %v681, %v692
          %v702 = vadd.f32 %v682, %v693
          %v703 = vadd.f32 %v683, %v694
          %s704 = scalar_lea.vmem %s236, 144 [#allocation2]
          %v705 = vld [vmem:[%s704] sm:$0xff]
          %v706 = vmul.f32 %v705, %v650
          %v707 = vmul.f32 %v705, %v651
          %v708 = vmul.f32 %v705, %v652
          %v709 = vmul.f32 %v705, %v653
          %v710 = vmul.f32 %v705, %v654
          %v711 = vmul.f32 %v705, %v655
          %v712 = vmul.f32 %v705, %v656
          %v713 = vmul.f32 %v705, %v657
          %v714 = vmul.f32 %v705, %v658
          %v715 = vadd.f32 %v695, %v706
          %v716 = vadd.f32 %v696, %v707
          %v717 = vadd.f32 %v697, %v708
          %v718 = vadd.f32 %v698, %v709
          %v719 = vadd.f32 %v699, %v710
          %v720 = vadd.f32 %v700, %v711
          %v721 = vadd.f32 %v701, %v712
          %v722 = vadd.f32 %v702, %v713
          %v723 = vadd.f32 %v703, %v714
          %s724 = scalar_lea.vmem %s236, 152 [#allocation2]
          %v725 = vld [vmem:[%s724] sm:$0xff]
          %v726 = vmul.f32 %v725, %v651
          %v727 = vmul.f32 %v725, %v652
          %v728 = vmul.f32 %v725, %v653
          %v729 = vmul.f32 %v725, %v654
          %v730 = vmul.f32 %v725, %v655
          %v731 = vmul.f32 %v725, %v656
          %v732 = vmul.f32 %v725, %v657
          %v733 = vmul.f32 %v725, %v658
          %v734 = vmul.f32 %v725, %v659
          %v735 = vadd.f32 %v715, %v726
          %v736 = vadd.f32 %v716, %v727
          %v737 = vadd.f32 %v717, %v728
          %v738 = vadd.f32 %v718, %v729
          %v739 = vadd.f32 %v719, %v730
          %v740 = vadd.f32 %v720, %v731
          %v741 = vadd.f32 %v721, %v732
          %v742 = vadd.f32 %v722, %v733
          %v743 = vadd.f32 %v723, %v734
          %s744 = scalar_lea.vmem %s236, 160 [#allocation2]
          %v745 = vld [vmem:[%s744] sm:$0xff]
          %v746 = vmul.f32 %v745, %v652
          %v747 = vmul.f32 %v745, %v653
          %v748 = vmul.f32 %v745, %v654
          %v749 = vmul.f32 %v745, %v655
          %v750 = vmul.f32 %v745, %v656
          %v751 = vmul.f32 %v745, %v657
          %v752 = vmul.f32 %v745, %v658
          %v753 = vmul.f32 %v745, %v659
          %v754 = vmul.f32 %v745, %v660
          %v755 = vadd.f32 %v735, %v746
          %v756 = vadd.f32 %v736, %v747
          %v757 = vadd.f32 %v737, %v748
          %v758 = vadd.f32 %v738, %v749
          %v759 = vadd.f32 %v739, %v750
          %v760 = vadd.f32 %v740, %v751
          %v761 = vadd.f32 %v741, %v752
          %v762 = vadd.f32 %v742, %v753
          %v763 = vadd.f32 %v743, %v754
          %s764 = scalar_lea.vmem %s236, 168 [#allocation2]
          %v765 = vld [vmem:[%s764] sm:$0xff]
          %v766 = vmul.f32 %v765, %v653
          %v767 = vmul.f32 %v765, %v654
          %v768 = vmul.f32 %v765, %v655
          %v769 = vmul.f32 %v765, %v656
          %v770 = vmul.f32 %v765, %v657
          %v771 = vmul.f32 %v765, %v658
          %v772 = vmul.f32 %v765, %v659
          %v773 = vmul.f32 %v765, %v660
          %v774 = vmul.f32 %v765, %v661
          %v775 = vadd.f32 %v755, %v766
          %v776 = vadd.f32 %v756, %v767
          %v777 = vadd.f32 %v757, %v768
          %v778 = vadd.f32 %v758, %v769
          %v779 = vadd.f32 %v759, %v770
          %v780 = vadd.f32 %v760, %v771
          %v781 = vadd.f32 %v761, %v772
          %v782 = vadd.f32 %v762, %v773
          %v783 = vadd.f32 %v763, %v774
          %s784 = scalar_lea.vmem %s236, 176 [#allocation2]
          %v785 = vld [vmem:[%s784] sm:$0xff]
          %v786 = vmul.f32 %v785, %v654
          %v787 = vmul.f32 %v785, %v655
          %v788 = vmul.f32 %v785, %v656
          %v789 = vmul.f32 %v785, %v657
          %v790 = vmul.f32 %v785, %v658
          %v791 = vmul.f32 %v785, %v659
          %v792 = vmul.f32 %v785, %v660
          %v793 = vmul.f32 %v785, %v661
          %v794 = vmul.f32 %v785, %v662
          %v795 = vadd.f32 %v775, %v786
          %v796 = vadd.f32 %v776, %v787
          %v797 = vadd.f32 %v777, %v788
          %v798 = vadd.f32 %v778, %v789
          %v799 = vadd.f32 %v779, %v790
          %v800 = vadd.f32 %v780, %v791
          %v801 = vadd.f32 %v781, %v792
          %v802 = vadd.f32 %v782, %v793
          %v803 = vadd.f32 %v783, %v794
          %s804 = scalar_lea.vmem %s236, 184 [#allocation2]
          %v805 = vld [vmem:[%s804] sm:$0xff]
          %v806 = vmul.f32 %v805, %v655
          %v807 = vmul.f32 %v805, %v656
          %v808 = vmul.f32 %v805, %v657
          %v809 = vmul.f32 %v805, %v658
          %v810 = vmul.f32 %v805, %v659
          %v811 = vmul.f32 %v805, %v660
          %v812 = vmul.f32 %v805, %v661
          %v813 = vmul.f32 %v805, %v662
          %v814 = vmul.f32 %v805, %v663
          %v815 = vadd.f32 %v795, %v806
          %v816 = vadd.f32 %v796, %v807
          %v817 = vadd.f32 %v797, %v808
          %v818 = vadd.f32 %v798, %v809
          %v819 = vadd.f32 %v799, %v810
          %v820 = vadd.f32 %v800, %v811
          %v821 = vadd.f32 %v801, %v812
          %v822 = vadd.f32 %v802, %v813
          %v823 = vadd.f32 %v803, %v814
          %s824 = sadd.s32 %s284, 3
          %s825 = smul.u32 %s824, 128
          %s826 = scalar_lea.vmem %s245, %s825 [#allocation5]
          %v827 = vld [vmem:[%s826] sm:$0xff]
          %v828 = vld [vmem:[%s826 + $0x8] sm:$0xff]
          %v829 = vld [vmem:[%s826 + $0x10] sm:$0xff]
          %v830 = vld [vmem:[%s826 + $0x18] sm:$0xff]
          %v831 = vld [vmem:[%s826 + $0x20] sm:$0xff]
          %v832 = vld [vmem:[%s826 + $0x28] sm:$0xff]
          %v833 = vld [vmem:[%s826 + $0x30] sm:$0xff]
          %v834 = vld [vmem:[%s826 + $0x38] sm:$0xff]
          %v835 = vld [vmem:[%s826 + $0x40] sm:$0xff]
          %v836 = vld [vmem:[%s826 + $0x48] sm:$0xff]
          %v837 = vld [vmem:[%s826 + $0x50] sm:$0xff]
          %v838 = vld [vmem:[%s826 + $0x58] sm:$0xff]
          %v839 = vld [vmem:[%s826 + $0x60] sm:$0xff]
          %v840 = vld [vmem:[%s826 + $0x68] sm:$0xff]
          %v841 = vld [vmem:[%s826 + $0x70] sm:$0xff]
          %v842 = vld [vmem:[%s826 + $0x78] sm:$0xff]
          %s843 = scalar_lea.vmem %s236, 192 [#allocation2]
          %v844 = vld [vmem:[%s843] sm:$0xff]
          %v845 = vmul.f32 %v844, %v827
          %v846 = vmul.f32 %v844, %v828
          %v847 = vmul.f32 %v844, %v829
          %v848 = vmul.f32 %v844, %v830
          %v849 = vmul.f32 %v844, %v831
          %v850 = vmul.f32 %v844, %v832
          %v851 = vmul.f32 %v844, %v833
          %v852 = vmul.f32 %v844, %v834
          %v853 = vmul.f32 %v844, %v835
          %v854 = vadd.f32 %v815, %v845
          %v855 = vadd.f32 %v816, %v846
          %v856 = vadd.f32 %v817, %v847
          %v857 = vadd.f32 %v818, %v848
          %v858 = vadd.f32 %v819, %v849
          %v859 = vadd.f32 %v820, %v850
          %v860 = vadd.f32 %v821, %v851
          %v861 = vadd.f32 %v822, %v852
          %v862 = vadd.f32 %v823, %v853
          %s863 = scalar_lea.vmem %s236, 200 [#allocation2]
          %v864 = vld [vmem:[%s863] sm:$0xff]
          %v865 = vmul.f32 %v864, %v828
          %v866 = vmul.f32 %v864, %v829
          %v867 = vmul.f32 %v864, %v830
          %v868 = vmul.f32 %v864, %v831
          %v869 = vmul.f32 %v864, %v832
          %v870 = vmul.f32 %v864, %v833
          %v871 = vmul.f32 %v864, %v834
          %v872 = vmul.f32 %v864, %v835
          %v873 = vmul.f32 %v864, %v836
          %v874 = vadd.f32 %v854, %v865
          %v875 = vadd.f32 %v855, %v866
          %v876 = vadd.f32 %v856, %v867
          %v877 = vadd.f32 %v857, %v868
          %v878 = vadd.f32 %v858, %v869
          %v879 = vadd.f32 %v859, %v870
          %v880 = vadd.f32 %v860, %v871
          %v881 = vadd.f32 %v861, %v872
          %v882 = vadd.f32 %v862, %v873
          %s883 = scalar_lea.vmem %s236, 208 [#allocation2]
          %v884 = vld [vmem:[%s883] sm:$0xff]
          %v885 = vmul.f32 %v884, %v829
          %v886 = vmul.f32 %v884, %v830
          %v887 = vmul.f32 %v884, %v831
          %v888 = vmul.f32 %v884, %v832
          %v889 = vmul.f32 %v884, %v833
          %v890 = vmul.f32 %v884, %v834
          %v891 = vmul.f32 %v884, %v835
          %v892 = vmul.f32 %v884, %v836
          %v893 = vmul.f32 %v884, %v837
          %v894 = vadd.f32 %v874, %v885
          %v895 = vadd.f32 %v875, %v886
          %v896 = vadd.f32 %v876, %v887
          %v897 = vadd.f32 %v877, %v888
          %v898 = vadd.f32 %v878, %v889
          %v899 = vadd.f32 %v879, %v890
          %v900 = vadd.f32 %v880, %v891
          %v901 = vadd.f32 %v881, %v892
          %v902 = vadd.f32 %v882, %v893
          %s903 = scalar_lea.vmem %s236, 216 [#allocation2]
          %v904 = vld [vmem:[%s903] sm:$0xff]
          %v905 = vmul.f32 %v904, %v830
          %v906 = vmul.f32 %v904, %v831
          %v907 = vmul.f32 %v904, %v832
          %v908 = vmul.f32 %v904, %v833
          %v909 = vmul.f32 %v904, %v834
          %v910 = vmul.f32 %v904, %v835
          %v911 = vmul.f32 %v904, %v836
          %v912 = vmul.f32 %v904, %v837
          %v913 = vmul.f32 %v904, %v838
          %v914 = vadd.f32 %v894, %v905
          %v915 = vadd.f32 %v895, %v906
          %v916 = vadd.f32 %v896, %v907
          %v917 = vadd.f32 %v897, %v908
          %v918 = vadd.f32 %v898, %v909
          %v919 = vadd.f32 %v899, %v910
          %v920 = vadd.f32 %v900, %v911
          %v921 = vadd.f32 %v901, %v912
          %v922 = vadd.f32 %v902, %v913
          %s923 = scalar_lea.vmem %s236, 224 [#allocation2]
          %v924 = vld [vmem:[%s923] sm:$0xff]
          %v925 = vmul.f32 %v924, %v831
          %v926 = vmul.f32 %v924, %v832
          %v927 = vmul.f32 %v924, %v833
          %v928 = vmul.f32 %v924, %v834
          %v929 = vmul.f32 %v924, %v835
          %v930 = vmul.f32 %v924, %v836
          %v931 = vmul.f32 %v924, %v837
          %v932 = vmul.f32 %v924, %v838
          %v933 = vmul.f32 %v924, %v839
          %v934 = vadd.f32 %v914, %v925
          %v935 = vadd.f32 %v915, %v926
          %v936 = vadd.f32 %v916, %v927
          %v937 = vadd.f32 %v917, %v928
          %v938 = vadd.f32 %v918, %v929
          %v939 = vadd.f32 %v919, %v930
          %v940 = vadd.f32 %v920, %v931
          %v941 = vadd.f32 %v921, %v932
          %v942 = vadd.f32 %v922, %v933
          %s943 = scalar_lea.vmem %s236, 232 [#allocation2]
          %v944 = vld [vmem:[%s943] sm:$0xff]
          %v945 = vmul.f32 %v944, %v832
          %v946 = vmul.f32 %v944, %v833
          %v947 = vmul.f32 %v944, %v834
          %v948 = vmul.f32 %v944, %v835
          %v949 = vmul.f32 %v944, %v836
          %v950 = vmul.f32 %v944, %v837
          %v951 = vmul.f32 %v944, %v838
          %v952 = vmul.f32 %v944, %v839
          %v953 = vmul.f32 %v944, %v840
          %v954 = vadd.f32 %v934, %v945
          %v955 = vadd.f32 %v935, %v946
          %v956 = vadd.f32 %v936, %v947
          %v957 = vadd.f32 %v937, %v948
          %v958 = vadd.f32 %v938, %v949
          %v959 = vadd.f32 %v939, %v950
          %v960 = vadd.f32 %v940, %v951
          %v961 = vadd.f32 %v941, %v952
          %v962 = vadd.f32 %v942, %v953
          %s963 = scalar_lea.vmem %s236, 240 [#allocation2]
          %v964 = vld [vmem:[%s963] sm:$0xff]
          %v965 = vmul.f32 %v964, %v833
          %v966 = vmul.f32 %v964, %v834
          %v967 = vmul.f32 %v964, %v835
          %v968 = vmul.f32 %v964, %v836
          %v969 = vmul.f32 %v964, %v837
          %v970 = vmul.f32 %v964, %v838
          %v971 = vmul.f32 %v964, %v839
          %v972 = vmul.f32 %v964, %v840
          %v973 = vmul.f32 %v964, %v841
          %v974 = vadd.f32 %v954, %v965
          %v975 = vadd.f32 %v955, %v966
          %v976 = vadd.f32 %v956, %v967
          %v977 = vadd.f32 %v957, %v968
          %v978 = vadd.f32 %v958, %v969
          %v979 = vadd.f32 %v959, %v970
          %v980 = vadd.f32 %v960, %v971
          %v981 = vadd.f32 %v961, %v972
          %v982 = vadd.f32 %v962, %v973
          %s983 = scalar_lea.vmem %s236, 248 [#allocation2]
          %v984 = vld [vmem:[%s983] sm:$0xff]
          %v985 = vmul.f32 %v984, %v834
          %v986 = vmul.f32 %v984, %v835
          %v987 = vmul.f32 %v984, %v836
          %v988 = vmul.f32 %v984, %v837
          %v989 = vmul.f32 %v984, %v838
          %v990 = vmul.f32 %v984, %v839
          %v991 = vmul.f32 %v984, %v840
          %v992 = vmul.f32 %v984, %v841
          %v993 = vmul.f32 %v984, %v842
          %v994 = vadd.f32 %v974, %v985
          %v995 = vadd.f32 %v975, %v986
          %v996 = vadd.f32 %v976, %v987
          %v997 = vadd.f32 %v977, %v988
          %v998 = vadd.f32 %v978, %v989
          %v999 = vadd.f32 %v979, %v990
          %v1000 = vadd.f32 %v980, %v991
          %v1001 = vadd.f32 %v981, %v992
          %v1002 = vadd.f32 %v982, %v993
          %s1003 = sadd.s32 %s284, 4
          %s1004 = smul.u32 %s1003, 128
          %s1005 = scalar_lea.vmem %s245, %s1004 [#allocation5]
          %v1006 = vld [vmem:[%s1005] sm:$0xff]
          %v1007 = vld [vmem:[%s1005 + $0x8] sm:$0xff]
          %v1008 = vld [vmem:[%s1005 + $0x10] sm:$0xff]
          %v1009 = vld [vmem:[%s1005 + $0x18] sm:$0xff]
          %v1010 = vld [vmem:[%s1005 + $0x20] sm:$0xff]
          %v1011 = vld [vmem:[%s1005 + $0x28] sm:$0xff]
          %v1012 = vld [vmem:[%s1005 + $0x30] sm:$0xff]
          %v1013 = vld [vmem:[%s1005 + $0x38] sm:$0xff]
          %v1014 = vld [vmem:[%s1005 + $0x40] sm:$0xff]
          %v1015 = vld [vmem:[%s1005 + $0x48] sm:$0xff]
          %v1016 = vld [vmem:[%s1005 + $0x50] sm:$0xff]
          %v1017 = vld [vmem:[%s1005 + $0x58] sm:$0xff]
          %v1018 = vld [vmem:[%s1005 + $0x60] sm:$0xff]
          %v1019 = vld [vmem:[%s1005 + $0x68] sm:$0xff]
          %v1020 = vld [vmem:[%s1005 + $0x70] sm:$0xff]
          %v1021 = vld [vmem:[%s1005 + $0x78] sm:$0xff]
          %s1022 = scalar_lea.vmem %s236, 256 [#allocation2]
          %v1023 = vld [vmem:[%s1022] sm:$0xff]
          %v1024 = vmul.f32 %v1023, %v1006
          %v1025 = vmul.f32 %v1023, %v1007
          %v1026 = vmul.f32 %v1023, %v1008
          %v1027 = vmul.f32 %v1023, %v1009
          %v1028 = vmul.f32 %v1023, %v1010
          %v1029 = vmul.f32 %v1023, %v1011
          %v1030 = vmul.f32 %v1023, %v1012
          %v1031 = vmul.f32 %v1023, %v1013
          %v1032 = vmul.f32 %v1023, %v1014
          %v1033 = vadd.f32 %v994, %v1024
          %v1034 = vadd.f32 %v995, %v1025
          %v1035 = vadd.f32 %v996, %v1026
          %v1036 = vadd.f32 %v997, %v1027
          %v1037 = vadd.f32 %v998, %v1028
          %v1038 = vadd.f32 %v999, %v1029
          %v1039 = vadd.f32 %v1000, %v1030
          %v1040 = vadd.f32 %v1001, %v1031
          %v1041 = vadd.f32 %v1002, %v1032
          %s1042 = scalar_lea.vmem %s236, 264 [#allocation2]
          %v1043 = vld [vmem:[%s1042] sm:$0xff]
          %v1044 = vmul.f32 %v1043, %v1007
          %v1045 = vmul.f32 %v1043, %v1008
          %v1046 = vmul.f32 %v1043, %v1009
          %v1047 = vmul.f32 %v1043, %v1010
          %v1048 = vmul.f32 %v1043, %v1011
          %v1049 = vmul.f32 %v1043, %v1012
          %v1050 = vmul.f32 %v1043, %v1013
          %v1051 = vmul.f32 %v1043, %v1014
          %v1052 = vmul.f32 %v1043, %v1015
          %v1053 = vadd.f32 %v1033, %v1044
          %v1054 = vadd.f32 %v1034, %v1045
          %v1055 = vadd.f32 %v1035, %v1046
          %v1056 = vadd.f32 %v1036, %v1047
          %v1057 = vadd.f32 %v1037, %v1048
          %v1058 = vadd.f32 %v1038, %v1049
          %v1059 = vadd.f32 %v1039, %v1050
          %v1060 = vadd.f32 %v1040, %v1051
          %v1061 = vadd.f32 %v1041, %v1052
          %s1062 = scalar_lea.vmem %s236, 272 [#allocation2]
          %v1063 = vld [vmem:[%s1062] sm:$0xff]
          %v1064 = vmul.f32 %v1063, %v1008
          %v1065 = vmul.f32 %v1063, %v1009
          %v1066 = vmul.f32 %v1063, %v1010
          %v1067 = vmul.f32 %v1063, %v1011
          %v1068 = vmul.f32 %v1063, %v1012
          %v1069 = vmul.f32 %v1063, %v1013
          %v1070 = vmul.f32 %v1063, %v1014
          %v1071 = vmul.f32 %v1063, %v1015
          %v1072 = vmul.f32 %v1063, %v1016
          %v1073 = vadd.f32 %v1053, %v1064
          %v1074 = vadd.f32 %v1054, %v1065
          %v1075 = vadd.f32 %v1055, %v1066
          %v1076 = vadd.f32 %v1056, %v1067
          %v1077 = vadd.f32 %v1057, %v1068
          %v1078 = vadd.f32 %v1058, %v1069
          %v1079 = vadd.f32 %v1059, %v1070
          %v1080 = vadd.f32 %v1060, %v1071
          %v1081 = vadd.f32 %v1061, %v1072
          %s1082 = scalar_lea.vmem %s236, 280 [#allocation2]
          %v1083 = vld [vmem:[%s1082] sm:$0xff]
          %v1084 = vmul.f32 %v1083, %v1009
          %v1085 = vmul.f32 %v1083, %v1010
          %v1086 = vmul.f32 %v1083, %v1011
          %v1087 = vmul.f32 %v1083, %v1012
          %v1088 = vmul.f32 %v1083, %v1013
          %v1089 = vmul.f32 %v1083, %v1014
          %v1090 = vmul.f32 %v1083, %v1015
          %v1091 = vmul.f32 %v1083, %v1016
          %v1092 = vmul.f32 %v1083, %v1017
          %v1093 = vadd.f32 %v1073, %v1084
          %v1094 = vadd.f32 %v1074, %v1085
          %v1095 = vadd.f32 %v1075, %v1086
          %v1096 = vadd.f32 %v1076, %v1087
          %v1097 = vadd.f32 %v1077, %v1088
          %v1098 = vadd.f32 %v1078, %v1089
          %v1099 = vadd.f32 %v1079, %v1090
          %v1100 = vadd.f32 %v1080, %v1091
          %v1101 = vadd.f32 %v1081, %v1092
          %s1102 = scalar_lea.vmem %s236, 288 [#allocation2]
          %v1103 = vld [vmem:[%s1102] sm:$0xff]
          %v1104 = vmul.f32 %v1103, %v1010
          %v1105 = vmul.f32 %v1103, %v1011
          %v1106 = vmul.f32 %v1103, %v1012
          %v1107 = vmul.f32 %v1103, %v1013
          %v1108 = vmul.f32 %v1103, %v1014
          %v1109 = vmul.f32 %v1103, %v1015
          %v1110 = vmul.f32 %v1103, %v1016
          %v1111 = vmul.f32 %v1103, %v1017
          %v1112 = vmul.f32 %v1103, %v1018
          %v1113 = vadd.f32 %v1093, %v1104
          %v1114 = vadd.f32 %v1094, %v1105
          %v1115 = vadd.f32 %v1095, %v1106
          %v1116 = vadd.f32 %v1096, %v1107
          %v1117 = vadd.f32 %v1097, %v1108
          %v1118 = vadd.f32 %v1098, %v1109
          %v1119 = vadd.f32 %v1099, %v1110
          %v1120 = vadd.f32 %v1100, %v1111
          %v1121 = vadd.f32 %v1101, %v1112
          %s1122 = scalar_lea.vmem %s236, 296 [#allocation2]
          %v1123 = vld [vmem:[%s1122] sm:$0xff]
          %v1124 = vmul.f32 %v1123, %v1011
          %v1125 = vmul.f32 %v1123, %v1012
          %v1126 = vmul.f32 %v1123, %v1013
          %v1127 = vmul.f32 %v1123, %v1014
          %v1128 = vmul.f32 %v1123, %v1015
          %v1129 = vmul.f32 %v1123, %v1016
          %v1130 = vmul.f32 %v1123, %v1017
          %v1131 = vmul.f32 %v1123, %v1018
          %v1132 = vmul.f32 %v1123, %v1019
          %v1133 = vadd.f32 %v1113, %v1124
          %v1134 = vadd.f32 %v1114, %v1125
          %v1135 = vadd.f32 %v1115, %v1126
          %v1136 = vadd.f32 %v1116, %v1127
          %v1137 = vadd.f32 %v1117, %v1128
          %v1138 = vadd.f32 %v1118, %v1129
          %v1139 = vadd.f32 %v1119, %v1130
          %v1140 = vadd.f32 %v1120, %v1131
          %v1141 = vadd.f32 %v1121, %v1132
          %s1142 = scalar_lea.vmem %s236, 304 [#allocation2]
          %v1143 = vld [vmem:[%s1142] sm:$0xff]
          %v1144 = vmul.f32 %v1143, %v1012
          %v1145 = vmul.f32 %v1143, %v1013
          %v1146 = vmul.f32 %v1143, %v1014
          %v1147 = vmul.f32 %v1143, %v1015
          %v1148 = vmul.f32 %v1143, %v1016
          %v1149 = vmul.f32 %v1143, %v1017
          %v1150 = vmul.f32 %v1143, %v1018
          %v1151 = vmul.f32 %v1143, %v1019
          %v1152 = vmul.f32 %v1143, %v1020
          %v1153 = vadd.f32 %v1133, %v1144
          %v1154 = vadd.f32 %v1134, %v1145
          %v1155 = vadd.f32 %v1135, %v1146
          %v1156 = vadd.f32 %v1136, %v1147
          %v1157 = vadd.f32 %v1137, %v1148
          %v1158 = vadd.f32 %v1138, %v1149
          %v1159 = vadd.f32 %v1139, %v1150
          %v1160 = vadd.f32 %v1140, %v1151
          %v1161 = vadd.f32 %v1141, %v1152
          %s1162 = scalar_lea.vmem %s236, 312 [#allocation2]
          %v1163 = vld [vmem:[%s1162] sm:$0xff]
          %v1164 = vmul.f32 %v1163, %v1013
          %v1165 = vmul.f32 %v1163, %v1014
          %v1166 = vmul.f32 %v1163, %v1015
          %v1167 = vmul.f32 %v1163, %v1016
          %v1168 = vmul.f32 %v1163, %v1017
          %v1169 = vmul.f32 %v1163, %v1018
          %v1170 = vmul.f32 %v1163, %v1019
          %v1171 = vmul.f32 %v1163, %v1020
          %v1172 = vmul.f32 %v1163, %v1021
          %v1173 = vadd.f32 %v1153, %v1164
          %v1174 = vadd.f32 %v1154, %v1165
          %v1175 = vadd.f32 %v1155, %v1166
          %v1176 = vadd.f32 %v1156, %v1167
          %v1177 = vadd.f32 %v1157, %v1168
          %v1178 = vadd.f32 %v1158, %v1169
          %v1179 = vadd.f32 %v1159, %v1170
          %v1180 = vadd.f32 %v1160, %v1171
          %v1181 = vadd.f32 %v1161, %v1172
          %s1182 = sadd.s32 %s284, 5
          %s1183 = smul.u32 %s1182, 128
          %s1184 = scalar_lea.vmem %s245, %s1183 [#allocation5]
          %v1185 = vld [vmem:[%s1184] sm:$0xff]
          %v1186 = vld [vmem:[%s1184 + $0x8] sm:$0xff]
          %v1187 = vld [vmem:[%s1184 + $0x10] sm:$0xff]
          %v1188 = vld [vmem:[%s1184 + $0x18] sm:$0xff]
          %v1189 = vld [vmem:[%s1184 + $0x20] sm:$0xff]
          %v1190 = vld [vmem:[%s1184 + $0x28] sm:$0xff]
          %v1191 = vld [vmem:[%s1184 + $0x30] sm:$0xff]
          %v1192 = vld [vmem:[%s1184 + $0x38] sm:$0xff]
          %v1193 = vld [vmem:[%s1184 + $0x40] sm:$0xff]
          %v1194 = vld [vmem:[%s1184 + $0x48] sm:$0xff]
          %v1195 = vld [vmem:[%s1184 + $0x50] sm:$0xff]
          %v1196 = vld [vmem:[%s1184 + $0x58] sm:$0xff]
          %v1197 = vld [vmem:[%s1184 + $0x60] sm:$0xff]
          %v1198 = vld [vmem:[%s1184 + $0x68] sm:$0xff]
          %v1199 = vld [vmem:[%s1184 + $0x70] sm:$0xff]
          %v1200 = vld [vmem:[%s1184 + $0x78] sm:$0xff]
          %s1201 = scalar_lea.vmem %s236, 320 [#allocation2]
          %v1202 = vld [vmem:[%s1201] sm:$0xff]
          %v1203 = vmul.f32 %v1202, %v1185
          %v1204 = vmul.f32 %v1202, %v1186
          %v1205 = vmul.f32 %v1202, %v1187
          %v1206 = vmul.f32 %v1202, %v1188
          %v1207 = vmul.f32 %v1202, %v1189
          %v1208 = vmul.f32 %v1202, %v1190
          %v1209 = vmul.f32 %v1202, %v1191
          %v1210 = vmul.f32 %v1202, %v1192
          %v1211 = vmul.f32 %v1202, %v1193
          %v1212 = vadd.f32 %v1173, %v1203
          %v1213 = vadd.f32 %v1174, %v1204
          %v1214 = vadd.f32 %v1175, %v1205
          %v1215 = vadd.f32 %v1176, %v1206
          %v1216 = vadd.f32 %v1177, %v1207
          %v1217 = vadd.f32 %v1178, %v1208
          %v1218 = vadd.f32 %v1179, %v1209
          %v1219 = vadd.f32 %v1180, %v1210
          %v1220 = vadd.f32 %v1181, %v1211
          %s1221 = scalar_lea.vmem %s236, 328 [#allocation2]
          %v1222 = vld [vmem:[%s1221] sm:$0xff]
          %v1223 = vmul.f32 %v1222, %v1186
          %v1224 = vmul.f32 %v1222, %v1187
          %v1225 = vmul.f32 %v1222, %v1188
          %v1226 = vmul.f32 %v1222, %v1189
          %v1227 = vmul.f32 %v1222, %v1190
          %v1228 = vmul.f32 %v1222, %v1191
          %v1229 = vmul.f32 %v1222, %v1192
          %v1230 = vmul.f32 %v1222, %v1193
          %v1231 = vmul.f32 %v1222, %v1194
          %v1232 = vadd.f32 %v1212, %v1223
          %v1233 = vadd.f32 %v1213, %v1224
          %v1234 = vadd.f32 %v1214, %v1225
          %v1235 = vadd.f32 %v1215, %v1226
          %v1236 = vadd.f32 %v1216, %v1227
          %v1237 = vadd.f32 %v1217, %v1228
          %v1238 = vadd.f32 %v1218, %v1229
          %v1239 = vadd.f32 %v1219, %v1230
          %v1240 = vadd.f32 %v1220, %v1231
          %s1241 = scalar_lea.vmem %s236, 336 [#allocation2]
          %v1242 = vld [vmem:[%s1241] sm:$0xff]
          %v1243 = vmul.f32 %v1242, %v1187
          %v1244 = vmul.f32 %v1242, %v1188
          %v1245 = vmul.f32 %v1242, %v1189
          %v1246 = vmul.f32 %v1242, %v1190
          %v1247 = vmul.f32 %v1242, %v1191
          %v1248 = vmul.f32 %v1242, %v1192
          %v1249 = vmul.f32 %v1242, %v1193
          %v1250 = vmul.f32 %v1242, %v1194
          %v1251 = vmul.f32 %v1242, %v1195
          %v1252 = vadd.f32 %v1232, %v1243
          %v1253 = vadd.f32 %v1233, %v1244
          %v1254 = vadd.f32 %v1234, %v1245
          %v1255 = vadd.f32 %v1235, %v1246
          %v1256 = vadd.f32 %v1236, %v1247
          %v1257 = vadd.f32 %v1237, %v1248
          %v1258 = vadd.f32 %v1238, %v1249
          %v1259 = vadd.f32 %v1239, %v1250
          %v1260 = vadd.f32 %v1240, %v1251
          %s1261 = scalar_lea.vmem %s236, 344 [#allocation2]
          %v1262 = vld [vmem:[%s1261] sm:$0xff]
          %v1263 = vmul.f32 %v1262, %v1188
          %v1264 = vmul.f32 %v1262, %v1189
          %v1265 = vmul.f32 %v1262, %v1190
          %v1266 = vmul.f32 %v1262, %v1191
          %v1267 = vmul.f32 %v1262, %v1192
          %v1268 = vmul.f32 %v1262, %v1193
          %v1269 = vmul.f32 %v1262, %v1194
          %v1270 = vmul.f32 %v1262, %v1195
          %v1271 = vmul.f32 %v1262, %v1196
          %v1272 = vadd.f32 %v1252, %v1263
          %v1273 = vadd.f32 %v1253, %v1264
          %v1274 = vadd.f32 %v1254, %v1265
          %v1275 = vadd.f32 %v1255, %v1266
          %v1276 = vadd.f32 %v1256, %v1267
          %v1277 = vadd.f32 %v1257, %v1268
          %v1278 = vadd.f32 %v1258, %v1269
          %v1279 = vadd.f32 %v1259, %v1270
          %v1280 = vadd.f32 %v1260, %v1271
          %s1281 = scalar_lea.vmem %s236, 352 [#allocation2]
          %v1282 = vld [vmem:[%s1281] sm:$0xff]
          %v1283 = vmul.f32 %v1282, %v1189
          %v1284 = vmul.f32 %v1282, %v1190
          %v1285 = vmul.f32 %v1282, %v1191
          %v1286 = vmul.f32 %v1282, %v1192
          %v1287 = vmul.f32 %v1282, %v1193
          %v1288 = vmul.f32 %v1282, %v1194
          %v1289 = vmul.f32 %v1282, %v1195
          %v1290 = vmul.f32 %v1282, %v1196
          %v1291 = vmul.f32 %v1282, %v1197
          %v1292 = vadd.f32 %v1272, %v1283
          %v1293 = vadd.f32 %v1273, %v1284
          %v1294 = vadd.f32 %v1274, %v1285
          %v1295 = vadd.f32 %v1275, %v1286
          %v1296 = vadd.f32 %v1276, %v1287
          %v1297 = vadd.f32 %v1277, %v1288
          %v1298 = vadd.f32 %v1278, %v1289
          %v1299 = vadd.f32 %v1279, %v1290
          %v1300 = vadd.f32 %v1280, %v1291
          %s1301 = scalar_lea.vmem %s236, 360 [#allocation2]
          %v1302 = vld [vmem:[%s1301] sm:$0xff]
          %v1303 = vmul.f32 %v1302, %v1190
          %v1304 = vmul.f32 %v1302, %v1191
          %v1305 = vmul.f32 %v1302, %v1192
          %v1306 = vmul.f32 %v1302, %v1193
          %v1307 = vmul.f32 %v1302, %v1194
          %v1308 = vmul.f32 %v1302, %v1195
          %v1309 = vmul.f32 %v1302, %v1196
          %v1310 = vmul.f32 %v1302, %v1197
          %v1311 = vmul.f32 %v1302, %v1198
          %v1312 = vadd.f32 %v1292, %v1303
          %v1313 = vadd.f32 %v1293, %v1304
          %v1314 = vadd.f32 %v1294, %v1305
          %v1315 = vadd.f32 %v1295, %v1306
          %v1316 = vadd.f32 %v1296, %v1307
          %v1317 = vadd.f32 %v1297, %v1308
          %v1318 = vadd.f32 %v1298, %v1309
          %v1319 = vadd.f32 %v1299, %v1310
          %v1320 = vadd.f32 %v1300, %v1311
          %s1321 = scalar_lea.vmem %s236, 368 [#allocation2]
          %v1322 = vld [vmem:[%s1321] sm:$0xff]
          %v1323 = vmul.f32 %v1322, %v1191
          %v1324 = vmul.f32 %v1322, %v1192
          %v1325 = vmul.f32 %v1322, %v1193
          %v1326 = vmul.f32 %v1322, %v1194
          %v1327 = vmul.f32 %v1322, %v1195
          %v1328 = vmul.f32 %v1322, %v1196
          %v1329 = vmul.f32 %v1322, %v1197
          %v1330 = vmul.f32 %v1322, %v1198
          %v1331 = vmul.f32 %v1322, %v1199
          %v1332 = vadd.f32 %v1312, %v1323
          %v1333 = vadd.f32 %v1313, %v1324
          %v1334 = vadd.f32 %v1314, %v1325
          %v1335 = vadd.f32 %v1315, %v1326
          %v1336 = vadd.f32 %v1316, %v1327
          %v1337 = vadd.f32 %v1317, %v1328
          %v1338 = vadd.f32 %v1318, %v1329
          %v1339 = vadd.f32 %v1319, %v1330
          %v1340 = vadd.f32 %v1320, %v1331
          %s1341 = scalar_lea.vmem %s236, 376 [#allocation2]
          %v1342 = vld [vmem:[%s1341] sm:$0xff]
          %v1343 = vmul.f32 %v1342, %v1192
          %v1344 = vmul.f32 %v1342, %v1193
          %v1345 = vmul.f32 %v1342, %v1194
          %v1346 = vmul.f32 %v1342, %v1195
          %v1347 = vmul.f32 %v1342, %v1196
          %v1348 = vmul.f32 %v1342, %v1197
          %v1349 = vmul.f32 %v1342, %v1198
          %v1350 = vmul.f32 %v1342, %v1199
          %v1351 = vmul.f32 %v1342, %v1200
          %v1352 = vadd.f32 %v1332, %v1343
          %v1353 = vadd.f32 %v1333, %v1344
          %v1354 = vadd.f32 %v1334, %v1345
          %v1355 = vadd.f32 %v1335, %v1346
          %v1356 = vadd.f32 %v1336, %v1347
          %v1357 = vadd.f32 %v1337, %v1348
          %v1358 = vadd.f32 %v1338, %v1349
          %v1359 = vadd.f32 %v1339, %v1350
          %v1360 = vadd.f32 %v1340, %v1351
          %s1361 = sadd.s32 %s284, 6
          %s1362 = smul.u32 %s1361, 128
          %s1363 = scalar_lea.vmem %s245, %s1362 [#allocation5]
          %v1364 = vld [vmem:[%s1363] sm:$0xff]
          %v1365 = vld [vmem:[%s1363 + $0x8] sm:$0xff]
          %v1366 = vld [vmem:[%s1363 + $0x10] sm:$0xff]
          %v1367 = vld [vmem:[%s1363 + $0x18] sm:$0xff]
          %v1368 = vld [vmem:[%s1363 + $0x20] sm:$0xff]
          %v1369 = vld [vmem:[%s1363 + $0x28] sm:$0xff]
          %v1370 = vld [vmem:[%s1363 + $0x30] sm:$0xff]
          %v1371 = vld [vmem:[%s1363 + $0x38] sm:$0xff]
          %v1372 = vld [vmem:[%s1363 + $0x40] sm:$0xff]
          %v1373 = vld [vmem:[%s1363 + $0x48] sm:$0xff]
          %v1374 = vld [vmem:[%s1363 + $0x50] sm:$0xff]
          %v1375 = vld [vmem:[%s1363 + $0x58] sm:$0xff]
          %v1376 = vld [vmem:[%s1363 + $0x60] sm:$0xff]
          %v1377 = vld [vmem:[%s1363 + $0x68] sm:$0xff]
          %v1378 = vld [vmem:[%s1363 + $0x70] sm:$0xff]
          %v1379 = vld [vmem:[%s1363 + $0x78] sm:$0xff]
          %s1380 = scalar_lea.vmem %s236, 384 [#allocation2]
          %v1381 = vld [vmem:[%s1380] sm:$0xff]
          %v1382 = vmul.f32 %v1381, %v1364
          %v1383 = vmul.f32 %v1381, %v1365
          %v1384 = vmul.f32 %v1381, %v1366
          %v1385 = vmul.f32 %v1381, %v1367
          %v1386 = vmul.f32 %v1381, %v1368
          %v1387 = vmul.f32 %v1381, %v1369
          %v1388 = vmul.f32 %v1381, %v1370
          %v1389 = vmul.f32 %v1381, %v1371
          %v1390 = vmul.f32 %v1381, %v1372
          %v1391 = vadd.f32 %v1352, %v1382
          %v1392 = vadd.f32 %v1353, %v1383
          %v1393 = vadd.f32 %v1354, %v1384
          %v1394 = vadd.f32 %v1355, %v1385
          %v1395 = vadd.f32 %v1356, %v1386
          %v1396 = vadd.f32 %v1357, %v1387
          %v1397 = vadd.f32 %v1358, %v1388
          %v1398 = vadd.f32 %v1359, %v1389
          %v1399 = vadd.f32 %v1360, %v1390
          %s1400 = scalar_lea.vmem %s236, 392 [#allocation2]
          %v1401 = vld [vmem:[%s1400] sm:$0xff]
          %v1402 = vmul.f32 %v1401, %v1365
          %v1403 = vmul.f32 %v1401, %v1366
          %v1404 = vmul.f32 %v1401, %v1367
          %v1405 = vmul.f32 %v1401, %v1368
          %v1406 = vmul.f32 %v1401, %v1369
          %v1407 = vmul.f32 %v1401, %v1370
          %v1408 = vmul.f32 %v1401, %v1371
          %v1409 = vmul.f32 %v1401, %v1372
          %v1410 = vmul.f32 %v1401, %v1373
          %v1411 = vadd.f32 %v1391, %v1402
          %v1412 = vadd.f32 %v1392, %v1403
          %v1413 = vadd.f32 %v1393, %v1404
          %v1414 = vadd.f32 %v1394, %v1405
          %v1415 = vadd.f32 %v1395, %v1406
          %v1416 = vadd.f32 %v1396, %v1407
          %v1417 = vadd.f32 %v1397, %v1408
          %v1418 = vadd.f32 %v1398, %v1409
          %v1419 = vadd.f32 %v1399, %v1410
          %s1420 = scalar_lea.vmem %s236, 400 [#allocation2]
          %v1421 = vld [vmem:[%s1420] sm:$0xff]
          %v1422 = vmul.f32 %v1421, %v1366
          %v1423 = vmul.f32 %v1421, %v1367
          %v1424 = vmul.f32 %v1421, %v1368
          %v1425 = vmul.f32 %v1421, %v1369
          %v1426 = vmul.f32 %v1421, %v1370
          %v1427 = vmul.f32 %v1421, %v1371
          %v1428 = vmul.f32 %v1421, %v1372
          %v1429 = vmul.f32 %v1421, %v1373
          %v1430 = vmul.f32 %v1421, %v1374
          %v1431 = vadd.f32 %v1411, %v1422
          %v1432 = vadd.f32 %v1412, %v1423
          %v1433 = vadd.f32 %v1413, %v1424
          %v1434 = vadd.f32 %v1414, %v1425
          %v1435 = vadd.f32 %v1415, %v1426
          %v1436 = vadd.f32 %v1416, %v1427
          %v1437 = vadd.f32 %v1417, %v1428
          %v1438 = vadd.f32 %v1418, %v1429
          %v1439 = vadd.f32 %v1419, %v1430
          %s1440 = scalar_lea.vmem %s236, 408 [#allocation2]
          %v1441 = vld [vmem:[%s1440] sm:$0xff]
          %v1442 = vmul.f32 %v1441, %v1367
          %v1443 = vmul.f32 %v1441, %v1368
          %v1444 = vmul.f32 %v1441, %v1369
          %v1445 = vmul.f32 %v1441, %v1370
          %v1446 = vmul.f32 %v1441, %v1371
          %v1447 = vmul.f32 %v1441, %v1372
          %v1448 = vmul.f32 %v1441, %v1373
          %v1449 = vmul.f32 %v1441, %v1374
          %v1450 = vmul.f32 %v1441, %v1375
          %v1451 = vadd.f32 %v1431, %v1442
          %v1452 = vadd.f32 %v1432, %v1443
          %v1453 = vadd.f32 %v1433, %v1444
          %v1454 = vadd.f32 %v1434, %v1445
          %v1455 = vadd.f32 %v1435, %v1446
          %v1456 = vadd.f32 %v1436, %v1447
          %v1457 = vadd.f32 %v1437, %v1448
          %v1458 = vadd.f32 %v1438, %v1449
          %v1459 = vadd.f32 %v1439, %v1450
          %s1460 = scalar_lea.vmem %s236, 416 [#allocation2]
          %v1461 = vld [vmem:[%s1460] sm:$0xff]
          %v1462 = vmul.f32 %v1461, %v1368
          %v1463 = vmul.f32 %v1461, %v1369
          %v1464 = vmul.f32 %v1461, %v1370
          %v1465 = vmul.f32 %v1461, %v1371
          %v1466 = vmul.f32 %v1461, %v1372
          %v1467 = vmul.f32 %v1461, %v1373
          %v1468 = vmul.f32 %v1461, %v1374
          %v1469 = vmul.f32 %v1461, %v1375
          %v1470 = vmul.f32 %v1461, %v1376
          %v1471 = vadd.f32 %v1451, %v1462
          %v1472 = vadd.f32 %v1452, %v1463
          %v1473 = vadd.f32 %v1453, %v1464
          %v1474 = vadd.f32 %v1454, %v1465
          %v1475 = vadd.f32 %v1455, %v1466
          %v1476 = vadd.f32 %v1456, %v1467
          %v1477 = vadd.f32 %v1457, %v1468
          %v1478 = vadd.f32 %v1458, %v1469
          %v1479 = vadd.f32 %v1459, %v1470
          %s1480 = scalar_lea.vmem %s236, 424 [#allocation2]
          %v1481 = vld [vmem:[%s1480] sm:$0xff]
          %v1482 = vmul.f32 %v1481, %v1369
          %v1483 = vmul.f32 %v1481, %v1370
          %v1484 = vmul.f32 %v1481, %v1371
          %v1485 = vmul.f32 %v1481, %v1372
          %v1486 = vmul.f32 %v1481, %v1373
          %v1487 = vmul.f32 %v1481, %v1374
          %v1488 = vmul.f32 %v1481, %v1375
          %v1489 = vmul.f32 %v1481, %v1376
          %v1490 = vmul.f32 %v1481, %v1377
          %v1491 = vadd.f32 %v1471, %v1482
          %v1492 = vadd.f32 %v1472, %v1483
          %v1493 = vadd.f32 %v1473, %v1484
          %v1494 = vadd.f32 %v1474, %v1485
          %v1495 = vadd.f32 %v1475, %v1486
          %v1496 = vadd.f32 %v1476, %v1487
          %v1497 = vadd.f32 %v1477, %v1488
          %v1498 = vadd.f32 %v1478, %v1489
          %v1499 = vadd.f32 %v1479, %v1490
          %s1500 = scalar_lea.vmem %s236, 432 [#allocation2]
          %v1501 = vld [vmem:[%s1500] sm:$0xff]
          %v1502 = vmul.f32 %v1501, %v1370
          %v1503 = vmul.f32 %v1501, %v1371
          %v1504 = vmul.f32 %v1501, %v1372
          %v1505 = vmul.f32 %v1501, %v1373
          %v1506 = vmul.f32 %v1501, %v1374
          %v1507 = vmul.f32 %v1501, %v1375
          %v1508 = vmul.f32 %v1501, %v1376
          %v1509 = vmul.f32 %v1501, %v1377
          %v1510 = vmul.f32 %v1501, %v1378
          %v1511 = vadd.f32 %v1491, %v1502
          %v1512 = vadd.f32 %v1492, %v1503
          %v1513 = vadd.f32 %v1493, %v1504
          %v1514 = vadd.f32 %v1494, %v1505
          %v1515 = vadd.f32 %v1495, %v1506
          %v1516 = vadd.f32 %v1496, %v1507
          %v1517 = vadd.f32 %v1497, %v1508
          %v1518 = vadd.f32 %v1498, %v1509
          %v1519 = vadd.f32 %v1499, %v1510
          %s1520 = scalar_lea.vmem %s236, 440 [#allocation2]
          %v1521 = vld [vmem:[%s1520] sm:$0xff]
          %v1522 = vmul.f32 %v1521, %v1371
          %v1523 = vmul.f32 %v1521, %v1372
          %v1524 = vmul.f32 %v1521, %v1373
          %v1525 = vmul.f32 %v1521, %v1374
          %v1526 = vmul.f32 %v1521, %v1375
          %v1527 = vmul.f32 %v1521, %v1376
          %v1528 = vmul.f32 %v1521, %v1377
          %v1529 = vmul.f32 %v1521, %v1378
          %v1530 = vmul.f32 %v1521, %v1379
          %v1531 = vadd.f32 %v1511, %v1522
          %v1532 = vadd.f32 %v1512, %v1523
          %v1533 = vadd.f32 %v1513, %v1524
          %v1534 = vadd.f32 %v1514, %v1525
          %v1535 = vadd.f32 %v1515, %v1526
          %v1536 = vadd.f32 %v1516, %v1527
          %v1537 = vadd.f32 %v1517, %v1528
          %v1538 = vadd.f32 %v1518, %v1529
          %v1539 = vadd.f32 %v1519, %v1530
          %s1540 = sadd.s32 %s284, 7
          %s1541 = smul.u32 %s1540, 128
          %s1542 = scalar_lea.vmem %s245, %s1541 [#allocation5]
          %v1543 = vld [vmem:[%s1542] sm:$0xff]
          %v1544 = vld [vmem:[%s1542 + $0x8] sm:$0xff]
          %v1545 = vld [vmem:[%s1542 + $0x10] sm:$0xff]
          %v1546 = vld [vmem:[%s1542 + $0x18] sm:$0xff]
          %v1547 = vld [vmem:[%s1542 + $0x20] sm:$0xff]
          %v1548 = vld [vmem:[%s1542 + $0x28] sm:$0xff]
          %v1549 = vld [vmem:[%s1542 + $0x30] sm:$0xff]
          %v1550 = vld [vmem:[%s1542 + $0x38] sm:$0xff]
          %v1551 = vld [vmem:[%s1542 + $0x40] sm:$0xff]
          %v1552 = vld [vmem:[%s1542 + $0x48] sm:$0xff]
          %v1553 = vld [vmem:[%s1542 + $0x50] sm:$0xff]
          %v1554 = vld [vmem:[%s1542 + $0x58] sm:$0xff]
          %v1555 = vld [vmem:[%s1542 + $0x60] sm:$0xff]
          %v1556 = vld [vmem:[%s1542 + $0x68] sm:$0xff]
          %v1557 = vld [vmem:[%s1542 + $0x70] sm:$0xff]
          %v1558 = vld [vmem:[%s1542 + $0x78] sm:$0xff]
          %s1559 = scalar_lea.vmem %s236, 448 [#allocation2]
          %v1560 = vld [vmem:[%s1559] sm:$0xff]
          %v1561 = vmul.f32 %v1560, %v1543
          %v1562 = vmul.f32 %v1560, %v1544
          %v1563 = vmul.f32 %v1560, %v1545
          %v1564 = vmul.f32 %v1560, %v1546
          %v1565 = vmul.f32 %v1560, %v1547
          %v1566 = vmul.f32 %v1560, %v1548
          %v1567 = vmul.f32 %v1560, %v1549
          %v1568 = vmul.f32 %v1560, %v1550
          %v1569 = vmul.f32 %v1560, %v1551
          %v1570 = vadd.f32 %v1531, %v1561
          %v1571 = vadd.f32 %v1532, %v1562
          %v1572 = vadd.f32 %v1533, %v1563
          %v1573 = vadd.f32 %v1534, %v1564
          %v1574 = vadd.f32 %v1535, %v1565
          %v1575 = vadd.f32 %v1536, %v1566
          %v1576 = vadd.f32 %v1537, %v1567
          %v1577 = vadd.f32 %v1538, %v1568
          %v1578 = vadd.f32 %v1539, %v1569
          %s1579 = scalar_lea.vmem %s236, 456 [#allocation2]
          %v1580 = vld [vmem:[%s1579] sm:$0xff]
          %v1581 = vmul.f32 %v1580, %v1544
          %v1582 = vmul.f32 %v1580, %v1545
          %v1583 = vmul.f32 %v1580, %v1546
          %v1584 = vmul.f32 %v1580, %v1547
          %v1585 = vmul.f32 %v1580, %v1548
          %v1586 = vmul.f32 %v1580, %v1549
          %v1587 = vmul.f32 %v1580, %v1550
          %v1588 = vmul.f32 %v1580, %v1551
          %v1589 = vmul.f32 %v1580, %v1552
          %v1590 = vadd.f32 %v1570, %v1581
          %v1591 = vadd.f32 %v1571, %v1582
          %v1592 = vadd.f32 %v1572, %v1583
          %v1593 = vadd.f32 %v1573, %v1584
          %v1594 = vadd.f32 %v1574, %v1585
          %v1595 = vadd.f32 %v1575, %v1586
          %v1596 = vadd.f32 %v1576, %v1587
          %v1597 = vadd.f32 %v1577, %v1588
          %v1598 = vadd.f32 %v1578, %v1589
          %s1599 = scalar_lea.vmem %s236, 464 [#allocation2]
          %v1600 = vld [vmem:[%s1599] sm:$0xff]
          %v1601 = vmul.f32 %v1600, %v1545
          %v1602 = vmul.f32 %v1600, %v1546
          %v1603 = vmul.f32 %v1600, %v1547
          %v1604 = vmul.f32 %v1600, %v1548
          %v1605 = vmul.f32 %v1600, %v1549
          %v1606 = vmul.f32 %v1600, %v1550
          %v1607 = vmul.f32 %v1600, %v1551
          %v1608 = vmul.f32 %v1600, %v1552
          %v1609 = vmul.f32 %v1600, %v1553
          %v1610 = vadd.f32 %v1590, %v1601
          %v1611 = vadd.f32 %v1591, %v1602
          %v1612 = vadd.f32 %v1592, %v1603
          %v1613 = vadd.f32 %v1593, %v1604
          %v1614 = vadd.f32 %v1594, %v1605
          %v1615 = vadd.f32 %v1595, %v1606
          %v1616 = vadd.f32 %v1596, %v1607
          %v1617 = vadd.f32 %v1597, %v1608
          %v1618 = vadd.f32 %v1598, %v1609
          %s1619 = scalar_lea.vmem %s236, 472 [#allocation2]
          %v1620 = vld [vmem:[%s1619] sm:$0xff]
          %v1621 = vmul.f32 %v1620, %v1546
          %v1622 = vmul.f32 %v1620, %v1547
          %v1623 = vmul.f32 %v1620, %v1548
          %v1624 = vmul.f32 %v1620, %v1549
          %v1625 = vmul.f32 %v1620, %v1550
          %v1626 = vmul.f32 %v1620, %v1551
          %v1627 = vmul.f32 %v1620, %v1552
          %v1628 = vmul.f32 %v1620, %v1553
          %v1629 = vmul.f32 %v1620, %v1554
          %v1630 = vadd.f32 %v1610, %v1621
          %v1631 = vadd.f32 %v1611, %v1622
          %v1632 = vadd.f32 %v1612, %v1623
          %v1633 = vadd.f32 %v1613, %v1624
          %v1634 = vadd.f32 %v1614, %v1625
          %v1635 = vadd.f32 %v1615, %v1626
          %v1636 = vadd.f32 %v1616, %v1627
          %v1637 = vadd.f32 %v1617, %v1628
          %v1638 = vadd.f32 %v1618, %v1629
          %s1639 = scalar_lea.vmem %s236, 480 [#allocation2]
          %v1640 = vld [vmem:[%s1639] sm:$0xff]
          %v1641 = vmul.f32 %v1640, %v1547
          %v1642 = vmul.f32 %v1640, %v1548
          %v1643 = vmul.f32 %v1640, %v1549
          %v1644 = vmul.f32 %v1640, %v1550
          %v1645 = vmul.f32 %v1640, %v1551
          %v1646 = vmul.f32 %v1640, %v1552
          %v1647 = vmul.f32 %v1640, %v1553
          %v1648 = vmul.f32 %v1640, %v1554
          %v1649 = vmul.f32 %v1640, %v1555
          %v1650 = vadd.f32 %v1630, %v1641
          %v1651 = vadd.f32 %v1631, %v1642
          %v1652 = vadd.f32 %v1632, %v1643
          %v1653 = vadd.f32 %v1633, %v1644
          %v1654 = vadd.f32 %v1634, %v1645
          %v1655 = vadd.f32 %v1635, %v1646
          %v1656 = vadd.f32 %v1636, %v1647
          %v1657 = vadd.f32 %v1637, %v1648
          %v1658 = vadd.f32 %v1638, %v1649
          %s1659 = scalar_lea.vmem %s236, 488 [#allocation2]
          %v1660 = vld [vmem:[%s1659] sm:$0xff]
          %v1661 = vmul.f32 %v1660, %v1548
          %v1662 = vmul.f32 %v1660, %v1549
          %v1663 = vmul.f32 %v1660, %v1550
          %v1664 = vmul.f32 %v1660, %v1551
          %v1665 = vmul.f32 %v1660, %v1552
          %v1666 = vmul.f32 %v1660, %v1553
          %v1667 = vmul.f32 %v1660, %v1554
          %v1668 = vmul.f32 %v1660, %v1555
          %v1669 = vmul.f32 %v1660, %v1556
          %v1670 = vadd.f32 %v1650, %v1661
          %v1671 = vadd.f32 %v1651, %v1662
          %v1672 = vadd.f32 %v1652, %v1663
          %v1673 = vadd.f32 %v1653, %v1664
          %v1674 = vadd.f32 %v1654, %v1665
          %v1675 = vadd.f32 %v1655, %v1666
          %v1676 = vadd.f32 %v1656, %v1667
          %v1677 = vadd.f32 %v1657, %v1668
          %v1678 = vadd.f32 %v1658, %v1669
          %s1679 = scalar_lea.vmem %s236, 496 [#allocation2]
          %v1680 = vld [vmem:[%s1679] sm:$0xff]
          %v1681 = vmul.f32 %v1680, %v1549
          %v1682 = vmul.f32 %v1680, %v1550
          %v1683 = vmul.f32 %v1680, %v1551
          %v1684 = vmul.f32 %v1680, %v1552
          %v1685 = vmul.f32 %v1680, %v1553
          %v1686 = vmul.f32 %v1680, %v1554
          %v1687 = vmul.f32 %v1680, %v1555
          %v1688 = vmul.f32 %v1680, %v1556
          %v1689 = vmul.f32 %v1680, %v1557
          %v1690 = vadd.f32 %v1670, %v1681
          %v1691 = vadd.f32 %v1671, %v1682
          %v1692 = vadd.f32 %v1672, %v1683
          %v1693 = vadd.f32 %v1673, %v1684
          %v1694 = vadd.f32 %v1674, %v1685
          %v1695 = vadd.f32 %v1675, %v1686
          %v1696 = vadd.f32 %v1676, %v1687
          %v1697 = vadd.f32 %v1677, %v1688
          %v1698 = vadd.f32 %v1678, %v1689
          %s1699 = scalar_lea.vmem %s236, 504 [#allocation2]
          %v1700 = vld [vmem:[%s1699] sm:$0xff]
          %v1701 = vmul.f32 %v1700, %v1550
          %v1702 = vmul.f32 %v1700, %v1551
          %v1703 = vmul.f32 %v1700, %v1552
          %v1704 = vmul.f32 %v1700, %v1553
          %v1705 = vmul.f32 %v1700, %v1554
          %v1706 = vmul.f32 %v1700, %v1555
          %v1707 = vmul.f32 %v1700, %v1556
          %v1708 = vmul.f32 %v1700, %v1557
          %v1709 = vmul.f32 %v1700, %v1558
          %v1710 = vadd.f32 %v1690, %v1701
          %v1711 = vadd.f32 %v1691, %v1702
          %v1712 = vadd.f32 %v1692, %v1703
          %v1713 = vadd.f32 %v1693, %v1704
          %v1714 = vadd.f32 %v1694, %v1705
          %v1715 = vadd.f32 %v1695, %v1706
          %v1716 = vadd.f32 %v1696, %v1707
          %v1717 = vadd.f32 %v1697, %v1708
          %v1718 = vadd.f32 %v1698, %v1709
          %v1719 = vld [vmem:[#allocation7] sm:$0xff]
          %v1720 = vld [vmem:[#allocation7 + $0x8] sm:$0xff]
          %v1721 = vld [vmem:[#allocation7 + $0x10] sm:$0xff]
          %v1722 = vld [vmem:[#allocation7 + $0x18] sm:$0xff]
          %v1723 = vld [vmem:[#allocation7 + $0x20] sm:$0xff]
          %v1724 = vld [vmem:[#allocation7 + $0x28] sm:$0xff]
          %v1725 = vld [vmem:[#allocation7 + $0x30] sm:$0xff]
          %v1726 = vld [vmem:[#allocation7 + $0x38] sm:$0xff]
          %v1727 = vld [vmem:[#allocation7 + $0x40] sm:$0xff]
          %v1728 = vld [vmem:[#allocation7 + $0x48] sm:$0xff]
          %v1729 = vld [vmem:[#allocation7 + $0x50] sm:$0xff]
          %v1730 = vld [vmem:[#allocation7 + $0x58] sm:$0xff]
          %v1731 = vld [vmem:[#allocation7 + $0x60] sm:$0xff]
          %v1732 = vld [vmem:[#allocation7 + $0x68] sm:$0xff]
          %v1733 = vld [vmem:[#allocation7 + $0x70] sm:$0xff]
          %v1734 = vld [vmem:[#allocation7 + $0x78] sm:$0xff]
          %v1735 = vld [vmem:[#allocation8] sm:$0x1]
          %v1737 = vlaneseq
          %v1738 = vshrl.u32 %v1737, 7
          %v1739 = vsub.s32 0, %v1738
          %v1740 = vrot.slane %v1735, %v1739
          %1742 = vmatprep.subr.mxu0 0.0
          %1743 = vmatpush1.msra.mxu0 %v1719
          %1744 = vmatprep.subr.mxu0 0.0
          %1745 = vmatpush1.msra.mxu0 %v1720
          %1746 = vmatprep.subr.mxu0 0.0
          %1747 = vmatpush1.msra.mxu0 %v1721
          %1748 = vmatprep.subr.mxu0 0.0
          %1749 = vmatpush1.msra.mxu0 %v1722
          %1750 = vmatprep.subr.mxu0 0.0
          %1751 = vmatpush1.msra.mxu0 %v1723
          %1752 = vmatprep.subr.mxu0 0.0
          %1753 = vmatpush1.msra.mxu0 %v1724
          %1754 = vmatprep.subr.mxu0 0.0
          %1755 = vmatpush1.msra.mxu0 %v1725
          %1756 = vmatprep.subr.mxu0 0.0
          %1757 = vmatpush1.msra.mxu0 %v1726
          %1758 = vmatprep.subr.mxu0 0.0
          %1759 = vmatpush1.msra.mxu0 %v1727
          %1760 = vmatprep.subr.mxu0 0.0
          %1761 = vmatpush1.msra.mxu0 %v1728
          %1762 = vmatprep.subr.mxu0 0.0
          %1763 = vmatpush1.msra.mxu0 %v1729
          %1764 = vmatprep.subr.mxu0 0.0
          %1765 = vmatpush1.msra.mxu0 %v1730
          %1766 = vmatprep.subr.mxu0 0.0
          %1767 = vmatpush1.msra.mxu0 %v1731
          %1768 = vmatprep.subr.mxu0 0.0
          %1769 = vmatpush1.msra.mxu0 %v1732
          %1770 = vmatprep.subr.mxu0 0.0
          %1771 = vmatpush1.msra.mxu0 %v1733
          %1772 = vmatprep.subr.mxu0 0.0
          %1773 = vmatpush1.msra.mxu0 %v1734
          %1774 = vmatprep.subr.mxu0 0.0
          %1775 = vmatpush1.msra.mxu0 0.0
          %1776 = vmatprep.subr.mxu0 0.0
          %1777 = vmatpush1.msra.mxu0 0.0
          %1778 = vmatprep.subr.mxu0 0.0
          %1779 = vmatpush1.msra.mxu0 0.0
          %1780 = vmatprep.subr.mxu0 0.0
          %1781 = vmatpush1.msra.mxu0 0.0
          %1782 = vmatprep.subr.mxu0 0.0
          %1783 = vmatpush1.msra.mxu0 0.0
          %1784 = vmatprep.subr.mxu0 0.0
          %1785 = vmatpush1.msra.mxu0 0.0
          %1786 = vmatprep.subr.mxu0 0.0
          %1787 = vmatpush1.msra.mxu0 0.0
          %1788 = vmatprep.subr.mxu0 0.0
          %1789 = vmatpush1.msra.mxu0 0.0
          %1790 = vmatprep.subr.mxu0 0.0
          %1791 = vmatpush1.msra.mxu0 0.0
          %1792 = vmatprep.subr.mxu0 0.0
          %1793 = vmatpush1.msra.mxu0 0.0
          %1794 = vmatprep.subr.mxu0 0.0
          %1795 = vmatpush1.msra.mxu0 0.0
          %1796 = vmatprep.subr.mxu0 0.0
          %1797 = vmatpush1.msra.mxu0 0.0
          %1798 = vmatprep.subr.mxu0 0.0
          %1799 = vmatpush1.msra.mxu0 0.0
          %1800 = vmatprep.subr.mxu0 0.0
          %1801 = vmatpush1.msra.mxu0 0.0
          %1802 = vmatprep.subr.mxu0 0.0
          %1803 = vmatpush1.msra.mxu0 0.0
          %1804 = vmatprep.subr.mxu0 0.0
          %1805 = vmatpush1.msra.mxu0 0.0
          %1806 = vmatprep.mubr.f32.mxu0 0.0
          %1807 = vmatmul.mubr.f32.gmra.mrb[0].mxu0 %v1710
          %v1808 = vpop.f32.mrb[0].mxu0
          %v1809 = vadd.f32 %v1740, %v1808
          %v1810 = vpop.f32.mrb[0].mxu0
          %1811 = vmatprep.mubr.f32.mxu0 0.0
          %1812 = vmatmul.mubr.f32.gmra.mrb[0].mxu0 %v1711
          %v1813 = vpop.f32.mrb[0].mxu0
          %v1814 = vadd.f32 %v1740, %v1813
          %v1815 = vpop.f32.mrb[0].mxu0
          %1816 = vmatprep.mubr.f32.mxu0 0.0
          %1817 = vmatmul.mubr.f32.gmra.mrb[0].mxu0 %v1712
          %v1818 = vpop.f32.mrb[0].mxu0
          %v1819 = vadd.f32 %v1740, %v1818
          %v1820 = vpop.f32.mrb[0].mxu0
          %1821 = vmatprep.mubr.f32.mxu0 0.0
          %1822 = vmatmul.mubr.f32.gmra.mrb[0].mxu0 %v1713
          %v1823 = vpop.f32.mrb[0].mxu0
          %v1824 = vadd.f32 %v1740, %v1823
          %v1825 = vpop.f32.mrb[0].mxu0
          %1826 = vmatprep.mubr.f32.mxu0 0.0
          %1827 = vmatmul.mubr.f32.gmra.mrb[0].mxu0 %v1714
          %v1828 = vpop.f32.mrb[0].mxu0
          %v1829 = vadd.f32 %v1740, %v1828
          %v1830 = vpop.f32.mrb[0].mxu0
          %1831 = vmatprep.mubr.f32.mxu0 0.0
          %1832 = vmatmul.mubr.f32.gmra.mrb[0].mxu0 %v1715
          %v1833 = vpop.f32.mrb[0].mxu0
          %v1834 = vadd.f32 %v1740, %v1833
          %v1835 = vpop.f32.mrb[0].mxu0
          %1836 = vmatprep.mubr.f32.mxu0 0.0
          %1837 = vmatmul.mubr.f32.gmra.mrb[0].mxu0 %v1716
          %v1838 = vpop.f32.mrb[0].mxu0
          %v1839 = vadd.f32 %v1740, %v1838
          %v1840 = vpop.f32.mrb[0].mxu0
          %1841 = vmatprep.mubr.f32.mxu0 0.0
          %1842 = vmatmul.mubr.f32.gmra.mrb[0].mxu0 %v1717
          %v1843 = vpop.f32.mrb[0].mxu0
          %v1844 = vadd.f32 %v1740, %v1843
          %v1845 = vpop.f32.mrb[0].mxu0
          %1846 = vmatprep.mubr.f32.mxu0 0.0
          %1847 = vmatmul.mubr.f32.gmra.mrb[0].mxu0 %v1718
          %v1848 = vpop.f32.mrb[0].mxu0
          %v1849 = vadd.f32 %v1740, %v1848
          %v1850 = vpop.f32.mrb[0].mxu0
          %1851 = vdwg.mxu0
          %s1852 = smul.u32 %s284, 72
          %s1853 = scalar_lea.vmem %s282, %s1852 [#allocation10]
          %1854 = vst [vmem:[%s1853] sm:$0xff] %v1809
          %1855 = vst [vmem:[%s1853 + $0x8] sm:$0xff] %v1814
          %1856 = vst [vmem:[%s1853 + $0x10] sm:$0xff] %v1819
          %1857 = vst [vmem:[%s1853 + $0x18] sm:$0xff] %v1824
          %1858 = vst [vmem:[%s1853 + $0x20] sm:$0xff] %v1829
          %1859 = vst [vmem:[%s1853 + $0x28] sm:$0xff] %v1834
          %1860 = vst [vmem:[%s1853 + $0x30] sm:$0xff] %v1839
          %1861 = vst [vmem:[%s1853 + $0x38] sm:$0xff] %v1844
          %1862 = vst [vmem:[%s1853 + $0x40] sm:$0xff] %v1849
        $region57: #{tpu_custom_call.1} parent=35 // loop_footer
          %s288 = sadd.s32 1, %s284
        $region58: #{tpu_custom_call.1} parent=35 // loop_footer_branch
          %283 = sbr.rel target = $region54
        $region59: #{tpu_custom_call.1} parent=35 // loop_exit
          _
        %s1863 = sand.u32 %s127, 1
        %s1864 = scalar_lea.sflag [#allocation4], %s1863
        %s1865 = sand.u32 %s127, 1
        %s1866 = smul.addr %s1865, 648
        %s1867 = scalar_lea.vmem [#allocation10], %s1866
        // Predicated region
        $region60: #{tpu_custom_call.1} parent=35 // pred_check
          %p1868 = pneg %p137
        $region61: #{tpu_custom_call.1} parent=35 // pred_check_branch
          %1870 = sbr.rel (%p1868) target = $region63
        $region62: #{tpu_custom_call.1} parent=35 // pred_region
          %s1872 = ssub.s32 10368, 10368
          %1873 = vsyncadd %s1864, %s1872
          %s1874 = smul.addr %s25, 81
          %s1875 = smul.addr %s1874, 128
          %s1876 = scalar_lea.hbm %s4, %s1875
          %s1877 = sshll.u32 %s1867, 4
          %s1878 = int_to_ptr.vmem [resolvable:$true] %s1877
          %1883 = dma.vmem_to_hbm [thread:$0]  %s1878, 10368, %s1876, %s1864, 128, 128, 8
        $region63: #{tpu_custom_call.1} parent=35 // pred_fallthru
          _
      $region36: #{tpu_custom_call.1} parent=5 // pred_fallthru
        _
      %p1884 = scmp.le.s32.totalorder 2, %s20
      // Predicated region
      $region64: #{tpu_custom_call.1} parent=5 // pred_check
        %p1885 = pneg %p1884
      $region65: #{tpu_custom_call.1} parent=5 // pred_check_branch
        %1887 = sbr.rel (%p1885) target = $region67
      $region66: #{tpu_custom_call.1} parent=5 // pred_region
        %s1888 = ssub.s32 %s20, 2
        // Predicated region
        $region68: #{tpu_custom_call.1} parent=66 // pred_check
          %p1889 = pneg %p143
        $region69: #{tpu_custom_call.1} parent=66 // pred_check_branch
          %1891 = sbr.rel (%p1889) target = $region71
        $region70: #{tpu_custom_call.1} parent=66 // pred_region
          %s1892 = sand.u32 %s128, 1
          %s1893 = scalar_lea.sflag [#allocation4], %s1892
          %s1894 = sand.u32 %s128, 1
          %s1895 = smul.addr %s1894, 648
          %s1896 = scalar_lea.vmem [#allocation10], %s1895
          %1897 = dma.done %s1893, 10368
        $region71: #{tpu_custom_call.1} parent=66 // pred_fallthru
          _
      $region67: #{tpu_custom_call.1} parent=5 // pred_fallthru
        _
    $region6: #{tpu_custom_call.1} parent=1 // loop_footer
      %s24 = sadd.s32 1, %s20
    $region7: #{tpu_custom_call.1} parent=1 // loop_footer_branch
      %19 = sbr.rel target = $region3
    $region8: #{tpu_custom_call.1} parent=1 // loop_exit
      _
    %1898 = vsyncpa [#allocation3], 1
    %s1899 = scalar_lea.sflag [#allocation3], 1
    %1900 = vsyncpa %s1899, 1
    %1901 = vsyncpa [#allocation6], 1
    %s1902 = scalar_lea.sflag [#allocation6], 1
    %1903 = vsyncpa %s1902, 1
    %1904 = vsyncpa [#allocation9], 1
    %1905 = vsyncpa [#allocation4], 1
    %s1906 = scalar_lea.sflag [#allocation4], 1
    %1907 = vsyncpa %s1906, 1

</llo_original>
